<compile_context>
chip_gen: v7x
topology: tpu7x:2x2x1
jax: 0.10.0
libtpu: 0.0.40
codegen_flags: <defaults>
</compile_context>

<pallas_src>
import functools

import jax
import jax.numpy as jnp
from jax import lax
from jax.experimental import pallas as pl
from jax.experimental.pallas import tpu as pltpu

BN_EPS = 1e-5


# ----------------------------- Pallas kernel --------------------------------


def _mlp_kernel(H, W, x_ref, rows_ref, cols_ref,
                w1_ref, b1_ref, wdw_ref, bdw_ref, w2_ref, b2_ref, o_ref):
    """Per-batch tile: fc1 (folded conv+BN) -> dw3x3(+bias) -> ReLU -> fc2 (folded)."""
    N = H * W
    x = x_ref[0]                                                      # (N, C)

    # fc1: (N, C) @ (C, hidden) + bias
    h = jnp.dot(x, w1_ref[...], preferred_element_type=jnp.float32) + b1_ref[...]
    hidden = h.shape[-1]

    # Precomputed spatial coordinates of each token (row-major n = r*W + c).
    rows = rows_ref[...]                                              # (N, 1) int32
    cols = cols_ref[...]                                              # (N, 1) int32
    up_ok = rows >= 1                                                 # has neighbor at r-1
    down_ok = rows <= H - 2                                           # has neighbor at r+1
    left_ok = cols >= 1                                               # has neighbor at c-1
    right_ok = cols <= W - 2                                          # has neighbor at c+1

    taps = wdw_ref[...]                                               # (9, hidden)
    # dwconv bias initializes the accumulator.
    acc = jnp.broadcast_to(bdw_ref[...], (N, hidden))

    # 3x3 depthwise conv, stride 1, zero pad 1.  Neighbor (r+dh, c+dw) of token n is
    # token n + dh*W + dw, fetched with a sublane roll (XLU) and masked at the borders.
    for dh in (-1, 0, 1):
        row_m = up_ok if dh == -1 else (down_ok if dh == 1 else None)
        for dw in (-1, 0, 1):
            col_m = left_ok if dw == -1 else (right_ok if dw == 1 else None)
            s = dh * W + dw
            src = h if s == 0 else pltpu.roll(h, shift=int((-s) % N), axis=0)
            k = (dh + 1) * 3 + (dw + 1)
            contrib = src * taps[k:k + 1, :]                          # (N, hidden)
            if row_m is not None and col_m is not None:
                m = jnp.logical_and(row_m, col_m)
            else:
                m = row_m if row_m is not None else col_m
            if m is not None:
                contrib = jnp.where(m, contrib, 0.0)
            acc = acc + contrib

    h2 = jnp.maximum(acc, 0.0)                                        # ReLU (act)
    # fc2: (N, hidden) @ (hidden, C_out) + bias
    y = jnp.dot(h2, w2_ref[...], preferred_element_type=jnp.float32) + b2_ref[...]
    o_ref[0] = y


# ----------------------------- pallas_call wrapper ---------------------------


def mlp_forward_tokens(x_tok, rows, cols, w1, b1, wdw, bdw, w2, b2, H, W):
    B, N, C = x_tok.shape
    hidden = w1.shape[-1]
    Cout = w2.shape[-1]
    kern = functools.partial(_mlp_kernel, H, W)
    return pl.pallas_call(
        kern,
        out_shape=jax.ShapeDtypeStruct((B, N, Cout), jnp.float32),
        grid_spec=pltpu.PrefetchScalarGridSpec(
            num_scalar_prefetch=0,
            grid=(B,),
            in_specs=[
                pl.BlockSpec((1, N, C), lambda b: (b, 0, 0)),
                pl.BlockSpec((N, 1), lambda b: (0, 0)),
                pl.BlockSpec((N, 1), lambda b: (0, 0)),
                pl.BlockSpec((C, hidden), lambda b: (0, 0)),
                pl.BlockSpec((1, hidden), lambda b: (0, 0)),
                pl.BlockSpec((9, hidden), lambda b: (0, 0)),
                pl.BlockSpec((1, hidden), lambda b: (0, 0)),
                pl.BlockSpec((hidden, Cout), lambda b: (0, 0)),
                pl.BlockSpec((1, Cout), lambda b: (0, 0)),
            ],
            out_specs=pl.BlockSpec((1, N, Cout), lambda b: (b, 0, 0)),
        ),
        compiler_params=pltpu.CompilerParams(
            dimension_semantics=("parallel",)),
    )(x_tok, rows, cols, w1, b1, wdw, bdw, w2, b2)


# ----------------------------- parameters -----------------------------------


def make_conv_bn(key, cin, cout, wscale=0.1):
    k1, k2, k3, k4, k5 = jax.random.split(key, 5)
    return dict(
        w=wscale * jax.random.normal(k1, (cout, cin), jnp.float32),   # 1x1 conv weight
        gamma=1.0 + 0.1 * jax.random.normal(k2, (cout,), jnp.float32),
        beta=0.1 * jax.random.normal(k3, (cout,), jnp.float32),
        mean=0.1 * jax.random.normal(k4, (cout,), jnp.float32),
        var=0.5 + jnp.abs(jax.random.normal(k5, (cout,), jnp.float32)),
    )


def fold_conv_bn(p):
    s = p['gamma'] / jnp.sqrt(p['var'] + BN_EPS)
    w_fold = (p['w'] * s[:, None]).T                  # (cin, cout)
    b_fold = p['beta'] - p['mean'] * s                # (cout,)
    return w_fold, b_fold


def make_mlp_params(key, in_features, hidden_features):
    keys = jax.random.split(key, 4)
    params = dict(
        dim=in_features, hidden=hidden_features,
        fc1=make_conv_bn(keys[0], in_features, hidden_features),
        fc2=make_conv_bn(keys[1], hidden_features, in_features),
        dw_w=0.1 * jax.random.normal(keys[2], (hidden_features, 1, 3, 3), jnp.float32),
        dw_b=0.1 * jax.random.normal(keys[3], (hidden_features,), jnp.float32),
    )
    return params


# ----------------------------- Mlp forward (Pallas) ---------------------------


def mlp_forward(x_nchw, P):
    B, C, H, W = x_nchw.shape
    hidden = P['hidden']
    N = H * W
    x_tok = x_nchw.transpose(0, 2, 3, 1).reshape(B, N, C)             # channels on lanes

    w1, b1 = fold_conv_bn(P['fc1'])
    w2, b2 = fold_conv_bn(P['fc2'])

    # depthwise 3x3 weights: (hidden,1,3,3) -> (9, hidden) with row index ki*3+kj
    wdw = P['dw_w'][:, 0].transpose(1, 2, 0).reshape(9, hidden)
    bdw = P['dw_b'].reshape(1, hidden)

    # per-token spatial coordinates (computed once on host; works for any H, W)
    idx = jnp.arange(N, dtype=jnp.int32)
    rows = (idx // W).reshape(N, 1)
    cols = (idx % W).reshape(N, 1)

    out_tok = mlp_forward_tokens(x_tok, rows, cols,
                                 w1, b1.reshape(1, hidden),
                                 wdw, bdw,
                                 w2, b2.reshape(1, C), H, W)
    return out_tok.reshape(B, H, W, C).transpose(0, 3, 1, 2)          # back to NCHW


# ----------------------------- pure-JAX reference ------------------------------


def conv_bn_ref(x, p):
    y = jnp.einsum('oi,bihw->bohw', p['w'], x, precision='highest')
    s = p['gamma'] / jnp.sqrt(p['var'] + BN_EPS)
    return y * s[None, :, None, None] + (p['beta'] - p['mean'] * s)[None, :, None, None]


def mlp_ref(x, P):
    hidden = P['hidden']
    h = conv_bn_ref(x, P['fc1'])                                      # fc1
    h = lax.conv_general_dilated(h, P['dw_w'], (1, 1), ((1, 1), (1, 1)),
                                 dimension_numbers=('NCHW', 'OIHW', 'NCHW'),
                                 feature_group_count=hidden,
                                 precision=lax.Precision.HIGHEST)     # dwconv
    h = h + P['dw_b'][None, :, None, None]
    h = jnp.maximum(h, 0.0)                                           # ReLU
    return conv_bn_ref(h, P['fc2'])                                   # fc2 (dropout=identity)


# ----------------------------- main -------------------------------------------


if __name__ == "__main__":
    B, C, H, W = 2, 64, 16, 16
    hidden = int(C * 2.0)                                             # mlp_ratio = 2.0

    key = jax.random.PRNGKey(0)
    kx, kp = jax.random.split(key)
    x = jax.random.normal(kx, (B, C, H, W), jnp.float32)              # NCHW like PyTorch
    P = make_mlp_params(kp, C, hidden)

    out = jax.block_until_ready(mlp_forward(x, P))
    ref = jax.block_until_ready(mlp_ref(x, P))

    assert out.shape == x.shape
    max_err = float(jnp.max(jnp.abs(out - ref)))
    assert max_err < 5e-2, f"mismatch vs reference: max_err={max_err}"
    print("KERNEL_OK")
</pallas_src>

<mosaic_0001>
module attributes {stable_mosaic.version = 11 : i64} {
  func.func @_mlp_kernel(%arg0: i32, %arg1: memref<1x256x64xf32, #tpu.memory_space<vmem>>, %arg2: memref<256x1xi32, #tpu.memory_space<vmem>>, %arg3: memref<256x1xi32, #tpu.memory_space<vmem>>, %arg4: memref<64x128xf32, #tpu.memory_space<vmem>>, %arg5: memref<1x128xf32, #tpu.memory_space<vmem>>, %arg6: memref<9x128xf32, #tpu.memory_space<vmem>>, %arg7: memref<1x128xf32, #tpu.memory_space<vmem>>, %arg8: memref<128x64xf32, #tpu.memory_space<vmem>>, %arg9: memref<1x64xf32, #tpu.memory_space<vmem>>, %arg10: memref<1x256x64xf32, #tpu.memory_space<vmem>>) attributes {dimension_semantics = [#tpu.dimension_semantics<parallel>], iteration_bounds = array<i64: 2>, scalar_prefetch = 0 : i64, scratch_operands = 0 : i64, tpu.core_type = #tpu.core_type<tc>, window_params = [{transform_indices = @transform_0, window_bounds = array<i64: 1, 256, 64>}, {pipeline_mode = #tpu.pipeline_mode<synchronous>, transform_indices = @transform_1, window_bounds = array<i64: 256, 1>}, {pipeline_mode = #tpu.pipeline_mode<synchronous>, transform_indices = @transform_2, window_bounds = array<i64: 256, 1>}, {pipeline_mode = #tpu.pipeline_mode<synchronous>, transform_indices = @transform_3, window_bounds = array<i64: 64, 128>}, {pipeline_mode = #tpu.pipeline_mode<synchronous>, transform_indices = @transform_4, window_bounds = array<i64: 1, 128>}, {pipeline_mode = #tpu.pipeline_mode<synchronous>, transform_indices = @transform_5, window_bounds = array<i64: 9, 128>}, {pipeline_mode = #tpu.pipeline_mode<synchronous>, transform_indices = @transform_6, window_bounds = array<i64: 1, 128>}, {pipeline_mode = #tpu.pipeline_mode<synchronous>, transform_indices = @transform_7, window_bounds = array<i64: 128, 64>}, {pipeline_mode = #tpu.pipeline_mode<synchronous>, transform_indices = @transform_8, window_bounds = array<i64: 1, 64>}, {transform_indices = @transform_9, window_bounds = array<i64: 1, 256, 64>}]} {
    %c0 = arith.constant 0 : index
    %c0_0 = arith.constant 0 : index
    %c0_1 = arith.constant 0 : index
    %0 = vector.load %arg1[%c0, %c0_0, %c0_1] : memref<1x256x64xf32, #tpu.memory_space<vmem>>, vector<1x256x64xf32>
    %1 = vector.shape_cast %0 : vector<1x256x64xf32> to vector<256x64xf32>
    %c0_2 = arith.constant 0 : index
    %c0_3 = arith.constant 0 : index
    %2 = vector.load %arg4[%c0_2, %c0_3] : memref<64x128xf32, #tpu.memory_space<vmem>>, vector<64x128xf32>
    %cst = arith.constant dense<0.000000e+00> : vector<256x128xf32>
    %3 = tpu.matmul %1, %2, %cst {dimension_numbers = #tpu.dot_dimension_numbers<[1], [0], [0], [1], [0, 0, 1, 1], [], []>} : vector<256x64xf32>, vector<64x128xf32>, vector<256x128xf32> -> vector<256x128xf32>
    %c0_4 = arith.constant 0 : index
    %c0_5 = arith.constant 0 : index
    %4 = vector.load %arg5[%c0_4, %c0_5] : memref<1x128xf32, #tpu.memory_space<vmem>>, vector<1x128xf32>
    %5 = vector.broadcast %4 : vector<1x128xf32> to vector<256x128xf32>
    %6 = arith.addf %3, %5 : vector<256x128xf32>
    %c0_6 = arith.constant 0 : index
    %c0_7 = arith.constant 0 : index
    %7 = vector.load %arg2[%c0_6, %c0_7] : memref<256x1xi32, #tpu.memory_space<vmem>>, vector<256x1xi32>
    %c0_8 = arith.constant 0 : index
    %c0_9 = arith.constant 0 : index
    %8 = vector.load %arg3[%c0_8, %c0_9] : memref<256x1xi32, #tpu.memory_space<vmem>>, vector<256x1xi32>
    %c1_i32 = arith.constant 1 : i32
    %9 = vector.broadcast %c1_i32 : i32 to vector<256x1xi32>
    %10 = arith.cmpi sge, %7, %9 : vector<256x1xi32>
    %c14_i32 = arith.constant 14 : i32
    %11 = vector.broadcast %c14_i32 : i32 to vector<256x1xi32>
    %12 = arith.cmpi sle, %7, %11 : vector<256x1xi32>
    %c1_i32_10 = arith.constant 1 : i32
    %13 = vector.broadcast %c1_i32_10 : i32 to vector<256x1xi32>
    %14 = arith.cmpi sge, %8, %13 : vector<256x1xi32>
    %c14_i32_11 = arith.constant 14 : i32
    %15 = vector.broadcast %c14_i32_11 : i32 to vector<256x1xi32>
    %16 = arith.cmpi sle, %8, %15 : vector<256x1xi32>
    %c0_12 = arith.constant 0 : index
    %c0_13 = arith.constant 0 : index
    %17 = vector.load %arg6[%c0_12, %c0_13] : memref<9x128xf32, #tpu.memory_space<vmem>>, vector<9x128xf32>
    %c0_14 = arith.constant 0 : index
    %c0_15 = arith.constant 0 : index
    %18 = vector.load %arg7[%c0_14, %c0_15] : memref<1x128xf32, #tpu.memory_space<vmem>>, vector<1x128xf32>
    %19 = vector.shape_cast %18 : vector<1x128xf32> to vector<1x128xf32>
    %20 = vector.broadcast %19 : vector<1x128xf32> to vector<256x128xf32>
    %c17_i32 = arith.constant 17 : i32
    %21 = tpu.dynamic_rotate %6 by %c17_i32 dim 0 : vector<256x128xf32>, i32 -> vector<256x128xf32>
    %22 = vector.extract_strided_slice %17 {offsets = [0, 0], sizes = [1, 128], strides = [1, 1]} : vector<9x128xf32> to vector<1x128xf32>
    %23 = vector.broadcast %22 : vector<1x128xf32> to vector<256x128xf32>
    %24 = arith.mulf %21, %23 : vector<256x128xf32>
    %25 = arith.andi %10, %14 : vector<256x1xi1>
    %cst_16 = arith.constant 0.000000e+00 : f32
    %26 = vector.shape_cast %25 : vector<256x1xi1> to vector<256x1xi1>
    %27 = vector.broadcast %26 : vector<256x1xi1> to vector<256x128xi1>
    %28 = vector.broadcast %cst_16 : f32 to vector<256x128xf32>
    %29 = arith.select %27, %24, %28 : vector<256x128xi1>, vector<256x128xf32>
    %30 = arith.addf %20, %29 : vector<256x128xf32>
    %c16_i32 = arith.constant 16 : i32
    %31 = tpu.dynamic_rotate %6 by %c16_i32 dim 0 : vector<256x128xf32>, i32 -> vector<256x128xf32>
    %32 = vector.extract_strided_slice %17 {offsets = [1, 0], sizes = [1, 128], strides = [1, 1]} : vector<9x128xf32> to vector<1x128xf32>
    %33 = vector.broadcast %32 : vector<1x128xf32> to vector<256x128xf32>
    %34 = arith.mulf %31, %33 : vector<256x128xf32>
    %cst_17 = arith.constant 0.000000e+00 : f32
    %35 = vector.shape_cast %10 : vector<256x1xi1> to vector<256x1xi1>
    %36 = vector.broadcast %35 : vector<256x1xi1> to vector<256x128xi1>
    %37 = vector.broadcast %cst_17 : f32 to vector<256x128xf32>
    %38 = arith.select %36, %34, %37 : vector<256x128xi1>, vector<256x128xf32>
    %39 = arith.addf %30, %38 : vector<256x128xf32>
    %c15_i32 = arith.constant 15 : i32
    %40 = tpu.dynamic_rotate %6 by %c15_i32 dim 0 : vector<256x128xf32>, i32 -> vector<256x128xf32>
    %41 = vector.extract_strided_slice %17 {offsets = [2, 0], sizes = [1, 128], strides = [1, 1]} : vector<9x128xf32> to vector<1x128xf32>
    %42 = vector.broadcast %41 : vector<1x128xf32> to vector<256x128xf32>
    %43 = arith.mulf %40, %42 : vector<256x128xf32>
    %44 = arith.andi %10, %16 : vector<256x1xi1>
    %cst_18 = arith.constant 0.000000e+00 : f32
    %45 = vector.shape_cast %44 : vector<256x1xi1> to vector<256x1xi1>
    %46 = vector.broadcast %45 : vector<256x1xi1> to vector<256x128xi1>
    %47 = vector.broadcast %cst_18 : f32 to vector<256x128xf32>
    %48 = arith.select %46, %43, %47 : vector<256x128xi1>, vector<256x128xf32>
    %49 = arith.addf %39, %48 : vector<256x128xf32>
    %c1_i32_19 = arith.constant 1 : i32
    %50 = tpu.dynamic_rotate %6 by %c1_i32_19 dim 0 : vector<256x128xf32>, i32 -> vector<256x128xf32>
    %51 = vector.extract_strided_slice %17 {offsets = [3, 0], sizes = [1, 128], strides = [1, 1]} : vector<9x128xf32> to vector<1x128xf32>
    %52 = vector.broadcast %51 : vector<1x128xf32> to vector<256x128xf32>
    %53 = arith.mulf %50, %52 : vector<256x128xf32>
    %cst_20 = arith.constant 0.000000e+00 : f32
    %54 = vector.shape_cast %14 : vector<256x1xi1> to vector<256x1xi1>
    %55 = vector.broadcast %54 : vector<256x1xi1> to vector<256x128xi1>
    %56 = vector.broadcast %cst_20 : f32 to vector<256x128xf32>
    %57 = arith.select %55, %53, %56 : vector<256x128xi1>, vector<256x128xf32>
    %58 = arith.addf %49, %57 : vector<256x128xf32>
    %59 = vector.extract_strided_slice %17 {offsets = [4, 0], sizes = [1, 128], strides = [1, 1]} : vector<9x128xf32> to vector<1x128xf32>
    %60 = vector.broadcast %59 : vector<1x128xf32> to vector<256x128xf32>
    %61 = arith.mulf %6, %60 : vector<256x128xf32>
    %62 = arith.addf %58, %61 : vector<256x128xf32>
    %c255_i32 = arith.constant 255 : i32
    %63 = tpu.dynamic_rotate %6 by %c255_i32 dim 0 : vector<256x128xf32>, i32 -> vector<256x128xf32>
    %64 = vector.extract_strided_slice %17 {offsets = [5, 0], sizes = [1, 128], strides = [1, 1]} : vector<9x128xf32> to vector<1x128xf32>
    %65 = vector.broadcast %64 : vector<1x128xf32> to vector<256x128xf32>
    %66 = arith.mulf %63, %65 : vector<256x128xf32>
    %cst_21 = arith.constant 0.000000e+00 : f32
    %67 = vector.shape_cast %16 : vector<256x1xi1> to vector<256x1xi1>
    %68 = vector.broadcast %67 : vector<256x1xi1> to vector<256x128xi1>
    %69 = vector.broadcast %cst_21 : f32 to vector<256x128xf32>
    %70 = arith.select %68, %66, %69 : vector<256x128xi1>, vector<256x128xf32>
    %71 = arith.addf %62, %70 : vector<256x128xf32>
    %c241_i32 = arith.constant 241 : i32
    %72 = tpu.dynamic_rotate %6 by %c241_i32 dim 0 : vector<256x128xf32>, i32 -> vector<256x128xf32>
    %73 = vector.extract_strided_slice %17 {offsets = [6, 0], sizes = [1, 128], strides = [1, 1]} : vector<9x128xf32> to vector<1x128xf32>
    %74 = vector.broadcast %73 : vector<1x128xf32> to vector<256x128xf32>
    %75 = arith.mulf %72, %74 : vector<256x128xf32>
    %76 = arith.andi %12, %14 : vector<256x1xi1>
    %cst_22 = arith.constant 0.000000e+00 : f32
    %77 = vector.shape_cast %76 : vector<256x1xi1> to vector<256x1xi1>
    %78 = vector.broadcast %77 : vector<256x1xi1> to vector<256x128xi1>
    %79 = vector.broadcast %cst_22 : f32 to vector<256x128xf32>
    %80 = arith.select %78, %75, %79 : vector<256x128xi1>, vector<256x128xf32>
    %81 = arith.addf %71, %80 : vector<256x128xf32>
    %c240_i32 = arith.constant 240 : i32
    %82 = tpu.dynamic_rotate %6 by %c240_i32 dim 0 : vector<256x128xf32>, i32 -> vector<256x128xf32>
    %83 = vector.extract_strided_slice %17 {offsets = [7, 0], sizes = [1, 128], strides = [1, 1]} : vector<9x128xf32> to vector<1x128xf32>
    %84 = vector.broadcast %83 : vector<1x128xf32> to vector<256x128xf32>
    %85 = arith.mulf %82, %84 : vector<256x128xf32>
    %cst_23 = arith.constant 0.000000e+00 : f32
    %86 = vector.shape_cast %12 : vector<256x1xi1> to vector<256x1xi1>
    %87 = vector.broadcast %86 : vector<256x1xi1> to vector<256x128xi1>
    %88 = vector.broadcast %cst_23 : f32 to vector<256x128xf32>
    %89 = arith.select %87, %85, %88 : vector<256x128xi1>, vector<256x128xf32>
    %90 = arith.addf %81, %89 : vector<256x128xf32>
    %c239_i32 = arith.constant 239 : i32
    %91 = tpu.dynamic_rotate %6 by %c239_i32 dim 0 : vector<256x128xf32>, i32 -> vector<256x128xf32>
    %92 = vector.extract_strided_slice %17 {offsets = [8, 0], sizes = [1, 128], strides = [1, 1]} : vector<9x128xf32> to vector<1x128xf32>
    %93 = vector.broadcast %92 : vector<1x128xf32> to vector<256x128xf32>
    %94 = arith.mulf %91, %93 : vector<256x128xf32>
    %95 = arith.andi %12, %16 : vector<256x1xi1>
    %cst_24 = arith.constant 0.000000e+00 : f32
    %96 = vector.shape_cast %95 : vector<256x1xi1> to vector<256x1xi1>
    %97 = vector.broadcast %96 : vector<256x1xi1> to vector<256x128xi1>
    %98 = vector.broadcast %cst_24 : f32 to vector<256x128xf32>
    %99 = arith.select %97, %94, %98 : vector<256x128xi1>, vector<256x128xf32>
    %100 = arith.addf %90, %99 : vector<256x128xf32>
    %cst_25 = arith.constant 0.000000e+00 : f32
    %101 = vector.broadcast %cst_25 : f32 to vector<256x128xf32>
    %102 = arith.maximumf %100, %101 : vector<256x128xf32>
    %c0_26 = arith.constant 0 : index
    %c0_27 = arith.constant 0 : index
    %103 = vector.load %arg8[%c0_26, %c0_27] : memref<128x64xf32, #tpu.memory_space<vmem>>, vector<128x64xf32>
    %cst_28 = arith.constant dense<0.000000e+00> : vector<256x64xf32>
    %104 = tpu.matmul %102, %103, %cst_28 {dimension_numbers = #tpu.dot_dimension_numbers<[1], [0], [0], [1], [0, 0, 1, 1], [], []>} : vector<256x128xf32>, vector<128x64xf32>, vector<256x64xf32> -> vector<256x64xf32>
    %c0_29 = arith.constant 0 : index
    %c0_30 = arith.constant 0 : index
    %105 = vector.load %arg9[%c0_29, %c0_30] : memref<1x64xf32, #tpu.memory_space<vmem>>, vector<1x64xf32>
    %106 = vector.broadcast %105 : vector<1x64xf32> to vector<256x64xf32>
    %107 = arith.addf %104, %106 : vector<256x64xf32>
    %c0_31 = arith.constant 0 : index
    %c0_32 = arith.constant 0 : index
    %c0_33 = arith.constant 0 : index
    %108 = vector.load %arg10[%c0_31, %c0_32, %c0_33] : memref<1x256x64xf32, #tpu.memory_space<vmem>>, vector<1x256x64xf32>
    %109 = vector.shape_cast %108 : vector<1x256x64xf32> to vector<256x64xf32>
    %110 = vector.shape_cast %107 : vector<256x64xf32> to vector<1x256x64xf32>
    tpu.vector_store %arg10[%c0_31, %c0_32, %c0_33], %110 {strides = array<i32>} : memref<1x256x64xf32, #tpu.memory_space<vmem>>, vector<1x256x64xf32>,
    return
  }
  func.func @transform_0(%arg0: i32) -> (i32, i32, i32) {
    %c0_i32 = arith.constant 0 : i32
    %c0_i32_0 = arith.constant 0 : i32
    %c0_i32_1 = arith.constant 0 : i32
    return %arg0, %c0_i32, %c0_i32_0 : i32, i32, i32
  }
  func.func @transform_1(%arg0: i32) -> (i32, i32) {
    %c0_i32 = arith.constant 0 : i32
    %c0_i32_0 = arith.constant 0 : i32
    %c0_i32_1 = arith.constant 0 : i32
    return %c0_i32, %c0_i32_0 : i32, i32
  }
  func.func @transform_2(%arg0: i32) -> (i32, i32) {
    %c0_i32 = arith.constant 0 : i32
    %c0_i32_0 = arith.constant 0 : i32
    %c0_i32_1 = arith.constant 0 : i32
    return %c0_i32, %c0_i32_0 : i32, i32
  }
  func.func @transform_3(%arg0: i32) -> (i32, i32) {
    %c0_i32 = arith.constant 0 : i32
    %c0_i32_0 = arith.constant 0 : i32
    %c0_i32_1 = arith.constant 0 : i32
    return %c0_i32, %c0_i32_0 : i32, i32
  }
  func.func @transform_4(%arg0: i32) -> (i32, i32) {
    %c0_i32 = arith.constant 0 : i32
    %c0_i32_0 = arith.constant 0 : i32
    %c0_i32_1 = arith.constant 0 : i32
    return %c0_i32, %c0_i32_0 : i32, i32
  }
  func.func @transform_5(%arg0: i32) -> (i32, i32) {
    %c0_i32 = arith.constant 0 : i32
    %c0_i32_0 = arith.constant 0 : i32
    %c0_i32_1 = arith.constant 0 : i32
    return %c0_i32, %c0_i32_0 : i32, i32
  }
  func.func @transform_6(%arg0: i32) -> (i32, i32) {
    %c0_i32 = arith.constant 0 : i32
    %c0_i32_0 = arith.constant 0 : i32
    %c0_i32_1 = arith.constant 0 : i32
    return %c0_i32, %c0_i32_0 : i32, i32
  }
  func.func @transform_7(%arg0: i32) -> (i32, i32) {
    %c0_i32 = arith.constant 0 : i32
    %c0_i32_0 = arith.constant 0 : i32
    %c0_i32_1 = arith.constant 0 : i32
    return %c0_i32, %c0_i32_0 : i32, i32
  }
  func.func @transform_8(%arg0: i32) -> (i32, i32) {
    %c0_i32 = arith.constant 0 : i32
    %c0_i32_0 = arith.constant 0 : i32
    %c0_i32_1 = arith.constant 0 : i32
    return %c0_i32, %c0_i32_0 : i32, i32
  }
  func.func @transform_9(%arg0: i32) -> (i32, i32, i32) {
    %c0_i32 = arith.constant 0 : i32
    %c0_i32_0 = arith.constant 0 : i32
    %c0_i32_1 = arith.constant 0 : i32
    return %arg0, %c0_i32, %c0_i32_0 : i32, i32, i32
  }
}

</mosaic_0001>

<llo_original>
// kernel: tpu_custom_call.1
$region0: #{tpu_custom_call.1}
  #allocation0 [shape = 'u32[]', space=smem, size = 0x4, offset = 0x4, fixed_abs, tag = 'smem constant byte address 0x4 - core index']
  #allocation1 [shape = 'u32[144,128]{1,0:T(1,128)}', space=vmem, size = 0x12000, scoped, tag = 'internal scratch']
  %s0 = inlined_call_operand.vmem [shape: f32[2,256,64], index: 0, kind: input, shape index: {}]
  %s1 = inlined_call_operand.vmem [shape: s32[256,1], index: 1, kind: input, shape index: {}]
  %s2 = inlined_call_operand.vmem [shape: s32[256,1], index: 2, kind: input, shape index: {}]
  %s3 = inlined_call_operand.vmem [shape: f32[64,128], index: 3, kind: input, shape index: {}]
  %s4 = inlined_call_operand.vmem [shape: f32[1,128], index: 4, kind: input, shape index: {}]
  %s5 = inlined_call_operand.vmem [shape: f32[9,128], index: 5, kind: input, shape index: {}]
  %s6 = inlined_call_operand.vmem [shape: f32[1,128], index: 6, kind: input, shape index: {}]
  %s7 = inlined_call_operand.vmem [shape: f32[128,64], index: 7, kind: input, shape index: {}]
  %s8 = inlined_call_operand.vmem [shape: f32[1,64], index: 8, kind: input, shape index: {}]
  %s9 = inlined_call_operand.vmem [shape: f32[2,256,64], index: 9, kind: output, shape index: {}]
  %s10 = sld [smem:[#allocation0]]
  $region69: #{tpu_custom_call.1} parent=0
    _
  %s12 = ssub.s32 1, %s10
  %s13 = scalar_select 0, %s12, %s10
  loop: start=0, step=1, limit=4
  $region2: #{tpu_custom_call.1} parent=0 // loop_pre_header
    _
  $region3: #{tpu_custom_call.1} parent=0 // loop_header
    %s15 = sphi 0, %s19
    %p16 = scmp.ge.s32.totalorder %s15, 4
    %s25 = sphi 0, %s27
    %s28 = sphi 0, %s25
    %s29 = sphi 0, %s28
    %s45 = sphi 0, %s29
    %s49 = sphi 0, %s49
    %s51 = sphi 0, %s49
    %s52 = sphi 0, %s51
    %s66 = sphi 0, %s52
    %s70 = sphi 0, %s70
    %s72 = sphi 0, %s70
    %s73 = sphi 0, %s72
    %s87 = sphi 0, %s73
    %s91 = sphi 0, %s91
    %s93 = sphi 0, %s91
    %s94 = sphi 0, %s93
    %s108 = sphi 0, %s94
    %s112 = sphi 0, %s112
    %s114 = sphi 0, %s112
    %s115 = sphi 0, %s114
    %s129 = sphi 0, %s115
    %s133 = sphi 0, %s133
    %s135 = sphi 0, %s133
    %s136 = sphi 0, %s135
    %s150 = sphi 0, %s136
    %s154 = sphi 0, %s154
    %s156 = sphi 0, %s154
    %s157 = sphi 0, %s156
    %s171 = sphi 0, %s157
    %s175 = sphi 0, %s175
    %s177 = sphi 0, %s175
    %s178 = sphi 0, %s177
    %s192 = sphi 0, %s178
    %s196 = sphi 0, %s196
    %s198 = sphi 0, %s196
    %s199 = sphi 0, %s198
    %s213 = sphi 0, %s199
    %s219 = sphi 0, %s221
    %s222 = sphi 0, %s219
    %s223 = sphi 0, %s222
    %s239 = sphi 0, %s223
  $region4: #{tpu_custom_call.1} parent=0 // loop_header_branch
    %18 = sbr.rel (%p16) target = $region8
  $region5: #{tpu_custom_call.1} parent=0 // loop_body
    %s20 = ssub.s32 %s15, 1
    %s21 = ssub.s32 %s15, 2
    %s22 = sadd.s32 %s15, 1
    %s23 = ssub.s32 %s15, %s22
    %p24 = scmp.eq.s32.totalorder %s23, 0
    %s26 = sadd.s32 %s25, 1
    %s27 = scalar_select %p24, %s25, %s26
    %p30 = pneg %p24
    %p31 = scmp.eq.s32.totalorder %s15, 1
    %p32 = por %p30, %p31
    %p33 = scmp.ne.s32.totalorder %s25, %s28
    %p34 = scmp.eq.s32.totalorder %s15, 0
    %p35 = por %p33, %p34
    %p36 = scmp.ne.s32.totalorder %s25, %s28
    %p37 = scmp.eq.s32.totalorder %s20, 1
    %p38 = por %p36, %p37
    %p39 = scmp.ne.s32.totalorder %s28, %s29
    %p40 = scmp.eq.s32.totalorder %s20, 0
    %p41 = por %p39, %p40
    %p42 = scmp.ne.s32.totalorder %s28, %s29
    %p43 = scmp.eq.s32.totalorder %s21, 1
    %p44 = por %p42, %p43
    %p46 = scmp.ne.s32.totalorder %s29, %s45
    %p47 = scmp.eq.s32.totalorder %s21, 0
    %p48 = por %p46, %p47
    %s50 = sadd.s32 %s49, 1
    %p53 = scmp.eq.s32.totalorder %s15, 1
    %p54 = scmp.ne.s32.totalorder %s49, %s51
    %p55 = scmp.eq.s32.totalorder %s15, 0
    %p56 = por %p54, %p55
    %p57 = scmp.ne.s32.totalorder %s49, %s51
    %p58 = scmp.eq.s32.totalorder %s20, 1
    %p59 = por %p57, %p58
    %p60 = scmp.ne.s32.totalorder %s51, %s52
    %p61 = scmp.eq.s32.totalorder %s20, 0
    %p62 = por %p60, %p61
    %p63 = scmp.ne.s32.totalorder %s51, %s52
    %p64 = scmp.eq.s32.totalorder %s21, 1
    %p65 = por %p63, %p64
    %p67 = scmp.ne.s32.totalorder %s52, %s66
    %p68 = scmp.eq.s32.totalorder %s21, 0
    %p69 = por %p67, %p68
    %s71 = sadd.s32 %s70, 1
    %p74 = scmp.eq.s32.totalorder %s15, 1
    %p75 = scmp.ne.s32.totalorder %s70, %s72
    %p76 = scmp.eq.s32.totalorder %s15, 0
    %p77 = por %p75, %p76
    %p78 = scmp.ne.s32.totalorder %s70, %s72
    %p79 = scmp.eq.s32.totalorder %s20, 1
    %p80 = por %p78, %p79
    %p81 = scmp.ne.s32.totalorder %s72, %s73
    %p82 = scmp.eq.s32.totalorder %s20, 0
    %p83 = por %p81, %p82
    %p84 = scmp.ne.s32.totalorder %s72, %s73
    %p85 = scmp.eq.s32.totalorder %s21, 1
    %p86 = por %p84, %p85
    %p88 = scmp.ne.s32.totalorder %s73, %s87
    %p89 = scmp.eq.s32.totalorder %s21, 0
    %p90 = por %p88, %p89
    %s92 = sadd.s32 %s91, 1
    %p95 = scmp.eq.s32.totalorder %s15, 1
    %p96 = scmp.ne.s32.totalorder %s91, %s93
    %p97 = scmp.eq.s32.totalorder %s15, 0
    %p98 = por %p96, %p97
    %p99 = scmp.ne.s32.totalorder %s91, %s93
    %p100 = scmp.eq.s32.totalorder %s20, 1
    %p101 = por %p99, %p100
    %p102 = scmp.ne.s32.totalorder %s93, %s94
    %p103 = scmp.eq.s32.totalorder %s20, 0
    %p104 = por %p102, %p103
    %p105 = scmp.ne.s32.totalorder %s93, %s94
    %p106 = scmp.eq.s32.totalorder %s21, 1
    %p107 = por %p105, %p106
    %p109 = scmp.ne.s32.totalorder %s94, %s108
    %p110 = scmp.eq.s32.totalorder %s21, 0
    %p111 = por %p109, %p110
    %s113 = sadd.s32 %s112, 1
    %p116 = scmp.eq.s32.totalorder %s15, 1
    %p117 = scmp.ne.s32.totalorder %s112, %s114
    %p118 = scmp.eq.s32.totalorder %s15, 0
    %p119 = por %p117, %p118
    %p120 = scmp.ne.s32.totalorder %s112, %s114
    %p121 = scmp.eq.s32.totalorder %s20, 1
    %p122 = por %p120, %p121
    %p123 = scmp.ne.s32.totalorder %s114, %s115
    %p124 = scmp.eq.s32.totalorder %s20, 0
    %p125 = por %p123, %p124
    %p126 = scmp.ne.s32.totalorder %s114, %s115
    %p127 = scmp.eq.s32.totalorder %s21, 1
    %p128 = por %p126, %p127
    %p130 = scmp.ne.s32.totalorder %s115, %s129
    %p131 = scmp.eq.s32.totalorder %s21, 0
    %p132 = por %p130, %p131
    %s134 = sadd.s32 %s133, 1
    %p137 = scmp.eq.s32.totalorder %s15, 1
    %p138 = scmp.ne.s32.totalorder %s133, %s135
    %p139 = scmp.eq.s32.totalorder %s15, 0
    %p140 = por %p138, %p139
    %p141 = scmp.ne.s32.totalorder %s133, %s135
    %p142 = scmp.eq.s32.totalorder %s20, 1
    %p143 = por %p141, %p142
    %p144 = scmp.ne.s32.totalorder %s135, %s136
    %p145 = scmp.eq.s32.totalorder %s20, 0
    %p146 = por %p144, %p145
    %p147 = scmp.ne.s32.totalorder %s135, %s136
    %p148 = scmp.eq.s32.totalorder %s21, 1
    %p149 = por %p147, %p148
    %p151 = scmp.ne.s32.totalorder %s136, %s150
    %p152 = scmp.eq.s32.totalorder %s21, 0
    %p153 = por %p151, %p152
    %s155 = sadd.s32 %s154, 1
    %p158 = scmp.eq.s32.totalorder %s15, 1
    %p159 = scmp.ne.s32.totalorder %s154, %s156
    %p160 = scmp.eq.s32.totalorder %s15, 0
    %p161 = por %p159, %p160
    %p162 = scmp.ne.s32.totalorder %s154, %s156
    %p163 = scmp.eq.s32.totalorder %s20, 1
    %p164 = por %p162, %p163
    %p165 = scmp.ne.s32.totalorder %s156, %s157
    %p166 = scmp.eq.s32.totalorder %s20, 0
    %p167 = por %p165, %p166
    %p168 = scmp.ne.s32.totalorder %s156, %s157
    %p169 = scmp.eq.s32.totalorder %s21, 1
    %p170 = por %p168, %p169
    %p172 = scmp.ne.s32.totalorder %s157, %s171
    %p173 = scmp.eq.s32.totalorder %s21, 0
    %p174 = por %p172, %p173
    %s176 = sadd.s32 %s175, 1
    %p179 = scmp.eq.s32.totalorder %s15, 1
    %p180 = scmp.ne.s32.totalorder %s175, %s177
    %p181 = scmp.eq.s32.totalorder %s15, 0
    %p182 = por %p180, %p181
    %p183 = scmp.ne.s32.totalorder %s175, %s177
    %p184 = scmp.eq.s32.totalorder %s20, 1
    %p185 = por %p183, %p184
    %p186 = scmp.ne.s32.totalorder %s177, %s178
    %p187 = scmp.eq.s32.totalorder %s20, 0
    %p188 = por %p186, %p187
    %p189 = scmp.ne.s32.totalorder %s177, %s178
    %p190 = scmp.eq.s32.totalorder %s21, 1
    %p191 = por %p189, %p190
    %p193 = scmp.ne.s32.totalorder %s178, %s192
    %p194 = scmp.eq.s32.totalorder %s21, 0
    %p195 = por %p193, %p194
    %s197 = sadd.s32 %s196, 1
    %p200 = scmp.eq.s32.totalorder %s15, 1
    %p201 = scmp.ne.s32.totalorder %s196, %s198
    %p202 = scmp.eq.s32.totalorder %s15, 0
    %p203 = por %p201, %p202
    %p204 = scmp.ne.s32.totalorder %s196, %s198
    %p205 = scmp.eq.s32.totalorder %s20, 1
    %p206 = por %p204, %p205
    %p207 = scmp.ne.s32.totalorder %s198, %s199
    %p208 = scmp.eq.s32.totalorder %s20, 0
    %p209 = por %p207, %p208
    %p210 = scmp.ne.s32.totalorder %s198, %s199
    %p211 = scmp.eq.s32.totalorder %s21, 1
    %p212 = por %p210, %p211
    %p214 = scmp.ne.s32.totalorder %s199, %s213
    %p215 = scmp.eq.s32.totalorder %s21, 0
    %p216 = por %p214, %p215
    %s217 = ssub.s32 %s15, %s22
    %p218 = scmp.eq.s32.totalorder %s217, 0
    %s220 = sadd.s32 %s219, 1
    %s221 = scalar_select %p218, %s219, %s220
    %p224 = pneg %p218
    %p225 = scmp.eq.s32.totalorder %s15, 1
    %p226 = por %p224, %p225
    %p227 = scmp.ne.s32.totalorder %s219, %s222
    %p228 = scmp.eq.s32.totalorder %s15, 0
    %p229 = por %p227, %p228
    %p230 = scmp.ne.s32.totalorder %s219, %s222
    %p231 = scmp.eq.s32.totalorder %s20, 1
    %p232 = por %p230, %p231
    %p233 = scmp.ne.s32.totalorder %s222, %s223
    %p234 = scmp.eq.s32.totalorder %s20, 0
    %p235 = por %p233, %p234
    %p236 = scmp.ne.s32.totalorder %s222, %s223
    %p237 = scmp.eq.s32.totalorder %s21, 1
    %p238 = por %p236, %p237
    %p240 = scmp.ne.s32.totalorder %s223, %s239
    %p241 = scmp.eq.s32.totalorder %s21, 0
    %p242 = por %p240, %p241
    %p243 = scmp.le.s32.totalorder 1, %s15
    %p244 = scmp.lt.s32.totalorder %s15, 3
    %p245 = pnand %p243, %p244
    %p246 = pneg %p245
    // Predicated region
    $region9: #{tpu_custom_call.1} parent=5 // pred_check
      _
    $region10: #{tpu_custom_call.1} parent=5 // pred_check_branch
      %248 = sbr.rel (%p245) target = $region12
    $region11: #{tpu_custom_call.1} parent=5 // pred_region
      %s249 = ssub.s32 %s15, 1
      // Predicated region
      $region13: #{tpu_custom_call.1} parent=11 // pred_check
        %p250 = pneg %p62
      $region14: #{tpu_custom_call.1} parent=11 // pred_check_branch
        %252 = sbr.rel (%p250) target = $region16
      $region15: #{tpu_custom_call.1} parent=11 // pred_region
        _
      $region16: #{tpu_custom_call.1} parent=11 // pred_fallthru
        _
      // Predicated region
      $region17: #{tpu_custom_call.1} parent=11 // pred_check
        %p253 = pneg %p83
      $region18: #{tpu_custom_call.1} parent=11 // pred_check_branch
        %255 = sbr.rel (%p253) target = $region20
      $region19: #{tpu_custom_call.1} parent=11 // pred_region
        _
      $region20: #{tpu_custom_call.1} parent=11 // pred_fallthru
        _
      // Predicated region
      $region21: #{tpu_custom_call.1} parent=11 // pred_check
        %p256 = pneg %p104
      $region22: #{tpu_custom_call.1} parent=11 // pred_check_branch
        %258 = sbr.rel (%p256) target = $region24
      $region23: #{tpu_custom_call.1} parent=11 // pred_region
        _
      $region24: #{tpu_custom_call.1} parent=11 // pred_fallthru
        _
      // Predicated region
      $region25: #{tpu_custom_call.1} parent=11 // pred_check
        %p259 = pneg %p125
      $region26: #{tpu_custom_call.1} parent=11 // pred_check_branch
        %261 = sbr.rel (%p259) target = $region28
      $region27: #{tpu_custom_call.1} parent=11 // pred_region
        _
      $region28: #{tpu_custom_call.1} parent=11 // pred_fallthru
        _
      // Predicated region
      $region29: #{tpu_custom_call.1} parent=11 // pred_check
        %p262 = pneg %p146
      $region30: #{tpu_custom_call.1} parent=11 // pred_check_branch
        %264 = sbr.rel (%p262) target = $region32
      $region31: #{tpu_custom_call.1} parent=11 // pred_region
        _
      $region32: #{tpu_custom_call.1} parent=11 // pred_fallthru
        _
      // Predicated region
      $region33: #{tpu_custom_call.1} parent=11 // pred_check
        %p265 = pneg %p167
      $region34: #{tpu_custom_call.1} parent=11 // pred_check_branch
        %267 = sbr.rel (%p265) target = $region36
      $region35: #{tpu_custom_call.1} parent=11 // pred_region
        _
      $region36: #{tpu_custom_call.1} parent=11 // pred_fallthru
        _
      // Predicated region
      $region37: #{tpu_custom_call.1} parent=11 // pred_check
        %p268 = pneg %p188
      $region38: #{tpu_custom_call.1} parent=11 // pred_check_branch
        %270 = sbr.rel (%p268) target = $region40
      $region39: #{tpu_custom_call.1} parent=11 // pred_region
        _
      $region40: #{tpu_custom_call.1} parent=11 // pred_fallthru
        _
      // Predicated region
      $region41: #{tpu_custom_call.1} parent=11 // pred_check
        %p271 = pneg %p209
      $region42: #{tpu_custom_call.1} parent=11 // pred_check_branch
        %273 = sbr.rel (%p271) target = $region44
      $region43: #{tpu_custom_call.1} parent=11 // pred_region
        _
      $region44: #{tpu_custom_call.1} parent=11 // pred_fallthru
        _
    $region12: #{tpu_custom_call.1} parent=5 // pred_fallthru
      _
    %p274 = scmp.lt.s32.totalorder %s15, 2
    // Predicated region
    $region45: #{tpu_custom_call.1} parent=5 // pred_check
      %p275 = pneg %p274
    $region46: #{tpu_custom_call.1} parent=5 // pred_check_branch
      %277 = sbr.rel (%p275) target = $region48
    $region47: #{tpu_custom_call.1} parent=5 // pred_region
      // Predicated region
      $region49: #{tpu_custom_call.1} parent=47 // pred_check
        %p278 = pneg %p35
      $region50: #{tpu_custom_call.1} parent=47 // pred_check_branch
        %280 = sbr.rel (%p278) target = $region52
      $region51: #{tpu_custom_call.1} parent=47 // pred_region
        %p281 = scmp.lt.s32.totalorder %s15, 1
        %s282 = scalar_select %p281, %s15, 1
        %s283 = smul.addr %s282, 32
        %s284 = smul.addr %s283, 8
        %s285 = scalar_lea.vmem %s0, %s284
      $region52: #{tpu_custom_call.1} parent=47 // pred_fallthru
        _
    $region48: #{tpu_custom_call.1} parent=5 // pred_fallthru
      _
    %p286 = scmp.le.s32.totalorder 1, %s15
    %p287 = scmp.lt.s32.totalorder %s15, 3
    %p288 = pnand %p286, %p287
    %p289 = pneg %p288
    // Predicated region
    $region53: #{tpu_custom_call.1} parent=5 // pred_check
      _
    $region54: #{tpu_custom_call.1} parent=5 // pred_check_branch
      %291 = sbr.rel (%p288) target = $region56
    $region55: #{tpu_custom_call.1} parent=5 // pred_region
      %s292 = ssub.s32 %s15, 1
      %p293 = scmp.lt.s32.totalorder %s20, 1
      %s294 = scalar_select %p293, %s20, 1
      %s295 = smul.addr %s294, 32
      %s296 = smul.addr %s295, 8
      %s297 = scalar_lea.vmem %s0, %s296
      %p298 = pneg %p41
      %p299 = pneg %p38
      %p300 = pneg %p62
      %p301 = pneg %p59
      %p302 = pneg %p83
      %p303 = pneg %p80
      %p304 = pneg %p104
      %p305 = pneg %p101
      %p306 = pneg %p125
      %p307 = pneg %p122
      %p308 = pneg %p146
      %p309 = pneg %p143
      %p310 = pneg %p167
      %p311 = pneg %p164
      %p312 = pneg %p188
      %p313 = pneg %p185
      %p314 = pneg %p209
      %p315 = pneg %p206
      %p316 = pneg %p235
      %p317 = pneg %p232
      %p318 = scmp.lt.s32.totalorder %s20, 1
      %s319 = scalar_select %p318, %s20, 1
      %s320 = smul.addr %s319, 32
      %s321 = smul.addr %s320, 8
      %s322 = scalar_lea.vmem %s9, %s321
      %p323 = scmp.lt.s32.totalorder %s20, 1
      %s324 = scalar_select %p323, %s20, 1
      %s325 = smul.addr %s324, 32
      %s326 = smul.addr %s325, 8
      %s327 = scalar_lea.vmem %s0, %s326
      %p328 = scmp.lt.s32.totalorder %s20, 1
      %s329 = scalar_select %p328, %s20, 1
      %s330 = smul.addr %s329, 32
      %s331 = smul.addr %s330, 8
      %s332 = scalar_lea.vmem %s9, %s331
      %v333 = vld [vmem:[%s327] sm:$0xff]
      %v334 = vld [vmem:[%s327 + $0x8] sm:$0xff]
      %v335 = vld [vmem:[%s327 + $0x10] sm:$0xff]
      %v336 = vld [vmem:[%s327 + $0x18] sm:$0xff]
      %v337 = vld [vmem:[%s327 + $0x20] sm:$0xff]
      %v338 = vld [vmem:[%s327 + $0x28] sm:$0xff]
      %v339 = vld [vmem:[%s327 + $0x30] sm:$0xff]
      %v340 = vld [vmem:[%s327 + $0x38] sm:$0xff]
      %v341 = vld [vmem:[%s327 + $0x40] sm:$0xff]
      %v342 = vld [vmem:[%s327 + $0x48] sm:$0xff]
      %v343 = vld [vmem:[%s327 + $0x50] sm:$0xff]
      %v344 = vld [vmem:[%s327 + $0x58] sm:$0xff]
      %v345 = vld [vmem:[%s327 + $0x60] sm:$0xff]
      %v346 = vld [vmem:[%s327 + $0x68] sm:$0xff]
      %v347 = vld [vmem:[%s327 + $0x70] sm:$0xff]
      %v348 = vld [vmem:[%s327 + $0x78] sm:$0xff]
      %v349 = vld [vmem:[%s327 + $0x80] sm:$0xff]
      %v350 = vld [vmem:[%s327 + $0x88] sm:$0xff]
      %v351 = vld [vmem:[%s327 + $0x90] sm:$0xff]
      %v352 = vld [vmem:[%s327 + $0x98] sm:$0xff]
      %v353 = vld [vmem:[%s327 + $0xa0] sm:$0xff]
      %v354 = vld [vmem:[%s327 + $0xa8] sm:$0xff]
      %v355 = vld [vmem:[%s327 + $0xb0] sm:$0xff]
      %v356 = vld [vmem:[%s327 + $0xb8] sm:$0xff]
      %v357 = vld [vmem:[%s327 + $0xc0] sm:$0xff]
      %v358 = vld [vmem:[%s327 + $0xc8] sm:$0xff]
      %v359 = vld [vmem:[%s327 + $0xd0] sm:$0xff]
      %v360 = vld [vmem:[%s327 + $0xd8] sm:$0xff]
      %v361 = vld [vmem:[%s327 + $0xe0] sm:$0xff]
      %v362 = vld [vmem:[%s327 + $0xe8] sm:$0xff]
      %v363 = vld [vmem:[%s327 + $0xf0] sm:$0xff]
      %v364 = vld [vmem:[%s327 + $0xf8] sm:$0xff]
      %v365 = vld [vmem:[%s3] sm:$0xff]
      %v366 = vld [vmem:[%s3 + $0x8] sm:$0xff]
      %v367 = vld [vmem:[%s3 + $0x10] sm:$0xff]
      %v368 = vld [vmem:[%s3 + $0x18] sm:$0xff]
      %v369 = vld [vmem:[%s3 + $0x20] sm:$0xff]
      %v370 = vld [vmem:[%s3 + $0x28] sm:$0xff]
      %v371 = vld [vmem:[%s3 + $0x30] sm:$0xff]
      %v372 = vld [vmem:[%s3 + $0x38] sm:$0xff]
      %v373 = vld [vmem:[%s4] sm:$0x1]
      %v375 = vlaneseq
      %v376 = vshrl.u32 %v375, 7
      %v377 = vsub.s32 0, %v376
      %v378 = vrot.slane %v373, %v377
      %vm380 = vcmask 523264
      %v382 = vsel %vm380, %v333, 0
      %v385 = vsel %vm380, %v334, 0
      %v388 = vsel %vm380, %v335, 0
      %v391 = vsel %vm380, %v336, 0
      %v394 = vsel %vm380, %v337, 0
      %v397 = vsel %vm380, %v338, 0
      %v400 = vsel %vm380, %v339, 0
      %v403 = vsel %vm380, %v340, 0
      %v406 = vsel %vm380, %v341, 0
      %v409 = vsel %vm380, %v342, 0
      %v412 = vsel %vm380, %v343, 0
      %v415 = vsel %vm380, %v344, 0
      %v418 = vsel %vm380, %v345, 0
      %v421 = vsel %vm380, %v346, 0
      %v424 = vsel %vm380, %v347, 0
      %v427 = vsel %vm380, %v348, 0
      %v430 = vsel %vm380, %v349, 0
      %v433 = vsel %vm380, %v350, 0
      %v436 = vsel %vm380, %v351, 0
      %v439 = vsel %vm380, %v352, 0
      %v442 = vsel %vm380, %v353, 0
      %v445 = vsel %vm380, %v354, 0
      %v448 = vsel %vm380, %v355, 0
      %v451 = vsel %vm380, %v356, 0
      %v454 = vsel %vm380, %v357, 0
      %v457 = vsel %vm380, %v358, 0
      %v460 = vsel %vm380, %v359, 0
      %v463 = vsel %vm380, %v360, 0
      %v466 = vsel %vm380, %v361, 0
      %v469 = vsel %vm380, %v362, 0
      %v472 = vsel %vm380, %v363, 0
      %v475 = vsel %vm380, %v364, 0
      %477 = vmatprep.subr.mxu0 0.0
      %478 = vmatpush1.msra.mxu0 %v365
      %479 = vmatprep.subr.mxu0 0.0
      %480 = vmatpush1.msra.mxu0 %v366
      %481 = vmatprep.subr.mxu0 0.0
      %482 = vmatpush1.msra.mxu0 %v367
      %483 = vmatprep.subr.mxu0 0.0
      %484 = vmatpush1.msra.mxu0 %v368
      %485 = vmatprep.subr.mxu0 0.0
      %486 = vmatpush1.msra.mxu0 %v369
      %487 = vmatprep.subr.mxu0 0.0
      %488 = vmatpush1.msra.mxu0 %v370
      %489 = vmatprep.subr.mxu0 0.0
      %490 = vmatpush1.msra.mxu0 %v371
      %491 = vmatprep.subr.mxu0 0.0
      %492 = vmatpush1.msra.mxu0 %v372
      %493 = vmatprep.subr.mxu0 0.0
      %494 = vmatpush1.msra.mxu0 0.0
      %495 = vmatprep.subr.mxu0 0.0
      %496 = vmatpush1.msra.mxu0 0.0
      %497 = vmatprep.subr.mxu0 0.0
      %498 = vmatpush1.msra.mxu0 0.0
      %499 = vmatprep.subr.mxu0 0.0
      %500 = vmatpush1.msra.mxu0 0.0
      %501 = vmatprep.subr.mxu0 0.0
      %502 = vmatpush1.msra.mxu0 0.0
      %503 = vmatprep.subr.mxu0 0.0
      %504 = vmatpush1.msra.mxu0 0.0
      %505 = vmatprep.subr.mxu0 0.0
      %506 = vmatpush1.msra.mxu0 0.0
      %507 = vmatprep.subr.mxu0 0.0
      %508 = vmatpush1.msra.mxu0 0.0
      %509 = vmatprep.subr.mxu0 0.0
      %510 = vmatpush1.msra.mxu0 0.0
      %511 = vmatprep.subr.mxu0 0.0
      %512 = vmatpush1.msra.mxu0 0.0
      %513 = vmatprep.subr.mxu0 0.0
      %514 = vmatpush1.msra.mxu0 0.0
      %515 = vmatprep.subr.mxu0 0.0
      %516 = vmatpush1.msra.mxu0 0.0
      %517 = vmatprep.subr.mxu0 0.0
      %518 = vmatpush1.msra.mxu0 0.0
      %519 = vmatprep.subr.mxu0 0.0
      %520 = vmatpush1.msra.mxu0 0.0
      %521 = vmatprep.subr.mxu0 0.0
      %522 = vmatpush1.msra.mxu0 0.0
      %523 = vmatprep.subr.mxu0 0.0
      %524 = vmatpush1.msra.mxu0 0.0
      %525 = vmatprep.subr.mxu0 0.0
      %526 = vmatpush1.msra.mxu0 0.0
      %527 = vmatprep.subr.mxu0 0.0
      %528 = vmatpush1.msra.mxu0 0.0
      %529 = vmatprep.subr.mxu0 0.0
      %530 = vmatpush1.msra.mxu0 0.0
      %531 = vmatprep.subr.mxu0 0.0
      %532 = vmatpush1.msra.mxu0 0.0
      %533 = vmatprep.subr.mxu0 0.0
      %534 = vmatpush1.msra.mxu0 0.0
      %535 = vmatprep.subr.mxu0 0.0
      %536 = vmatpush1.msra.mxu0 0.0
      %537 = vmatprep.subr.mxu0 0.0
      %538 = vmatpush1.msra.mxu0 0.0
      %539 = vmatprep.subr.mxu0 0.0
      %540 = vmatpush1.msra.mxu0 0.0
      %541 = vmatprep.mubr.f32.mxu0 0.0
      %542 = vmatmul.mubr.f32.gmra.mrb[0].mxu0 %v382
      %v543 = vpop.f32.mrb[0].mxu0
      %v544 = vadd.f32 %v378, %v543
      %v545 = vpop.f32.mrb[0].mxu0
      %546 = vmatprep.mubr.f32.mxu0 0.0
      %547 = vmatmul.mubr.f32.gmra.mrb[0].mxu0 %v385
      %v548 = vpop.f32.mrb[0].mxu0
      %v549 = vadd.f32 %v378, %v548
      %v550 = vpop.f32.mrb[0].mxu0
      %551 = vmatprep.mubr.f32.mxu0 0.0
      %552 = vmatmul.mubr.f32.gmra.mrb[0].mxu0 %v388
      %v553 = vpop.f32.mrb[0].mxu0
      %v554 = vadd.f32 %v378, %v553
      %v555 = vpop.f32.mrb[0].mxu0
      %556 = vmatprep.mubr.f32.mxu0 0.0
      %557 = vmatmul.mubr.f32.gmra.mrb[0].mxu0 %v391
      %v558 = vpop.f32.mrb[0].mxu0
      %v559 = vadd.f32 %v378, %v558
      %v560 = vpop.f32.mrb[0].mxu0
      %561 = vmatprep.mubr.f32.mxu0 0.0
      %562 = vmatmul.mubr.f32.gmra.mrb[0].mxu0 %v394
      %v563 = vpop.f32.mrb[0].mxu0
      %v564 = vadd.f32 %v378, %v563
      %v565 = vpop.f32.mrb[0].mxu0
      %566 = vmatprep.mubr.f32.mxu0 0.0
      %567 = vmatmul.mubr.f32.gmra.mrb[0].mxu0 %v397
      %v568 = vpop.f32.mrb[0].mxu0
      %v569 = vadd.f32 %v378, %v568
      %v570 = vpop.f32.mrb[0].mxu0
      %571 = vmatprep.mubr.f32.mxu0 0.0
      %572 = vmatmul.mubr.f32.gmra.mrb[0].mxu0 %v400
      %v573 = vpop.f32.mrb[0].mxu0
      %v574 = vadd.f32 %v378, %v573
      %v575 = vpop.f32.mrb[0].mxu0
      %576 = vmatprep.mubr.f32.mxu0 0.0
      %577 = vmatmul.mubr.f32.gmra.mrb[0].mxu0 %v403
      %v578 = vpop.f32.mrb[0].mxu0
      %v579 = vadd.f32 %v378, %v578
      %v580 = vpop.f32.mrb[0].mxu0
      %581 = vmatprep.mubr.f32.mxu0 0.0
      %582 = vmatmul.mubr.f32.gmra.mrb[0].mxu0 %v406
      %v583 = vpop.f32.mrb[0].mxu0
      %v584 = vadd.f32 %v378, %v583
      %v585 = vpop.f32.mrb[0].mxu0
      %586 = vmatprep.mubr.f32.mxu0 0.0
      %587 = vmatmul.mubr.f32.gmra.mrb[0].mxu0 %v409
      %v588 = vpop.f32.mrb[0].mxu0
      %v589 = vadd.f32 %v378, %v588
      %v590 = vpop.f32.mrb[0].mxu0
      %591 = vmatprep.mubr.f32.mxu0 0.0
      %592 = vmatmul.mubr.f32.gmra.mrb[0].mxu0 %v412
      %v593 = vpop.f32.mrb[0].mxu0
      %v594 = vadd.f32 %v378, %v593
      %v595 = vpop.f32.mrb[0].mxu0
      %596 = vmatprep.mubr.f32.mxu0 0.0
      %597 = vmatmul.mubr.f32.gmra.mrb[0].mxu0 %v415
      %v598 = vpop.f32.mrb[0].mxu0
      %v599 = vadd.f32 %v378, %v598
      %v600 = vpop.f32.mrb[0].mxu0
      %601 = vmatprep.mubr.f32.mxu0 0.0
      %602 = vmatmul.mubr.f32.gmra.mrb[0].mxu0 %v418
      %v603 = vpop.f32.mrb[0].mxu0
      %v604 = vadd.f32 %v378, %v603
      %v605 = vpop.f32.mrb[0].mxu0
      %606 = vmatprep.mubr.f32.mxu0 0.0
      %607 = vmatmul.mubr.f32.gmra.mrb[0].mxu0 %v421
      %v608 = vpop.f32.mrb[0].mxu0
      %v609 = vadd.f32 %v378, %v608
      %v610 = vpop.f32.mrb[0].mxu0
      %611 = vmatprep.mubr.f32.mxu0 0.0
      %612 = vmatmul.mubr.f32.gmra.mrb[0].mxu0 %v424
      %v613 = vpop.f32.mrb[0].mxu0
      %v614 = vadd.f32 %v378, %v613
      %v615 = vpop.f32.mrb[0].mxu0
      %616 = vmatprep.mubr.f32.mxu0 0.0
      %617 = vmatmul.mubr.f32.gmra.mrb[0].mxu0 %v427
      %v618 = vpop.f32.mrb[0].mxu0
      %v619 = vadd.f32 %v378, %v618
      %v620 = vpop.f32.mrb[0].mxu0
      %621 = vmatprep.mubr.f32.mxu0 0.0
      %622 = vmatmul.mubr.f32.gmra.mrb[0].mxu0 %v430
      %v623 = vpop.f32.mrb[0].mxu0
      %v624 = vadd.f32 %v378, %v623
      %v625 = vpop.f32.mrb[0].mxu0
      %626 = vmatprep.mubr.f32.mxu0 0.0
      %627 = vmatmul.mubr.f32.gmra.mrb[0].mxu0 %v433
      %v628 = vpop.f32.mrb[0].mxu0
      %v629 = vadd.f32 %v378, %v628
      %v630 = vpop.f32.mrb[0].mxu0
      %631 = vmatprep.mubr.f32.mxu0 0.0
      %632 = vmatmul.mubr.f32.gmra.mrb[0].mxu0 %v436
      %v633 = vpop.f32.mrb[0].mxu0
      %v634 = vadd.f32 %v378, %v633
      %v635 = vpop.f32.mrb[0].mxu0
      %636 = vmatprep.mubr.f32.mxu0 0.0
      %637 = vmatmul.mubr.f32.gmra.mrb[0].mxu0 %v439
      %v638 = vpop.f32.mrb[0].mxu0
      %v639 = vadd.f32 %v378, %v638
      %v640 = vpop.f32.mrb[0].mxu0
      %641 = vmatprep.mubr.f32.mxu0 0.0
      %642 = vmatmul.mubr.f32.gmra.mrb[0].mxu0 %v442
      %v643 = vpop.f32.mrb[0].mxu0
      %v644 = vadd.f32 %v378, %v643
      %v645 = vpop.f32.mrb[0].mxu0
      %646 = vmatprep.mubr.f32.mxu0 0.0
      %647 = vmatmul.mubr.f32.gmra.mrb[0].mxu0 %v445
      %v648 = vpop.f32.mrb[0].mxu0
      %v649 = vadd.f32 %v378, %v648
      %v650 = vpop.f32.mrb[0].mxu0
      %651 = vmatprep.mubr.f32.mxu0 0.0
      %652 = vmatmul.mubr.f32.gmra.mrb[0].mxu0 %v448
      %v653 = vpop.f32.mrb[0].mxu0
      %v654 = vadd.f32 %v378, %v653
      %v655 = vpop.f32.mrb[0].mxu0
      %656 = vmatprep.mubr.f32.mxu0 0.0
      %657 = vmatmul.mubr.f32.gmra.mrb[0].mxu0 %v451
      %v658 = vpop.f32.mrb[0].mxu0
      %v659 = vadd.f32 %v378, %v658
      %v660 = vpop.f32.mrb[0].mxu0
      %661 = vmatprep.mubr.f32.mxu0 0.0
      %662 = vmatmul.mubr.f32.gmra.mrb[0].mxu0 %v454
      %v663 = vpop.f32.mrb[0].mxu0
      %v664 = vadd.f32 %v378, %v663
      %v665 = vpop.f32.mrb[0].mxu0
      %666 = vmatprep.mubr.f32.mxu0 0.0
      %667 = vmatmul.mubr.f32.gmra.mrb[0].mxu0 %v457
      %v668 = vpop.f32.mrb[0].mxu0
      %v669 = vadd.f32 %v378, %v668
      %v670 = vpop.f32.mrb[0].mxu0
      %671 = vmatprep.mubr.f32.mxu0 0.0
      %672 = vmatmul.mubr.f32.gmra.mrb[0].mxu0 %v460
      %v673 = vpop.f32.mrb[0].mxu0
      %v674 = vadd.f32 %v378, %v673
      %v675 = vpop.f32.mrb[0].mxu0
      %676 = vmatprep.mubr.f32.mxu0 0.0
      %677 = vmatmul.mubr.f32.gmra.mrb[0].mxu0 %v463
      %v678 = vpop.f32.mrb[0].mxu0
      %v679 = vadd.f32 %v378, %v678
      %v680 = vpop.f32.mrb[0].mxu0
      %681 = vmatprep.mubr.f32.mxu0 0.0
      %682 = vmatmul.mubr.f32.gmra.mrb[0].mxu0 %v466
      %v683 = vpop.f32.mrb[0].mxu0
      %v684 = vadd.f32 %v378, %v683
      %v685 = vpop.f32.mrb[0].mxu0
      %686 = vmatprep.mubr.f32.mxu0 0.0
      %687 = vmatmul.mubr.f32.gmra.mrb[0].mxu0 %v469
      %v688 = vpop.f32.mrb[0].mxu0
      %v689 = vadd.f32 %v378, %v688
      %v690 = vpop.f32.mrb[0].mxu0
      %691 = vmatprep.mubr.f32.mxu0 0.0
      %692 = vmatmul.mubr.f32.gmra.mrb[0].mxu0 %v472
      %v693 = vpop.f32.mrb[0].mxu0
      %v694 = vadd.f32 %v378, %v693
      %v695 = vpop.f32.mrb[0].mxu0
      %696 = vmatprep.mubr.f32.mxu0 0.0
      %697 = vmatmul.mubr.f32.gmra.mrb[0].mxu0 %v475
      %v698 = vpop.f32.mrb[0].mxu0
      %v699 = vadd.f32 %v378, %v698
      %v700 = vpop.f32.mrb[0].mxu0
      %701 = vdwg.mxu0
      %v702 = vld [vmem:[%s1] sm:$0xff]
      %v703 = vld [vmem:[%s1 + $0x8] sm:$0xff]
      %v704 = vld [vmem:[%s1 + $0x10] sm:$0xff]
      %v705 = vld [vmem:[%s1 + $0x18] sm:$0xff]
      %v706 = vld [vmem:[%s1 + $0x20] sm:$0xff]
      %v707 = vld [vmem:[%s1 + $0x28] sm:$0xff]
      %v708 = vld [vmem:[%s1 + $0x30] sm:$0xff]
      %v709 = vld [vmem:[%s1 + $0x38] sm:$0xff]
      %v710 = vld [vmem:[%s1 + $0x40] sm:$0xff]
      %v711 = vld [vmem:[%s1 + $0x48] sm:$0xff]
      %v712 = vld [vmem:[%s1 + $0x50] sm:$0xff]
      %v713 = vld [vmem:[%s1 + $0x58] sm:$0xff]
      %v714 = vld [vmem:[%s1 + $0x60] sm:$0xff]
      %v715 = vld [vmem:[%s1 + $0x68] sm:$0xff]
      %v716 = vld [vmem:[%s1 + $0x70] sm:$0xff]
      %v717 = vld [vmem:[%s1 + $0x78] sm:$0xff]
      %v718 = vld [vmem:[%s1 + $0x80] sm:$0xff]
      %v719 = vld [vmem:[%s1 + $0x88] sm:$0xff]
      %v720 = vld [vmem:[%s1 + $0x90] sm:$0xff]
      %v721 = vld [vmem:[%s1 + $0x98] sm:$0xff]
      %v722 = vld [vmem:[%s1 + $0xa0] sm:$0xff]
      %v723 = vld [vmem:[%s1 + $0xa8] sm:$0xff]
      %v724 = vld [vmem:[%s1 + $0xb0] sm:$0xff]
      %v725 = vld [vmem:[%s1 + $0xb8] sm:$0xff]
      %v726 = vld [vmem:[%s1 + $0xc0] sm:$0xff]
      %v727 = vld [vmem:[%s1 + $0xc8] sm:$0xff]
      %v728 = vld [vmem:[%s1 + $0xd0] sm:$0xff]
      %v729 = vld [vmem:[%s1 + $0xd8] sm:$0xff]
      %v730 = vld [vmem:[%s1 + $0xe0] sm:$0xff]
      %v731 = vld [vmem:[%s1 + $0xe8] sm:$0xff]
      %v732 = vld [vmem:[%s1 + $0xf0] sm:$0xff]
      %v733 = vld [vmem:[%s1 + $0xf8] sm:$0xff]
      %v734 = vld [vmem:[%s2] sm:$0xff]
      %v735 = vld [vmem:[%s2 + $0x8] sm:$0xff]
      %v736 = vld [vmem:[%s2 + $0x10] sm:$0xff]
      %v737 = vld [vmem:[%s2 + $0x18] sm:$0xff]
      %v738 = vld [vmem:[%s2 + $0x20] sm:$0xff]
      %v739 = vld [vmem:[%s2 + $0x28] sm:$0xff]
      %v740 = vld [vmem:[%s2 + $0x30] sm:$0xff]
      %v741 = vld [vmem:[%s2 + $0x38] sm:$0xff]
      %v742 = vld [vmem:[%s2 + $0x40] sm:$0xff]
      %v743 = vld [vmem:[%s2 + $0x48] sm:$0xff]
      %v744 = vld [vmem:[%s2 + $0x50] sm:$0xff]
      %v745 = vld [vmem:[%s2 + $0x58] sm:$0xff]
      %v746 = vld [vmem:[%s2 + $0x60] sm:$0xff]
      %v747 = vld [vmem:[%s2 + $0x68] sm:$0xff]
      %v748 = vld [vmem:[%s2 + $0x70] sm:$0xff]
      %v749 = vld [vmem:[%s2 + $0x78] sm:$0xff]
      %v750 = vld [vmem:[%s2 + $0x80] sm:$0xff]
      %v751 = vld [vmem:[%s2 + $0x88] sm:$0xff]
      %v752 = vld [vmem:[%s2 + $0x90] sm:$0xff]
      %v753 = vld [vmem:[%s2 + $0x98] sm:$0xff]
      %v754 = vld [vmem:[%s2 + $0xa0] sm:$0xff]
      %v755 = vld [vmem:[%s2 + $0xa8] sm:$0xff]
      %v756 = vld [vmem:[%s2 + $0xb0] sm:$0xff]
      %v757 = vld [vmem:[%s2 + $0xb8] sm:$0xff]
      %v758 = vld [vmem:[%s2 + $0xc0] sm:$0xff]
      %v759 = vld [vmem:[%s2 + $0xc8] sm:$0xff]
      %v760 = vld [vmem:[%s2 + $0xd0] sm:$0xff]
      %v761 = vld [vmem:[%s2 + $0xd8] sm:$0xff]
      %v762 = vld [vmem:[%s2 + $0xe0] sm:$0xff]
      %v763 = vld [vmem:[%s2 + $0xe8] sm:$0xff]
      %v764 = vld [vmem:[%s2 + $0xf0] sm:$0xff]
      %v765 = vld [vmem:[%s2 + $0xf8] sm:$0xff]
      %vm766 = vcmp.ge.s32.totalorder %v702, 1
      %vm767 = vcmp.ge.s32.totalorder %v703, 1
      %vm768 = vcmp.ge.s32.totalorder %v704, 1
      %vm769 = vcmp.ge.s32.totalorder %v705, 1
      %vm770 = vcmp.ge.s32.totalorder %v706, 1
      %vm771 = vcmp.ge.s32.totalorder %v707, 1
      %vm772 = vcmp.ge.s32.totalorder %v708, 1
      %vm773 = vcmp.ge.s32.totalorder %v709, 1
      %vm774 = vcmp.ge.s32.totalorder %v710, 1
      %vm775 = vcmp.ge.s32.totalorder %v711, 1
      %vm776 = vcmp.ge.s32.totalorder %v712, 1
      %vm777 = vcmp.ge.s32.totalorder %v713, 1
      %vm778 = vcmp.ge.s32.totalorder %v714, 1
      %vm779 = vcmp.ge.s32.totalorder %v715, 1
      %vm780 = vcmp.ge.s32.totalorder %v716, 1
      %vm781 = vcmp.ge.s32.totalorder %v717, 1
      %vm782 = vcmp.ge.s32.totalorder %v718, 1
      %vm783 = vcmp.ge.s32.totalorder %v719, 1
      %vm784 = vcmp.ge.s32.totalorder %v720, 1
      %vm785 = vcmp.ge.s32.totalorder %v721, 1
      %vm786 = vcmp.ge.s32.totalorder %v722, 1
      %vm787 = vcmp.ge.s32.totalorder %v723, 1
      %vm788 = vcmp.ge.s32.totalorder %v724, 1
      %vm789 = vcmp.ge.s32.totalorder %v725, 1
      %vm790 = vcmp.ge.s32.totalorder %v726, 1
      %vm791 = vcmp.ge.s32.totalorder %v727, 1
      %vm792 = vcmp.ge.s32.totalorder %v728, 1
      %vm793 = vcmp.ge.s32.totalorder %v729, 1
      %vm794 = vcmp.ge.s32.totalorder %v730, 1
      %vm795 = vcmp.ge.s32.totalorder %v731, 1
      %vm796 = vcmp.ge.s32.totalorder %v732, 1
      %vm797 = vcmp.ge.s32.totalorder %v733, 1
      %vm798 = vcmp.le.s32.totalorder %v702, 14
      %vm799 = vcmp.le.s32.totalorder %v703, 14
      %vm800 = vcmp.le.s32.totalorder %v704, 14
      %vm801 = vcmp.le.s32.totalorder %v705, 14
      %vm802 = vcmp.le.s32.totalorder %v706, 14
      %vm803 = vcmp.le.s32.totalorder %v707, 14
      %vm804 = vcmp.le.s32.totalorder %v708, 14
      %vm805 = vcmp.le.s32.totalorder %v709, 14
      %vm806 = vcmp.le.s32.totalorder %v710, 14
      %vm807 = vcmp.le.s32.totalorder %v711, 14
      %vm808 = vcmp.le.s32.totalorder %v712, 14
      %vm809 = vcmp.le.s32.totalorder %v713, 14
      %vm810 = vcmp.le.s32.totalorder %v714, 14
      %vm811 = vcmp.le.s32.totalorder %v715, 14
      %vm812 = vcmp.le.s32.totalorder %v716, 14
      %vm813 = vcmp.le.s32.totalorder %v717, 14
      %vm814 = vcmp.le.s32.totalorder %v718, 14
      %vm815 = vcmp.le.s32.totalorder %v719, 14
      %vm816 = vcmp.le.s32.totalorder %v720, 14
      %vm817 = vcmp.le.s32.totalorder %v721, 14
      %vm818 = vcmp.le.s32.totalorder %v722, 14
      %vm819 = vcmp.le.s32.totalorder %v723, 14
      %vm820 = vcmp.le.s32.totalorder %v724, 14
      %vm821 = vcmp.le.s32.totalorder %v725, 14
      %vm822 = vcmp.le.s32.totalorder %v726, 14
      %vm823 = vcmp.le.s32.totalorder %v727, 14
      %vm824 = vcmp.le.s32.totalorder %v728, 14
      %vm825 = vcmp.le.s32.totalorder %v729, 14
      %vm826 = vcmp.le.s32.totalorder %v730, 14
      %vm827 = vcmp.le.s32.totalorder %v731, 14
      %vm828 = vcmp.le.s32.totalorder %v732, 14
      %vm829 = vcmp.le.s32.totalorder %v733, 14
      %vm830 = vcmp.ge.s32.totalorder %v734, 1
      %vm831 = vcmp.ge.s32.totalorder %v735, 1
      %vm832 = vcmp.ge.s32.totalorder %v736, 1
      %vm833 = vcmp.ge.s32.totalorder %v737, 1
      %vm834 = vcmp.ge.s32.totalorder %v738, 1
      %vm835 = vcmp.ge.s32.totalorder %v739, 1
      %vm836 = vcmp.ge.s32.totalorder %v740, 1
      %vm837 = vcmp.ge.s32.totalorder %v741, 1
      %vm838 = vcmp.ge.s32.totalorder %v742, 1
      %vm839 = vcmp.ge.s32.totalorder %v743, 1
      %vm840 = vcmp.ge.s32.totalorder %v744, 1
      %vm841 = vcmp.ge.s32.totalorder %v745, 1
      %vm842 = vcmp.ge.s32.totalorder %v746, 1
      %vm843 = vcmp.ge.s32.totalorder %v747, 1
      %vm844 = vcmp.ge.s32.totalorder %v748, 1
      %vm845 = vcmp.ge.s32.totalorder %v749, 1
      %vm846 = vcmp.ge.s32.totalorder %v750, 1
      %vm847 = vcmp.ge.s32.totalorder %v751, 1
      %vm848 = vcmp.ge.s32.totalorder %v752, 1
      %vm849 = vcmp.ge.s32.totalorder %v753, 1
      %vm850 = vcmp.ge.s32.totalorder %v754, 1
      %vm851 = vcmp.ge.s32.totalorder %v755, 1
      %vm852 = vcmp.ge.s32.totalorder %v756, 1
      %vm853 = vcmp.ge.s32.totalorder %v757, 1
      %vm854 = vcmp.ge.s32.totalorder %v758, 1
      %vm855 = vcmp.ge.s32.totalorder %v759, 1
      %vm856 = vcmp.ge.s32.totalorder %v760, 1
      %vm857 = vcmp.ge.s32.totalorder %v761, 1
      %vm858 = vcmp.ge.s32.totalorder %v762, 1
      %vm859 = vcmp.ge.s32.totalorder %v763, 1
      %vm860 = vcmp.ge.s32.totalorder %v764, 1
      %vm861 = vcmp.ge.s32.totalorder %v765, 1
      %vm862 = vcmp.le.s32.totalorder %v734, 14
      %vm863 = vcmp.le.s32.totalorder %v735, 14
      %vm864 = vcmp.le.s32.totalorder %v736, 14
      %vm865 = vcmp.le.s32.totalorder %v737, 14
      %vm866 = vcmp.le.s32.totalorder %v738, 14
      %vm867 = vcmp.le.s32.totalorder %v739, 14
      %vm868 = vcmp.le.s32.totalorder %v740, 14
      %vm869 = vcmp.le.s32.totalorder %v741, 14
      %vm870 = vcmp.le.s32.totalorder %v742, 14
      %vm871 = vcmp.le.s32.totalorder %v743, 14
      %vm872 = vcmp.le.s32.totalorder %v744, 14
      %vm873 = vcmp.le.s32.totalorder %v745, 14
      %vm874 = vcmp.le.s32.totalorder %v746, 14
      %vm875 = vcmp.le.s32.totalorder %v747, 14
      %vm876 = vcmp.le.s32.totalorder %v748, 14
      %vm877 = vcmp.le.s32.totalorder %v749, 14
      %vm878 = vcmp.le.s32.totalorder %v750, 14
      %vm879 = vcmp.le.s32.totalorder %v751, 14
      %vm880 = vcmp.le.s32.totalorder %v752, 14
      %vm881 = vcmp.le.s32.totalorder %v753, 14
      %vm882 = vcmp.le.s32.totalorder %v754, 14
      %vm883 = vcmp.le.s32.totalorder %v755, 14
      %vm884 = vcmp.le.s32.totalorder %v756, 14
      %vm885 = vcmp.le.s32.totalorder %v757, 14
      %vm886 = vcmp.le.s32.totalorder %v758, 14
      %vm887 = vcmp.le.s32.totalorder %v759, 14
      %vm888 = vcmp.le.s32.totalorder %v760, 14
      %vm889 = vcmp.le.s32.totalorder %v761, 14
      %vm890 = vcmp.le.s32.totalorder %v762, 14
      %vm891 = vcmp.le.s32.totalorder %v763, 14
      %vm892 = vcmp.le.s32.totalorder %v764, 14
      %vm893 = vcmp.le.s32.totalorder %v765, 14
      %v894 = vld [vmem:[%s5] sm:$0xff]
      %v895 = vld [vmem:[%s5 + $0x8] sm:$0x1]
      %v896 = vld [vmem:[%s6] sm:$0x1]
      %v898 = vlaneseq
      %v899 = vshrl.u32 %v898, 7
      %v900 = vsub.s32 0, %v899
      %v901 = vrot.slane %v896, %v900
      %v903 = vrot.slane %v544, 7
      %v904 = vrot.slane %v549, 7
      %v905 = vrot.slane %v554, 7
      %v906 = vrot.slane %v559, 7
      %v907 = vrot.slane %v564, 7
      %v908 = vrot.slane %v569, 7
      %v909 = vrot.slane %v574, 7
      %v910 = vrot.slane %v579, 7
      %v911 = vrot.slane %v584, 7
      %v912 = vrot.slane %v589, 7
      %v913 = vrot.slane %v594, 7
      %v914 = vrot.slane %v599, 7
      %v915 = vrot.slane %v604, 7
      %v916 = vrot.slane %v609, 7
      %v917 = vrot.slane %v614, 7
      %v918 = vrot.slane %v619, 7
      %v919 = vrot.slane %v624, 7
      %v920 = vrot.slane %v629, 7
      %v921 = vrot.slane %v634, 7
      %v922 = vrot.slane %v639, 7
      %v923 = vrot.slane %v644, 7
      %v924 = vrot.slane %v649, 7
      %v925 = vrot.slane %v654, 7
      %v926 = vrot.slane %v659, 7
      %v927 = vrot.slane %v664, 7
      %v928 = vrot.slane %v669, 7
      %v929 = vrot.slane %v674, 7
      %v930 = vrot.slane %v679, 7
      %v931 = vrot.slane %v684, 7
      %v932 = vrot.slane %v689, 7
      %v933 = vrot.slane %v694, 7
      %v934 = vrot.slane %v699, 7
      %v935 = vlaneseq
      %v936 = vshrl.u32 %v935, 7
      %vm937 = vcmp.lt.s32.totalorder %v936, 1
      %v938 = vsel %vm937, %v933, %v934
      %v939 = vsel %vm937, %v932, %v933
      %v940 = vsel %vm937, %v931, %v932
      %v941 = vsel %vm937, %v930, %v931
      %v942 = vsel %vm937, %v929, %v930
      %v943 = vsel %vm937, %v928, %v929
      %v944 = vsel %vm937, %v927, %v928
      %v945 = vsel %vm937, %v926, %v927
      %v946 = vsel %vm937, %v925, %v926
      %v947 = vsel %vm937, %v924, %v925
      %v948 = vsel %vm937, %v923, %v924
      %v949 = vsel %vm937, %v922, %v923
      %v950 = vsel %vm937, %v921, %v922
      %v951 = vsel %vm937, %v920, %v921
      %v952 = vsel %vm937, %v919, %v920
      %v953 = vsel %vm937, %v918, %v919
      %v954 = vsel %vm937, %v917, %v918
      %v955 = vsel %vm937, %v916, %v917
      %v956 = vsel %vm937, %v915, %v916
      %v957 = vsel %vm937, %v914, %v915
      %v958 = vsel %vm937, %v913, %v914
      %v959 = vsel %vm937, %v912, %v913
      %v960 = vsel %vm937, %v911, %v912
      %v961 = vsel %vm937, %v910, %v911
      %v962 = vsel %vm937, %v909, %v910
      %v963 = vsel %vm937, %v908, %v909
      %v964 = vsel %vm937, %v907, %v908
      %v965 = vsel %vm937, %v906, %v907
      %v966 = vsel %vm937, %v905, %v906
      %v967 = vsel %vm937, %v904, %v905
      %v968 = vsel %vm937, %v903, %v904
      %v969 = vsel %vm937, %v934, %v903
      %v970 = vlaneseq
      %v971 = vshrl.u32 %v970, 7
      %v972 = vsub.s32 0, %v971
      %v973 = vrot.slane %v894, %v972
      %v974 = vmul.f32 %v939, %v973
      %v975 = vmul.f32 %v938, %v973
      %v976 = vmul.f32 %v969, %v973
      %v977 = vmul.f32 %v968, %v973
      %v978 = vmul.f32 %v967, %v973
      %v979 = vmul.f32 %v966, %v973
      %v980 = vmul.f32 %v965, %v973
      %v981 = vmul.f32 %v964, %v973
      %v982 = vmul.f32 %v963, %v973
      %v983 = vmul.f32 %v962, %v973
      %v984 = vmul.f32 %v961, %v973
      %v985 = vmul.f32 %v960, %v973
      %v986 = vmul.f32 %v959, %v973
      %v987 = vmul.f32 %v958, %v973
      %v988 = vmul.f32 %v957, %v973
      %v989 = vmul.f32 %v956, %v973
      %v990 = vmul.f32 %v955, %v973
      %v991 = vmul.f32 %v954, %v973
      %v992 = vmul.f32 %v953, %v973
      %v993 = vmul.f32 %v952, %v973
      %v994 = vmul.f32 %v951, %v973
      %v995 = vmul.f32 %v950, %v973
      %v996 = vmul.f32 %v949, %v973
      %v997 = vmul.f32 %v948, %v973
      %v998 = vmul.f32 %v947, %v973
      %v999 = vmul.f32 %v946, %v973
      %v1000 = vmul.f32 %v945, %v973
      %v1001 = vmul.f32 %v944, %v973
      %v1002 = vmul.f32 %v943, %v973
      %v1003 = vmul.f32 %v942, %v973
      %v1004 = vmul.f32 %v941, %v973
      %v1005 = vmul.f32 %v940, %v973
      %vm1006 = vmand %vm766, %vm830
      %vm1007 = vmand %vm767, %vm831
      %vm1008 = vmand %vm768, %vm832
      %vm1009 = vmand %vm769, %vm833
      %vm1010 = vmand %vm770, %vm834
      %vm1011 = vmand %vm771, %vm835
      %vm1012 = vmand %vm772, %vm836
      %vm1013 = vmand %vm773, %vm837
      %vm1014 = vmand %vm774, %vm838
      %vm1015 = vmand %vm775, %vm839
      %vm1016 = vmand %vm776, %vm840
      %vm1017 = vmand %vm777, %vm841
      %vm1018 = vmand %vm778, %vm842
      %vm1019 = vmand %vm779, %vm843
      %vm1020 = vmand %vm780, %vm844
      %vm1021 = vmand %vm781, %vm845
      %vm1022 = vmand %vm782, %vm846
      %vm1023 = vmand %vm783, %vm847
      %vm1024 = vmand %vm784, %vm848
      %vm1025 = vmand %vm785, %vm849
      %vm1026 = vmand %vm786, %vm850
      %vm1027 = vmand %vm787, %vm851
      %vm1028 = vmand %vm788, %vm852
      %vm1029 = vmand %vm789, %vm853
      %vm1030 = vmand %vm790, %vm854
      %vm1031 = vmand %vm791, %vm855
      %vm1032 = vmand %vm792, %vm856
      %vm1033 = vmand %vm793, %vm857
      %vm1034 = vmand %vm794, %vm858
      %vm1035 = vmand %vm795, %vm859
      %vm1036 = vmand %vm796, %vm860
      %vm1037 = vmand %vm797, %vm861
      %v1038 = vsel %vm1006, 1, 0
      %v1039 = vsel %vm1007, 1, 0
      %v1040 = vsel %vm1008, 1, 0
      %v1041 = vsel %vm1009, 1, 0
      %v1042 = vsel %vm1010, 1, 0
      %v1043 = vsel %vm1011, 1, 0
      %v1044 = vsel %vm1012, 1, 0
      %v1045 = vsel %vm1013, 1, 0
      %v1046 = vsel %vm1014, 1, 0
      %v1047 = vsel %vm1015, 1, 0
      %v1048 = vsel %vm1016, 1, 0
      %v1049 = vsel %vm1017, 1, 0
      %v1050 = vsel %vm1018, 1, 0
      %v1051 = vsel %vm1019, 1, 0
      %v1052 = vsel %vm1020, 1, 0
      %v1053 = vsel %vm1021, 1, 0
      %v1054 = vsel %vm1022, 1, 0
      %v1055 = vsel %vm1023, 1, 0
      %v1056 = vsel %vm1024, 1, 0
      %v1057 = vsel %vm1025, 1, 0
      %v1058 = vsel %vm1026, 1, 0
      %v1059 = vsel %vm1027, 1, 0
      %v1060 = vsel %vm1028, 1, 0
      %v1061 = vsel %vm1029, 1, 0
      %v1062 = vsel %vm1030, 1, 0
      %v1063 = vsel %vm1031, 1, 0
      %v1064 = vsel %vm1032, 1, 0
      %v1065 = vsel %vm1033, 1, 0
      %v1066 = vsel %vm1034, 1, 0
      %v1067 = vsel %vm1035, 1, 0
      %v1068 = vsel %vm1036, 1, 0
      %v1069 = vsel %vm1037, 1, 0
      %1070 = vset.pattern.permute.xlu0 0
      %1071 = vperm.xlu0 %1070, %v1038
      %v1072 = vpop.permute.xlu0 %1071
      %1073 = vset.pattern.permute.xlu0 0
      %1074 = vperm.xlu0 %1073, %v1039
      %v1075 = vpop.permute.xlu0 %1074
      %1076 = vset.pattern.permute.xlu0 0
      %1077 = vperm.xlu0 %1076, %v1040
      %v1078 = vpop.permute.xlu0 %1077
      %1079 = vset.pattern.permute.xlu0 0
      %1080 = vperm.xlu0 %1079, %v1041
      %v1081 = vpop.permute.xlu0 %1080
      %1082 = vset.pattern.permute.xlu0 0
      %1083 = vperm.xlu0 %1082, %v1042
      %v1084 = vpop.permute.xlu0 %1083
      %1085 = vset.pattern.permute.xlu0 0
      %1086 = vperm.xlu0 %1085, %v1043
      %v1087 = vpop.permute.xlu0 %1086
      %1088 = vset.pattern.permute.xlu0 0
      %1089 = vperm.xlu0 %1088, %v1044
      %v1090 = vpop.permute.xlu0 %1089
      %1091 = vset.pattern.permute.xlu0 0
      %1092 = vperm.xlu0 %1091, %v1045
      %v1093 = vpop.permute.xlu0 %1092
      %1094 = vset.pattern.permute.xlu0 0
      %1095 = vperm.xlu0 %1094, %v1046
      %v1096 = vpop.permute.xlu0 %1095
      %1097 = vset.pattern.permute.xlu0 0
      %1098 = vperm.xlu0 %1097, %v1047
      %v1099 = vpop.permute.xlu0 %1098
      %1100 = vset.pattern.permute.xlu0 0
      %1101 = vperm.xlu0 %1100, %v1048
      %v1102 = vpop.permute.xlu0 %1101
      %1103 = vset.pattern.permute.xlu0 0
      %1104 = vperm.xlu0 %1103, %v1049
      %v1105 = vpop.permute.xlu0 %1104
      %1106 = vset.pattern.permute.xlu0 0
      %1107 = vperm.xlu0 %1106, %v1050
      %v1108 = vpop.permute.xlu0 %1107
      %1109 = vset.pattern.permute.xlu0 0
      %1110 = vperm.xlu0 %1109, %v1051
      %v1111 = vpop.permute.xlu0 %1110
      %1112 = vset.pattern.permute.xlu0 0
      %1113 = vperm.xlu0 %1112, %v1052
      %v1114 = vpop.permute.xlu0 %1113
      %1115 = vset.pattern.permute.xlu0 0
      %1116 = vperm.xlu0 %1115, %v1053
      %v1117 = vpop.permute.xlu0 %1116
      %1118 = vset.pattern.permute.xlu0 0
      %1119 = vperm.xlu0 %1118, %v1054
      %v1120 = vpop.permute.xlu0 %1119
      %1121 = vset.pattern.permute.xlu0 0
      %1122 = vperm.xlu0 %1121, %v1055
      %v1123 = vpop.permute.xlu0 %1122
      %1124 = vset.pattern.permute.xlu0 0
      %1125 = vperm.xlu0 %1124, %v1056
      %v1126 = vpop.permute.xlu0 %1125
      %1127 = vset.pattern.permute.xlu0 0
      %1128 = vperm.xlu0 %1127, %v1057
      %v1129 = vpop.permute.xlu0 %1128
      %1130 = vset.pattern.permute.xlu0 0
      %1131 = vperm.xlu0 %1130, %v1058
      %v1132 = vpop.permute.xlu0 %1131
      %1133 = vset.pattern.permute.xlu0 0
      %1134 = vperm.xlu0 %1133, %v1059
      %v1135 = vpop.permute.xlu0 %1134
      %1136 = vset.pattern.permute.xlu0 0
      %1137 = vperm.xlu0 %1136, %v1060
      %v1138 = vpop.permute.xlu0 %1137
      %1139 = vset.pattern.permute.xlu0 0
      %1140 = vperm.xlu0 %1139, %v1061
      %v1141 = vpop.permute.xlu0 %1140
      %1142 = vset.pattern.permute.xlu0 0
      %1143 = vperm.xlu0 %1142, %v1062
      %v1144 = vpop.permute.xlu0 %1143
      %1145 = vset.pattern.permute.xlu0 0
      %1146 = vperm.xlu0 %1145, %v1063
      %v1147 = vpop.permute.xlu0 %1146
      %1148 = vset.pattern.permute.xlu0 0
      %1149 = vperm.xlu0 %1148, %v1064
      %v1150 = vpop.permute.xlu0 %1149
      %1151 = vset.pattern.permute.xlu0 0
      %1152 = vperm.xlu0 %1151, %v1065
      %v1153 = vpop.permute.xlu0 %1152
      %1154 = vset.pattern.permute.xlu0 0
      %1155 = vperm.xlu0 %1154, %v1066
      %v1156 = vpop.permute.xlu0 %1155
      %1157 = vset.pattern.permute.xlu0 0
      %1158 = vperm.xlu0 %1157, %v1067
      %v1159 = vpop.permute.xlu0 %1158
      %1160 = vset.pattern.permute.xlu0 0
      %1161 = vperm.xlu0 %1160, %v1068
      %v1162 = vpop.permute.xlu0 %1161
      %1163 = vset.pattern.permute.xlu0 0
      %1164 = vperm.xlu0 %1163, %v1069
      %v1165 = vpop.permute.xlu0 %1164
      %vm1166 = vcmp.eq.s32.totalorder %v1072, 1
      %vm1167 = vcmp.eq.s32.totalorder %v1075, 1
      %vm1168 = vcmp.eq.s32.totalorder %v1078, 1
      %vm1169 = vcmp.eq.s32.totalorder %v1081, 1
      %vm1170 = vcmp.eq.s32.totalorder %v1084, 1
      %vm1171 = vcmp.eq.s32.totalorder %v1087, 1
      %vm1172 = vcmp.eq.s32.totalorder %v1090, 1
      %vm1173 = vcmp.eq.s32.totalorder %v1093, 1
      %vm1174 = vcmp.eq.s32.totalorder %v1096, 1
      %vm1175 = vcmp.eq.s32.totalorder %v1099, 1
      %vm1176 = vcmp.eq.s32.totalorder %v1102, 1
      %vm1177 = vcmp.eq.s32.totalorder %v1105, 1
      %vm1178 = vcmp.eq.s32.totalorder %v1108, 1
      %vm1179 = vcmp.eq.s32.totalorder %v1111, 1
      %vm1180 = vcmp.eq.s32.totalorder %v1114, 1
      %vm1181 = vcmp.eq.s32.totalorder %v1117, 1
      %vm1182 = vcmp.eq.s32.totalorder %v1120, 1
      %vm1183 = vcmp.eq.s32.totalorder %v1123, 1
      %vm1184 = vcmp.eq.s32.totalorder %v1126, 1
      %vm1185 = vcmp.eq.s32.totalorder %v1129, 1
      %vm1186 = vcmp.eq.s32.totalorder %v1132, 1
      %vm1187 = vcmp.eq.s32.totalorder %v1135, 1
      %vm1188 = vcmp.eq.s32.totalorder %v1138, 1
      %vm1189 = vcmp.eq.s32.totalorder %v1141, 1
      %vm1190 = vcmp.eq.s32.totalorder %v1144, 1
      %vm1191 = vcmp.eq.s32.totalorder %v1147, 1
      %vm1192 = vcmp.eq.s32.totalorder %v1150, 1
      %vm1193 = vcmp.eq.s32.totalorder %v1153, 1
      %vm1194 = vcmp.eq.s32.totalorder %v1156, 1
      %vm1195 = vcmp.eq.s32.totalorder %v1159, 1
      %vm1196 = vcmp.eq.s32.totalorder %v1162, 1
      %vm1197 = vcmp.eq.s32.totalorder %v1165, 1
      %v1198 = vsel %vm1166, %v974, 0.0
      %v1199 = vsel %vm1167, %v975, 0.0
      %v1200 = vsel %vm1168, %v976, 0.0
      %v1201 = vsel %vm1169, %v977, 0.0
      %v1202 = vsel %vm1170, %v978, 0.0
      %v1203 = vsel %vm1171, %v979, 0.0
      %v1204 = vsel %vm1172, %v980, 0.0
      %v1205 = vsel %vm1173, %v981, 0.0
      %v1206 = vsel %vm1174, %v982, 0.0
      %v1207 = vsel %vm1175, %v983, 0.0
      %v1208 = vsel %vm1176, %v984, 0.0
      %v1209 = vsel %vm1177, %v985, 0.0
      %v1210 = vsel %vm1178, %v986, 0.0
      %v1211 = vsel %vm1179, %v987, 0.0
      %v1212 = vsel %vm1180, %v988, 0.0
      %v1213 = vsel %vm1181, %v989, 0.0
      %v1214 = vsel %vm1182, %v990, 0.0
      %v1215 = vsel %vm1183, %v991, 0.0
      %v1216 = vsel %vm1184, %v992, 0.0
      %v1217 = vsel %vm1185, %v993, 0.0
      %v1218 = vsel %vm1186, %v994, 0.0
      %v1219 = vsel %vm1187, %v995, 0.0
      %v1220 = vsel %vm1188, %v996, 0.0
      %v1221 = vsel %vm1189, %v997, 0.0
      %v1222 = vsel %vm1190, %v998, 0.0
      %v1223 = vsel %vm1191, %v999, 0.0
      %v1224 = vsel %vm1192, %v1000, 0.0
      %v1225 = vsel %vm1193, %v1001, 0.0
      %v1226 = vsel %vm1194, %v1002, 0.0
      %v1227 = vsel %vm1195, %v1003, 0.0
      %v1228 = vsel %vm1196, %v1004, 0.0
      %v1229 = vsel %vm1197, %v1005, 0.0
      %v1230 = vadd.f32 %v901, %v1198
      %v1231 = vadd.f32 %v901, %v1199
      %v1232 = vadd.f32 %v901, %v1200
      %v1233 = vadd.f32 %v901, %v1201
      %v1234 = vadd.f32 %v901, %v1202
      %v1235 = vadd.f32 %v901, %v1203
      %v1236 = vadd.f32 %v901, %v1204
      %v1237 = vadd.f32 %v901, %v1205
      %v1238 = vadd.f32 %v901, %v1206
      %v1239 = vadd.f32 %v901, %v1207
      %v1240 = vadd.f32 %v901, %v1208
      %v1241 = vadd.f32 %v901, %v1209
      %v1242 = vadd.f32 %v901, %v1210
      %v1243 = vadd.f32 %v901, %v1211
      %v1244 = vadd.f32 %v901, %v1212
      %v1245 = vadd.f32 %v901, %v1213
      %v1246 = vadd.f32 %v901, %v1214
      %v1247 = vadd.f32 %v901, %v1215
      %v1248 = vadd.f32 %v901, %v1216
      %v1249 = vadd.f32 %v901, %v1217
      %v1250 = vadd.f32 %v901, %v1218
      %v1251 = vadd.f32 %v901, %v1219
      %v1252 = vadd.f32 %v901, %v1220
      %v1253 = vadd.f32 %v901, %v1221
      %v1254 = vadd.f32 %v901, %v1222
      %v1255 = vadd.f32 %v901, %v1223
      %v1256 = vadd.f32 %v901, %v1224
      %v1257 = vadd.f32 %v901, %v1225
      %v1258 = vadd.f32 %v901, %v1226
      %v1259 = vadd.f32 %v901, %v1227
      %v1260 = vadd.f32 %v901, %v1228
      %v1261 = vadd.f32 %v901, %v1229
      %v1262 = vlaneseq
      %v1263 = vshrl.u32 %v1262, 7
      %v1264 = vsub.s32 1, %v1263
      %v1265 = vrot.slane %v894, %v1264
      %v1266 = vmul.f32 %v694, %v1265
      %v1267 = vmul.f32 %v699, %v1265
      %v1268 = vmul.f32 %v544, %v1265
      %v1269 = vmul.f32 %v549, %v1265
      %v1270 = vmul.f32 %v554, %v1265
      %v1271 = vmul.f32 %v559, %v1265
      %v1272 = vmul.f32 %v564, %v1265
      %v1273 = vmul.f32 %v569, %v1265
      %v1274 = vmul.f32 %v574, %v1265
      %v1275 = vmul.f32 %v579, %v1265
      %v1276 = vmul.f32 %v584, %v1265
      %v1277 = vmul.f32 %v589, %v1265
      %v1278 = vmul.f32 %v594, %v1265
      %v1279 = vmul.f32 %v599, %v1265
      %v1280 = vmul.f32 %v604, %v1265
      %v1281 = vmul.f32 %v609, %v1265
      %v1282 = vmul.f32 %v614, %v1265
      %v1283 = vmul.f32 %v619, %v1265
      %v1284 = vmul.f32 %v624, %v1265
      %v1285 = vmul.f32 %v629, %v1265
      %v1286 = vmul.f32 %v634, %v1265
      %v1287 = vmul.f32 %v639, %v1265
      %v1288 = vmul.f32 %v644, %v1265
      %v1289 = vmul.f32 %v649, %v1265
      %v1290 = vmul.f32 %v654, %v1265
      %v1291 = vmul.f32 %v659, %v1265
      %v1292 = vmul.f32 %v664, %v1265
      %v1293 = vmul.f32 %v669, %v1265
      %v1294 = vmul.f32 %v674, %v1265
      %v1295 = vmul.f32 %v679, %v1265
      %v1296 = vmul.f32 %v684, %v1265
      %v1297 = vmul.f32 %v689, %v1265
      %v1298 = vsel %vm766, 1, 0
      %v1299 = vsel %vm767, 1, 0
      %v1300 = vsel %vm768, 1, 0
      %v1301 = vsel %vm769, 1, 0
      %v1302 = vsel %vm770, 1, 0
      %v1303 = vsel %vm771, 1, 0
      %v1304 = vsel %vm772, 1, 0
      %v1305 = vsel %vm773, 1, 0
      %v1306 = vsel %vm774, 1, 0
      %v1307 = vsel %vm775, 1, 0
      %v1308 = vsel %vm776, 1, 0
      %v1309 = vsel %vm777, 1, 0
      %v1310 = vsel %vm778, 1, 0
      %v1311 = vsel %vm779, 1, 0
      %v1312 = vsel %vm780, 1, 0
      %v1313 = vsel %vm781, 1, 0
      %v1314 = vsel %vm782, 1, 0
      %v1315 = vsel %vm783, 1, 0
      %v1316 = vsel %vm784, 1, 0
      %v1317 = vsel %vm785, 1, 0
      %v1318 = vsel %vm786, 1, 0
      %v1319 = vsel %vm787, 1, 0
      %v1320 = vsel %vm788, 1, 0
      %v1321 = vsel %vm789, 1, 0
      %v1322 = vsel %vm790, 1, 0
      %v1323 = vsel %vm791, 1, 0
      %v1324 = vsel %vm792, 1, 0
      %v1325 = vsel %vm793, 1, 0
      %v1326 = vsel %vm794, 1, 0
      %v1327 = vsel %vm795, 1, 0
      %v1328 = vsel %vm796, 1, 0
      %v1329 = vsel %vm797, 1, 0
      %1330 = vset.pattern.permute.xlu0 0
      %1331 = vperm.xlu0 %1330, %v1298
      %v1332 = vpop.permute.xlu0 %1331
      %1333 = vset.pattern.permute.xlu0 0
      %1334 = vperm.xlu0 %1333, %v1299
      %v1335 = vpop.permute.xlu0 %1334
      %1336 = vset.pattern.permute.xlu0 0
      %1337 = vperm.xlu0 %1336, %v1300
      %v1338 = vpop.permute.xlu0 %1337
      %1339 = vset.pattern.permute.xlu0 0
      %1340 = vperm.xlu0 %1339, %v1301
      %v1341 = vpop.permute.xlu0 %1340
      %1342 = vset.pattern.permute.xlu0 0
      %1343 = vperm.xlu0 %1342, %v1302
      %v1344 = vpop.permute.xlu0 %1343
      %1345 = vset.pattern.permute.xlu0 0
      %1346 = vperm.xlu0 %1345, %v1303
      %v1347 = vpop.permute.xlu0 %1346
      %1348 = vset.pattern.permute.xlu0 0
      %1349 = vperm.xlu0 %1348, %v1304
      %v1350 = vpop.permute.xlu0 %1349
      %1351 = vset.pattern.permute.xlu0 0
      %1352 = vperm.xlu0 %1351, %v1305
      %v1353 = vpop.permute.xlu0 %1352
      %1354 = vset.pattern.permute.xlu0 0
      %1355 = vperm.xlu0 %1354, %v1306
      %v1356 = vpop.permute.xlu0 %1355
      %1357 = vset.pattern.permute.xlu0 0
      %1358 = vperm.xlu0 %1357, %v1307
      %v1359 = vpop.permute.xlu0 %1358
      %1360 = vset.pattern.permute.xlu0 0
      %1361 = vperm.xlu0 %1360, %v1308
      %v1362 = vpop.permute.xlu0 %1361
      %1363 = vset.pattern.permute.xlu0 0
      %1364 = vperm.xlu0 %1363, %v1309
      %v1365 = vpop.permute.xlu0 %1364
      %1366 = vset.pattern.permute.xlu0 0
      %1367 = vperm.xlu0 %1366, %v1310
      %v1368 = vpop.permute.xlu0 %1367
      %1369 = vset.pattern.permute.xlu0 0
      %1370 = vperm.xlu0 %1369, %v1311
      %v1371 = vpop.permute.xlu0 %1370
      %1372 = vset.pattern.permute.xlu0 0
      %1373 = vperm.xlu0 %1372, %v1312
      %v1374 = vpop.permute.xlu0 %1373
      %1375 = vset.pattern.permute.xlu0 0
      %1376 = vperm.xlu0 %1375, %v1313
      %v1377 = vpop.permute.xlu0 %1376
      %1378 = vset.pattern.permute.xlu0 0
      %1379 = vperm.xlu0 %1378, %v1314
      %v1380 = vpop.permute.xlu0 %1379
      %1381 = vset.pattern.permute.xlu0 0
      %1382 = vperm.xlu0 %1381, %v1315
      %v1383 = vpop.permute.xlu0 %1382
      %1384 = vset.pattern.permute.xlu0 0
      %1385 = vperm.xlu0 %1384, %v1316
      %v1386 = vpop.permute.xlu0 %1385
      %1387 = vset.pattern.permute.xlu0 0
      %1388 = vperm.xlu0 %1387, %v1317
      %v1389 = vpop.permute.xlu0 %1388
      %1390 = vset.pattern.permute.xlu0 0
      %1391 = vperm.xlu0 %1390, %v1318
      %v1392 = vpop.permute.xlu0 %1391
      %1393 = vset.pattern.permute.xlu0 0
      %1394 = vperm.xlu0 %1393, %v1319
      %v1395 = vpop.permute.xlu0 %1394
      %1396 = vset.pattern.permute.xlu0 0
      %1397 = vperm.xlu0 %1396, %v1320
      %v1398 = vpop.permute.xlu0 %1397
      %1399 = vset.pattern.permute.xlu0 0
      %1400 = vperm.xlu0 %1399, %v1321
      %v1401 = vpop.permute.xlu0 %1400
      %1402 = vset.pattern.permute.xlu0 0
      %1403 = vperm.xlu0 %1402, %v1322
      %v1404 = vpop.permute.xlu0 %1403
      %1405 = vset.pattern.permute.xlu0 0
      %1406 = vperm.xlu0 %1405, %v1323
      %v1407 = vpop.permute.xlu0 %1406
      %1408 = vset.pattern.permute.xlu0 0
      %1409 = vperm.xlu0 %1408, %v1324
      %v1410 = vpop.permute.xlu0 %1409
      %1411 = vset.pattern.permute.xlu0 0
      %1412 = vperm.xlu0 %1411, %v1325
      %v1413 = vpop.permute.xlu0 %1412
      %1414 = vset.pattern.permute.xlu0 0
      %1415 = vperm.xlu0 %1414, %v1326
      %v1416 = vpop.permute.xlu0 %1415
      %1417 = vset.pattern.permute.xlu0 0
      %1418 = vperm.xlu0 %1417, %v1327
      %v1419 = vpop.permute.xlu0 %1418
      %1420 = vset.pattern.permute.xlu0 0
      %1421 = vperm.xlu0 %1420, %v1328
      %v1422 = vpop.permute.xlu0 %1421
      %1423 = vset.pattern.permute.xlu0 0
      %1424 = vperm.xlu0 %1423, %v1329
      %v1425 = vpop.permute.xlu0 %1424
      %vm1426 = vcmp.eq.s32.totalorder %v1332, 1
      %vm1427 = vcmp.eq.s32.totalorder %v1335, 1
      %vm1428 = vcmp.eq.s32.totalorder %v1338, 1
      %vm1429 = vcmp.eq.s32.totalorder %v1341, 1
      %vm1430 = vcmp.eq.s32.totalorder %v1344, 1
      %vm1431 = vcmp.eq.s32.totalorder %v1347, 1
      %vm1432 = vcmp.eq.s32.totalorder %v1350, 1
      %vm1433 = vcmp.eq.s32.totalorder %v1353, 1
      %vm1434 = vcmp.eq.s32.totalorder %v1356, 1
      %vm1435 = vcmp.eq.s32.totalorder %v1359, 1
      %vm1436 = vcmp.eq.s32.totalorder %v1362, 1
      %vm1437 = vcmp.eq.s32.totalorder %v1365, 1
      %vm1438 = vcmp.eq.s32.totalorder %v1368, 1
      %vm1439 = vcmp.eq.s32.totalorder %v1371, 1
      %vm1440 = vcmp.eq.s32.totalorder %v1374, 1
      %vm1441 = vcmp.eq.s32.totalorder %v1377, 1
      %vm1442 = vcmp.eq.s32.totalorder %v1380, 1
      %vm1443 = vcmp.eq.s32.totalorder %v1383, 1
      %vm1444 = vcmp.eq.s32.totalorder %v1386, 1
      %vm1445 = vcmp.eq.s32.totalorder %v1389, 1
      %vm1446 = vcmp.eq.s32.totalorder %v1392, 1
      %vm1447 = vcmp.eq.s32.totalorder %v1395, 1
      %vm1448 = vcmp.eq.s32.totalorder %v1398, 1
      %vm1449 = vcmp.eq.s32.totalorder %v1401, 1
      %vm1450 = vcmp.eq.s32.totalorder %v1404, 1
      %vm1451 = vcmp.eq.s32.totalorder %v1407, 1
      %vm1452 = vcmp.eq.s32.totalorder %v1410, 1
      %vm1453 = vcmp.eq.s32.totalorder %v1413, 1
      %vm1454 = vcmp.eq.s32.totalorder %v1416, 1
      %vm1455 = vcmp.eq.s32.totalorder %v1419, 1
      %vm1456 = vcmp.eq.s32.totalorder %v1422, 1
      %vm1457 = vcmp.eq.s32.totalorder %v1425, 1
      %v1458 = vsel %vm1426, %v1266, 0.0
      %v1459 = vsel %vm1427, %v1267, 0.0
      %v1460 = vsel %vm1428, %v1268, 0.0
      %v1461 = vsel %vm1429, %v1269, 0.0
      %v1462 = vsel %vm1430, %v1270, 0.0
      %v1463 = vsel %vm1431, %v1271, 0.0
      %v1464 = vsel %vm1432, %v1272, 0.0
      %v1465 = vsel %vm1433, %v1273, 0.0
      %v1466 = vsel %vm1434, %v1274, 0.0
      %v1467 = vsel %vm1435, %v1275, 0.0
      %v1468 = vsel %vm1436, %v1276, 0.0
      %v1469 = vsel %vm1437, %v1277, 0.0
      %v1470 = vsel %vm1438, %v1278, 0.0
      %v1471 = vsel %vm1439, %v1279, 0.0
      %v1472 = vsel %vm1440, %v1280, 0.0
      %v1473 = vsel %vm1441, %v1281, 0.0
      %v1474 = vsel %vm1442, %v1282, 0.0
      %v1475 = vsel %vm1443, %v1283, 0.0
      %v1476 = vsel %vm1444, %v1284, 0.0
      %v1477 = vsel %vm1445, %v1285, 0.0
      %v1478 = vsel %vm1446, %v1286, 0.0
      %v1479 = vsel %vm1447, %v1287, 0.0
      %v1480 = vsel %vm1448, %v1288, 0.0
      %v1481 = vsel %vm1449, %v1289, 0.0
      %v1482 = vsel %vm1450, %v1290, 0.0
      %v1483 = vsel %vm1451, %v1291, 0.0
      %v1484 = vsel %vm1452, %v1292, 0.0
      %v1485 = vsel %vm1453, %v1293, 0.0
      %v1486 = vsel %vm1454, %v1294, 0.0
      %v1487 = vsel %vm1455, %v1295, 0.0
      %v1488 = vsel %vm1456, %v1296, 0.0
      %v1489 = vsel %vm1457, %v1297, 0.0
      %v1490 = vadd.f32 %v1230, %v1458
      %v1491 = vadd.f32 %v1231, %v1459
      %v1492 = vadd.f32 %v1232, %v1460
      %v1493 = vadd.f32 %v1233, %v1461
      %v1494 = vadd.f32 %v1234, %v1462
      %v1495 = vadd.f32 %v1235, %v1463
      %v1496 = vadd.f32 %v1236, %v1464
      %v1497 = vadd.f32 %v1237, %v1465
      %v1498 = vadd.f32 %v1238, %v1466
      %v1499 = vadd.f32 %v1239, %v1467
      %v1500 = vadd.f32 %v1240, %v1468
      %v1501 = vadd.f32 %v1241, %v1469
      %v1502 = vadd.f32 %v1242, %v1470
      %v1503 = vadd.f32 %v1243, %v1471
      %v1504 = vadd.f32 %v1244, %v1472
      %v1505 = vadd.f32 %v1245, %v1473
      %v1506 = vadd.f32 %v1246, %v1474
      %v1507 = vadd.f32 %v1247, %v1475
      %v1508 = vadd.f32 %v1248, %v1476
      %v1509 = vadd.f32 %v1249, %v1477
      %v1510 = vadd.f32 %v1250, %v1478
      %v1511 = vadd.f32 %v1251, %v1479
      %v1512 = vadd.f32 %v1252, %v1480
      %v1513 = vadd.f32 %v1253, %v1481
      %v1514 = vadd.f32 %v1254, %v1482
      %v1515 = vadd.f32 %v1255, %v1483
      %v1516 = vadd.f32 %v1256, %v1484
      %v1517 = vadd.f32 %v1257, %v1485
      %v1518 = vadd.f32 %v1258, %v1486
      %v1519 = vadd.f32 %v1259, %v1487
      %v1520 = vadd.f32 %v1260, %v1488
      %v1521 = vadd.f32 %v1261, %v1489
      %v1522 = vrot.slane %v544, 1
      %v1523 = vrot.slane %v549, 1
      %v1524 = vrot.slane %v554, 1
      %v1525 = vrot.slane %v559, 1
      %v1526 = vrot.slane %v564, 1
      %v1527 = vrot.slane %v569, 1
      %v1528 = vrot.slane %v574, 1
      %v1529 = vrot.slane %v579, 1
      %v1530 = vrot.slane %v584, 1
      %v1531 = vrot.slane %v589, 1
      %v1532 = vrot.slane %v594, 1
      %v1533 = vrot.slane %v599, 1
      %v1534 = vrot.slane %v604, 1
      %v1535 = vrot.slane %v609, 1
      %v1536 = vrot.slane %v614, 1
      %v1537 = vrot.slane %v619, 1
      %v1538 = vrot.slane %v624, 1
      %v1539 = vrot.slane %v629, 1
      %v1540 = vrot.slane %v634, 1
      %v1541 = vrot.slane %v639, 1
      %v1542 = vrot.slane %v644, 1
      %v1543 = vrot.slane %v649, 1
      %v1544 = vrot.slane %v654, 1
      %v1545 = vrot.slane %v659, 1
      %v1546 = vrot.slane %v664, 1
      %v1547 = vrot.slane %v669, 1
      %v1548 = vrot.slane %v674, 1
      %v1549 = vrot.slane %v679, 1
      %v1550 = vrot.slane %v684, 1
      %v1551 = vrot.slane %v689, 1
      %v1552 = vrot.slane %v694, 1
      %v1553 = vrot.slane %v699, 1
      %vm1554 = vcmp.lt.s32.totalorder %v936, 7
      %v1555 = vsel %vm1554, %v1552, %v1553
      %v1556 = vsel %vm1554, %v1551, %v1552
      %v1557 = vsel %vm1554, %v1550, %v1551
      %v1558 = vsel %vm1554, %v1549, %v1550
      %v1559 = vsel %vm1554, %v1548, %v1549
      %v1560 = vsel %vm1554, %v1547, %v1548
      %v1561 = vsel %vm1554, %v1546, %v1547
      %v1562 = vsel %vm1554, %v1545, %v1546
      %v1563 = vsel %vm1554, %v1544, %v1545
      %v1564 = vsel %vm1554, %v1543, %v1544
      %v1565 = vsel %vm1554, %v1542, %v1543
      %v1566 = vsel %vm1554, %v1541, %v1542
      %v1567 = vsel %vm1554, %v1540, %v1541
      %v1568 = vsel %vm1554, %v1539, %v1540
      %v1569 = vsel %vm1554, %v1538, %v1539
      %v1570 = vsel %vm1554, %v1537, %v1538
      %v1571 = vsel %vm1554, %v1536, %v1537
      %v1572 = vsel %vm1554, %v1535, %v1536
      %v1573 = vsel %vm1554, %v1534, %v1535
      %v1574 = vsel %vm1554, %v1533, %v1534
      %v1575 = vsel %vm1554, %v1532, %v1533
      %v1576 = vsel %vm1554, %v1531, %v1532
      %v1577 = vsel %vm1554, %v1530, %v1531
      %v1578 = vsel %vm1554, %v1529, %v1530
      %v1579 = vsel %vm1554, %v1528, %v1529
      %v1580 = vsel %vm1554, %v1527, %v1528
      %v1581 = vsel %vm1554, %v1526, %v1527
      %v1582 = vsel %vm1554, %v1525, %v1526
      %v1583 = vsel %vm1554, %v1524, %v1525
      %v1584 = vsel %vm1554, %v1523, %v1524
      %v1585 = vsel %vm1554, %v1522, %v1523
      %v1586 = vsel %vm1554, %v1553, %v1522
      %v1587 = vlaneseq
      %v1588 = vshrl.u32 %v1587, 7
      %v1589 = vsub.s32 2, %v1588
      %v1590 = vrot.slane %v894, %v1589
      %v1591 = vmul.f32 %v1555, %v1590
      %v1592 = vmul.f32 %v1586, %v1590
      %v1593 = vmul.f32 %v1585, %v1590
      %v1594 = vmul.f32 %v1584, %v1590
      %v1595 = vmul.f32 %v1583, %v1590
      %v1596 = vmul.f32 %v1582, %v1590
      %v1597 = vmul.f32 %v1581, %v1590
      %v1598 = vmul.f32 %v1580, %v1590
      %v1599 = vmul.f32 %v1579, %v1590
      %v1600 = vmul.f32 %v1578, %v1590
      %v1601 = vmul.f32 %v1577, %v1590
      %v1602 = vmul.f32 %v1576, %v1590
      %v1603 = vmul.f32 %v1575, %v1590
      %v1604 = vmul.f32 %v1574, %v1590
      %v1605 = vmul.f32 %v1573, %v1590
      %v1606 = vmul.f32 %v1572, %v1590
      %v1607 = vmul.f32 %v1571, %v1590
      %v1608 = vmul.f32 %v1570, %v1590
      %v1609 = vmul.f32 %v1569, %v1590
      %v1610 = vmul.f32 %v1568, %v1590
      %v1611 = vmul.f32 %v1567, %v1590
      %v1612 = vmul.f32 %v1566, %v1590
      %v1613 = vmul.f32 %v1565, %v1590
      %v1614 = vmul.f32 %v1564, %v1590
      %v1615 = vmul.f32 %v1563, %v1590
      %v1616 = vmul.f32 %v1562, %v1590
      %v1617 = vmul.f32 %v1561, %v1590
      %v1618 = vmul.f32 %v1560, %v1590
      %v1619 = vmul.f32 %v1559, %v1590
      %v1620 = vmul.f32 %v1558, %v1590
      %v1621 = vmul.f32 %v1557, %v1590
      %v1622 = vmul.f32 %v1556, %v1590
      %vm1623 = vmand %vm766, %vm862
      %vm1624 = vmand %vm767, %vm863
      %vm1625 = vmand %vm768, %vm864
      %vm1626 = vmand %vm769, %vm865
      %vm1627 = vmand %vm770, %vm866
      %vm1628 = vmand %vm771, %vm867
      %vm1629 = vmand %vm772, %vm868
      %vm1630 = vmand %vm773, %vm869
      %vm1631 = vmand %vm774, %vm870
      %vm1632 = vmand %vm775, %vm871
      %vm1633 = vmand %vm776, %vm872
      %vm1634 = vmand %vm777, %vm873
      %vm1635 = vmand %vm778, %vm874
      %vm1636 = vmand %vm779, %vm875
      %vm1637 = vmand %vm780, %vm876
      %vm1638 = vmand %vm781, %vm877
      %vm1639 = vmand %vm782, %vm878
      %vm1640 = vmand %vm783, %vm879
      %vm1641 = vmand %vm784, %vm880
      %vm1642 = vmand %vm785, %vm881
      %vm1643 = vmand %vm786, %vm882
      %vm1644 = vmand %vm787, %vm883
      %vm1645 = vmand %vm788, %vm884
      %vm1646 = vmand %vm789, %vm885
      %vm1647 = vmand %vm790, %vm886
      %vm1648 = vmand %vm791, %vm887
      %vm1649 = vmand %vm792, %vm888
      %vm1650 = vmand %vm793, %vm889
      %vm1651 = vmand %vm794, %vm890
      %vm1652 = vmand %vm795, %vm891
      %vm1653 = vmand %vm796, %vm892
      %vm1654 = vmand %vm797, %vm893
      %v1655 = vsel %vm1623, 1, 0
      %v1656 = vsel %vm1624, 1, 0
      %v1657 = vsel %vm1625, 1, 0
      %v1658 = vsel %vm1626, 1, 0
      %v1659 = vsel %vm1627, 1, 0
      %v1660 = vsel %vm1628, 1, 0
      %v1661 = vsel %vm1629, 1, 0
      %v1662 = vsel %vm1630, 1, 0
      %v1663 = vsel %vm1631, 1, 0
      %v1664 = vsel %vm1632, 1, 0
      %v1665 = vsel %vm1633, 1, 0
      %v1666 = vsel %vm1634, 1, 0
      %v1667 = vsel %vm1635, 1, 0
      %v1668 = vsel %vm1636, 1, 0
      %v1669 = vsel %vm1637, 1, 0
      %v1670 = vsel %vm1638, 1, 0
      %v1671 = vsel %vm1639, 1, 0
      %v1672 = vsel %vm1640, 1, 0
      %v1673 = vsel %vm1641, 1, 0
      %v1674 = vsel %vm1642, 1, 0
      %v1675 = vsel %vm1643, 1, 0
      %v1676 = vsel %vm1644, 1, 0
      %v1677 = vsel %vm1645, 1, 0
      %v1678 = vsel %vm1646, 1, 0
      %v1679 = vsel %vm1647, 1, 0
      %v1680 = vsel %vm1648, 1, 0
      %v1681 = vsel %vm1649, 1, 0
      %v1682 = vsel %vm1650, 1, 0
      %v1683 = vsel %vm1651, 1, 0
      %v1684 = vsel %vm1652, 1, 0
      %v1685 = vsel %vm1653, 1, 0
      %v1686 = vsel %vm1654, 1, 0
      %1687 = vset.pattern.permute.xlu0 0
      %1688 = vperm.xlu0 %1687, %v1655
      %v1689 = vpop.permute.xlu0 %1688
      %1690 = vset.pattern.permute.xlu0 0
      %1691 = vperm.xlu0 %1690, %v1656
      %v1692 = vpop.permute.xlu0 %1691
      %1693 = vset.pattern.permute.xlu0 0
      %1694 = vperm.xlu0 %1693, %v1657
      %v1695 = vpop.permute.xlu0 %1694
      %1696 = vset.pattern.permute.xlu0 0
      %1697 = vperm.xlu0 %1696, %v1658
      %v1698 = vpop.permute.xlu0 %1697
      %1699 = vset.pattern.permute.xlu0 0
      %1700 = vperm.xlu0 %1699, %v1659
      %v1701 = vpop.permute.xlu0 %1700
      %1702 = vset.pattern.permute.xlu0 0
      %1703 = vperm.xlu0 %1702, %v1660
      %v1704 = vpop.permute.xlu0 %1703
      %1705 = vset.pattern.permute.xlu0 0
      %1706 = vperm.xlu0 %1705, %v1661
      %v1707 = vpop.permute.xlu0 %1706
      %1708 = vset.pattern.permute.xlu0 0
      %1709 = vperm.xlu0 %1708, %v1662
      %v1710 = vpop.permute.xlu0 %1709
      %1711 = vset.pattern.permute.xlu0 0
      %1712 = vperm.xlu0 %1711, %v1663
      %v1713 = vpop.permute.xlu0 %1712
      %1714 = vset.pattern.permute.xlu0 0
      %1715 = vperm.xlu0 %1714, %v1664
      %v1716 = vpop.permute.xlu0 %1715
      %1717 = vset.pattern.permute.xlu0 0
      %1718 = vperm.xlu0 %1717, %v1665
      %v1719 = vpop.permute.xlu0 %1718
      %1720 = vset.pattern.permute.xlu0 0
      %1721 = vperm.xlu0 %1720, %v1666
      %v1722 = vpop.permute.xlu0 %1721
      %1723 = vset.pattern.permute.xlu0 0
      %1724 = vperm.xlu0 %1723, %v1667
      %v1725 = vpop.permute.xlu0 %1724
      %1726 = vset.pattern.permute.xlu0 0
      %1727 = vperm.xlu0 %1726, %v1668
      %v1728 = vpop.permute.xlu0 %1727
      %1729 = vset.pattern.permute.xlu0 0
      %1730 = vperm.xlu0 %1729, %v1669
      %v1731 = vpop.permute.xlu0 %1730
      %1732 = vset.pattern.permute.xlu0 0
      %1733 = vperm.xlu0 %1732, %v1670
      %v1734 = vpop.permute.xlu0 %1733
      %1735 = vset.pattern.permute.xlu0 0
      %1736 = vperm.xlu0 %1735, %v1671
      %v1737 = vpop.permute.xlu0 %1736
      %1738 = vset.pattern.permute.xlu0 0
      %1739 = vperm.xlu0 %1738, %v1672
      %v1740 = vpop.permute.xlu0 %1739
      %1741 = vset.pattern.permute.xlu0 0
      %1742 = vperm.xlu0 %1741, %v1673
      %v1743 = vpop.permute.xlu0 %1742
      %1744 = vset.pattern.permute.xlu0 0
      %1745 = vperm.xlu0 %1744, %v1674
      %v1746 = vpop.permute.xlu0 %1745
      %1747 = vset.pattern.permute.xlu0 0
      %1748 = vperm.xlu0 %1747, %v1675
      %v1749 = vpop.permute.xlu0 %1748
      %1750 = vset.pattern.permute.xlu0 0
      %1751 = vperm.xlu0 %1750, %v1676
      %v1752 = vpop.permute.xlu0 %1751
      %1753 = vset.pattern.permute.xlu0 0
      %1754 = vperm.xlu0 %1753, %v1677
      %v1755 = vpop.permute.xlu0 %1754
      %1756 = vset.pattern.permute.xlu0 0
      %1757 = vperm.xlu0 %1756, %v1678
      %v1758 = vpop.permute.xlu0 %1757
      %1759 = vset.pattern.permute.xlu0 0
      %1760 = vperm.xlu0 %1759, %v1679
      %v1761 = vpop.permute.xlu0 %1760
      %1762 = vset.pattern.permute.xlu0 0
      %1763 = vperm.xlu0 %1762, %v1680
      %v1764 = vpop.permute.xlu0 %1763
      %1765 = vset.pattern.permute.xlu0 0
      %1766 = vperm.xlu0 %1765, %v1681
      %v1767 = vpop.permute.xlu0 %1766
      %1768 = vset.pattern.permute.xlu0 0
      %1769 = vperm.xlu0 %1768, %v1682
      %v1770 = vpop.permute.xlu0 %1769
      %1771 = vset.pattern.permute.xlu0 0
      %1772 = vperm.xlu0 %1771, %v1683
      %v1773 = vpop.permute.xlu0 %1772
      %1774 = vset.pattern.permute.xlu0 0
      %1775 = vperm.xlu0 %1774, %v1684
      %v1776 = vpop.permute.xlu0 %1775
      %1777 = vset.pattern.permute.xlu0 0
      %1778 = vperm.xlu0 %1777, %v1685
      %v1779 = vpop.permute.xlu0 %1778
      %1780 = vset.pattern.permute.xlu0 0
      %1781 = vperm.xlu0 %1780, %v1686
      %v1782 = vpop.permute.xlu0 %1781
      %vm1783 = vcmp.eq.s32.totalorder %v1689, 1
      %vm1784 = vcmp.eq.s32.totalorder %v1692, 1
      %vm1785 = vcmp.eq.s32.totalorder %v1695, 1
      %vm1786 = vcmp.eq.s32.totalorder %v1698, 1
      %vm1787 = vcmp.eq.s32.totalorder %v1701, 1
      %vm1788 = vcmp.eq.s32.totalorder %v1704, 1
      %vm1789 = vcmp.eq.s32.totalorder %v1707, 1
      %vm1790 = vcmp.eq.s32.totalorder %v1710, 1
      %vm1791 = vcmp.eq.s32.totalorder %v1713, 1
      %vm1792 = vcmp.eq.s32.totalorder %v1716, 1
      %vm1793 = vcmp.eq.s32.totalorder %v1719, 1
      %vm1794 = vcmp.eq.s32.totalorder %v1722, 1
      %vm1795 = vcmp.eq.s32.totalorder %v1725, 1
      %vm1796 = vcmp.eq.s32.totalorder %v1728, 1
      %vm1797 = vcmp.eq.s32.totalorder %v1731, 1
      %vm1798 = vcmp.eq.s32.totalorder %v1734, 1
      %vm1799 = vcmp.eq.s32.totalorder %v1737, 1
      %vm1800 = vcmp.eq.s32.totalorder %v1740, 1
      %vm1801 = vcmp.eq.s32.totalorder %v1743, 1
      %vm1802 = vcmp.eq.s32.totalorder %v1746, 1
      %vm1803 = vcmp.eq.s32.totalorder %v1749, 1
      %vm1804 = vcmp.eq.s32.totalorder %v1752, 1
      %vm1805 = vcmp.eq.s32.totalorder %v1755, 1
      %vm1806 = vcmp.eq.s32.totalorder %v1758, 1
      %vm1807 = vcmp.eq.s32.totalorder %v1761, 1
      %vm1808 = vcmp.eq.s32.totalorder %v1764, 1
      %vm1809 = vcmp.eq.s32.totalorder %v1767, 1
      %vm1810 = vcmp.eq.s32.totalorder %v1770, 1
      %vm1811 = vcmp.eq.s32.totalorder %v1773, 1
      %vm1812 = vcmp.eq.s32.totalorder %v1776, 1
      %vm1813 = vcmp.eq.s32.totalorder %v1779, 1
      %vm1814 = vcmp.eq.s32.totalorder %v1782, 1
      %v1815 = vsel %vm1783, %v1591, 0.0
      %v1816 = vsel %vm1784, %v1592, 0.0
      %v1817 = vsel %vm1785, %v1593, 0.0
      %v1818 = vsel %vm1786, %v1594, 0.0
      %v1819 = vsel %vm1787, %v1595, 0.0
      %v1820 = vsel %vm1788, %v1596, 0.0
      %v1821 = vsel %vm1789, %v1597, 0.0
      %v1822 = vsel %vm1790, %v1598, 0.0
      %v1823 = vsel %vm1791, %v1599, 0.0
      %v1824 = vsel %vm1792, %v1600, 0.0
      %v1825 = vsel %vm1793, %v1601, 0.0
      %v1826 = vsel %vm1794, %v1602, 0.0
      %v1827 = vsel %vm1795, %v1603, 0.0
      %v1828 = vsel %vm1796, %v1604, 0.0
      %v1829 = vsel %vm1797, %v1605, 0.0
      %v1830 = vsel %vm1798, %v1606, 0.0
      %v1831 = vsel %vm1799, %v1607, 0.0
      %v1832 = vsel %vm1800, %v1608, 0.0
      %v1833 = vsel %vm1801, %v1609, 0.0
      %v1834 = vsel %vm1802, %v1610, 0.0
      %v1835 = vsel %vm1803, %v1611, 0.0
      %v1836 = vsel %vm1804, %v1612, 0.0
      %v1837 = vsel %vm1805, %v1613, 0.0
      %v1838 = vsel %vm1806, %v1614, 0.0
      %v1839 = vsel %vm1807, %v1615, 0.0
      %v1840 = vsel %vm1808, %v1616, 0.0
      %v1841 = vsel %vm1809, %v1617, 0.0
      %v1842 = vsel %vm1810, %v1618, 0.0
      %v1843 = vsel %vm1811, %v1619, 0.0
      %v1844 = vsel %vm1812, %v1620, 0.0
      %v1845 = vsel %vm1813, %v1621, 0.0
      %v1846 = vsel %vm1814, %v1622, 0.0
      %v1847 = vadd.f32 %v1490, %v1815
      %v1848 = vadd.f32 %v1491, %v1816
      %v1849 = vadd.f32 %v1492, %v1817
      %v1850 = vadd.f32 %v1493, %v1818
      %v1851 = vadd.f32 %v1494, %v1819
      %v1852 = vadd.f32 %v1495, %v1820
      %v1853 = vadd.f32 %v1496, %v1821
      %v1854 = vadd.f32 %v1497, %v1822
      %v1855 = vadd.f32 %v1498, %v1823
      %v1856 = vadd.f32 %v1499, %v1824
      %v1857 = vadd.f32 %v1500, %v1825
      %v1858 = vadd.f32 %v1501, %v1826
      %v1859 = vadd.f32 %v1502, %v1827
      %v1860 = vadd.f32 %v1503, %v1828
      %v1861 = vadd.f32 %v1504, %v1829
      %v1862 = vadd.f32 %v1505, %v1830
      %v1863 = vadd.f32 %v1506, %v1831
      %v1864 = vadd.f32 %v1507, %v1832
      %v1865 = vadd.f32 %v1508, %v1833
      %v1866 = vadd.f32 %v1509, %v1834
      %v1867 = vadd.f32 %v1510, %v1835
      %v1868 = vadd.f32 %v1511, %v1836
      %v1869 = vadd.f32 %v1512, %v1837
      %v1870 = vadd.f32 %v1513, %v1838
      %v1871 = vadd.f32 %v1514, %v1839
      %v1872 = vadd.f32 %v1515, %v1840
      %v1873 = vadd.f32 %v1516, %v1841
      %v1874 = vadd.f32 %v1517, %v1842
      %v1875 = vadd.f32 %v1518, %v1843
      %v1876 = vadd.f32 %v1519, %v1844
      %v1877 = vadd.f32 %v1520, %v1845
      %v1878 = vadd.f32 %v1521, %v1846
      %v1879 = vlaneseq
      %v1880 = vshrl.u32 %v1879, 7
      %v1881 = vsub.s32 3, %v1880
      %v1882 = vrot.slane %v894, %v1881
      %v1883 = vmul.f32 %v969, %v1882
      %v1884 = vmul.f32 %v968, %v1882
      %v1885 = vmul.f32 %v967, %v1882
      %v1886 = vmul.f32 %v966, %v1882
      %v1887 = vmul.f32 %v965, %v1882
      %v1888 = vmul.f32 %v964, %v1882
      %v1889 = vmul.f32 %v963, %v1882
      %v1890 = vmul.f32 %v962, %v1882
      %v1891 = vmul.f32 %v961, %v1882
      %v1892 = vmul.f32 %v960, %v1882
      %v1893 = vmul.f32 %v959, %v1882
      %v1894 = vmul.f32 %v958, %v1882
      %v1895 = vmul.f32 %v957, %v1882
      %v1896 = vmul.f32 %v956, %v1882
      %v1897 = vmul.f32 %v955, %v1882
      %v1898 = vmul.f32 %v954, %v1882
      %v1899 = vmul.f32 %v953, %v1882
      %v1900 = vmul.f32 %v952, %v1882
      %v1901 = vmul.f32 %v951, %v1882
      %v1902 = vmul.f32 %v950, %v1882
      %v1903 = vmul.f32 %v949, %v1882
      %v1904 = vmul.f32 %v948, %v1882
      %v1905 = vmul.f32 %v947, %v1882
      %v1906 = vmul.f32 %v946, %v1882
      %v1907 = vmul.f32 %v945, %v1882
      %v1908 = vmul.f32 %v944, %v1882
      %v1909 = vmul.f32 %v943, %v1882
      %v1910 = vmul.f32 %v942, %v1882
      %v1911 = vmul.f32 %v941, %v1882
      %v1912 = vmul.f32 %v940, %v1882
      %v1913 = vmul.f32 %v939, %v1882
      %v1914 = vmul.f32 %v938, %v1882
      %v1915 = vsel %vm830, 1, 0
      %v1916 = vsel %vm831, 1, 0
      %v1917 = vsel %vm832, 1, 0
      %v1918 = vsel %vm833, 1, 0
      %v1919 = vsel %vm834, 1, 0
      %v1920 = vsel %vm835, 1, 0
      %v1921 = vsel %vm836, 1, 0
      %v1922 = vsel %vm837, 1, 0
      %v1923 = vsel %vm838, 1, 0
      %v1924 = vsel %vm839, 1, 0
      %v1925 = vsel %vm840, 1, 0
      %v1926 = vsel %vm841, 1, 0
      %v1927 = vsel %vm842, 1, 0
      %v1928 = vsel %vm843, 1, 0
      %v1929 = vsel %vm844, 1, 0
      %v1930 = vsel %vm845, 1, 0
      %v1931 = vsel %vm846, 1, 0
      %v1932 = vsel %vm847, 1, 0
      %v1933 = vsel %vm848, 1, 0
      %v1934 = vsel %vm849, 1, 0
      %v1935 = vsel %vm850, 1, 0
      %v1936 = vsel %vm851, 1, 0
      %v1937 = vsel %vm852, 1, 0
      %v1938 = vsel %vm853, 1, 0
      %v1939 = vsel %vm854, 1, 0
      %v1940 = vsel %vm855, 1, 0
      %v1941 = vsel %vm856, 1, 0
      %v1942 = vsel %vm857, 1, 0
      %v1943 = vsel %vm858, 1, 0
      %v1944 = vsel %vm859, 1, 0
      %v1945 = vsel %vm860, 1, 0
      %v1946 = vsel %vm861, 1, 0
      %1947 = vset.pattern.permute.xlu0 0
      %1948 = vperm.xlu0 %1947, %v1915
      %v1949 = vpop.permute.xlu0 %1948
      %1950 = vset.pattern.permute.xlu0 0
      %1951 = vperm.xlu0 %1950, %v1916
      %v1952 = vpop.permute.xlu0 %1951
      %1953 = vset.pattern.permute.xlu0 0
      %1954 = vperm.xlu0 %1953, %v1917
      %v1955 = vpop.permute.xlu0 %1954
      %1956 = vset.pattern.permute.xlu0 0
      %1957 = vperm.xlu0 %1956, %v1918
      %v1958 = vpop.permute.xlu0 %1957
      %1959 = vset.pattern.permute.xlu0 0
      %1960 = vperm.xlu0 %1959, %v1919
      %v1961 = vpop.permute.xlu0 %1960
      %1962 = vset.pattern.permute.xlu0 0
      %1963 = vperm.xlu0 %1962, %v1920
      %v1964 = vpop.permute.xlu0 %1963
      %1965 = vset.pattern.permute.xlu0 0
      %1966 = vperm.xlu0 %1965, %v1921
      %v1967 = vpop.permute.xlu0 %1966
      %1968 = vset.pattern.permute.xlu0 0
      %1969 = vperm.xlu0 %1968, %v1922
      %v1970 = vpop.permute.xlu0 %1969
      %1971 = vset.pattern.permute.xlu0 0
      %1972 = vperm.xlu0 %1971, %v1923
      %v1973 = vpop.permute.xlu0 %1972
      %1974 = vset.pattern.permute.xlu0 0
      %1975 = vperm.xlu0 %1974, %v1924
      %v1976 = vpop.permute.xlu0 %1975
      %1977 = vset.pattern.permute.xlu0 0
      %1978 = vperm.xlu0 %1977, %v1925
      %v1979 = vpop.permute.xlu0 %1978
      %1980 = vset.pattern.permute.xlu0 0
      %1981 = vperm.xlu0 %1980, %v1926
      %v1982 = vpop.permute.xlu0 %1981
      %1983 = vset.pattern.permute.xlu0 0
      %1984 = vperm.xlu0 %1983, %v1927
      %v1985 = vpop.permute.xlu0 %1984
      %1986 = vset.pattern.permute.xlu0 0
      %1987 = vperm.xlu0 %1986, %v1928
      %v1988 = vpop.permute.xlu0 %1987
      %1989 = vset.pattern.permute.xlu0 0
      %1990 = vperm.xlu0 %1989, %v1929
      %v1991 = vpop.permute.xlu0 %1990
      %1992 = vset.pattern.permute.xlu0 0
      %1993 = vperm.xlu0 %1992, %v1930
      %v1994 = vpop.permute.xlu0 %1993
      %1995 = vset.pattern.permute.xlu0 0
      %1996 = vperm.xlu0 %1995, %v1931
      %v1997 = vpop.permute.xlu0 %1996
      %1998 = vset.pattern.permute.xlu0 0
      %1999 = vperm.xlu0 %1998, %v1932
      %v2000 = vpop.permute.xlu0 %1999
      %2001 = vset.pattern.permute.xlu0 0
      %2002 = vperm.xlu0 %2001, %v1933
      %v2003 = vpop.permute.xlu0 %2002
      %2004 = vset.pattern.permute.xlu0 0
      %2005 = vperm.xlu0 %2004, %v1934
      %v2006 = vpop.permute.xlu0 %2005
      %2007 = vset.pattern.permute.xlu0 0
      %2008 = vperm.xlu0 %2007, %v1935
      %v2009 = vpop.permute.xlu0 %2008
      %2010 = vset.pattern.permute.xlu0 0
      %2011 = vperm.xlu0 %2010, %v1936
      %v2012 = vpop.permute.xlu0 %2011
      %2013 = vset.pattern.permute.xlu0 0
      %2014 = vperm.xlu0 %2013, %v1937
      %v2015 = vpop.permute.xlu0 %2014
      %2016 = vset.pattern.permute.xlu0 0
      %2017 = vperm.xlu0 %2016, %v1938
      %v2018 = vpop.permute.xlu0 %2017
      %2019 = vset.pattern.permute.xlu0 0
      %2020 = vperm.xlu0 %2019, %v1939
      %v2021 = vpop.permute.xlu0 %2020
      %2022 = vset.pattern.permute.xlu0 0
      %2023 = vperm.xlu0 %2022, %v1940
      %v2024 = vpop.permute.xlu0 %2023
      %2025 = vset.pattern.permute.xlu0 0
      %2026 = vperm.xlu0 %2025, %v1941
      %v2027 = vpop.permute.xlu0 %2026
      %2028 = vset.pattern.permute.xlu0 0
      %2029 = vperm.xlu0 %2028, %v1942
      %v2030 = vpop.permute.xlu0 %2029
      %2031 = vset.pattern.permute.xlu0 0
      %2032 = vperm.xlu0 %2031, %v1943
      %v2033 = vpop.permute.xlu0 %2032
      %2034 = vset.pattern.permute.xlu0 0
      %2035 = vperm.xlu0 %2034, %v1944
      %v2036 = vpop.permute.xlu0 %2035
      %2037 = vset.pattern.permute.xlu0 0
      %2038 = vperm.xlu0 %2037, %v1945
      %v2039 = vpop.permute.xlu0 %2038
      %2040 = vset.pattern.permute.xlu0 0
      %2041 = vperm.xlu0 %2040, %v1946
      %v2042 = vpop.permute.xlu0 %2041
      %vm2043 = vcmp.eq.s32.totalorder %v1949, 1
      %vm2044 = vcmp.eq.s32.totalorder %v1952, 1
      %vm2045 = vcmp.eq.s32.totalorder %v1955, 1
      %vm2046 = vcmp.eq.s32.totalorder %v1958, 1
      %vm2047 = vcmp.eq.s32.totalorder %v1961, 1
      %vm2048 = vcmp.eq.s32.totalorder %v1964, 1
      %vm2049 = vcmp.eq.s32.totalorder %v1967, 1
      %vm2050 = vcmp.eq.s32.totalorder %v1970, 1
      %vm2051 = vcmp.eq.s32.totalorder %v1973, 1
      %vm2052 = vcmp.eq.s32.totalorder %v1976, 1
      %vm2053 = vcmp.eq.s32.totalorder %v1979, 1
      %vm2054 = vcmp.eq.s32.totalorder %v1982, 1
      %vm2055 = vcmp.eq.s32.totalorder %v1985, 1
      %vm2056 = vcmp.eq.s32.totalorder %v1988, 1
      %vm2057 = vcmp.eq.s32.totalorder %v1991, 1
      %vm2058 = vcmp.eq.s32.totalorder %v1994, 1
      %vm2059 = vcmp.eq.s32.totalorder %v1997, 1
      %vm2060 = vcmp.eq.s32.totalorder %v2000, 1
      %vm2061 = vcmp.eq.s32.totalorder %v2003, 1
      %vm2062 = vcmp.eq.s32.totalorder %v2006, 1
      %vm2063 = vcmp.eq.s32.totalorder %v2009, 1
      %vm2064 = vcmp.eq.s32.totalorder %v2012, 1
      %vm2065 = vcmp.eq.s32.totalorder %v2015, 1
      %vm2066 = vcmp.eq.s32.totalorder %v2018, 1
      %vm2067 = vcmp.eq.s32.totalorder %v2021, 1
      %vm2068 = vcmp.eq.s32.totalorder %v2024, 1
      %vm2069 = vcmp.eq.s32.totalorder %v2027, 1
      %vm2070 = vcmp.eq.s32.totalorder %v2030, 1
      %vm2071 = vcmp.eq.s32.totalorder %v2033, 1
      %vm2072 = vcmp.eq.s32.totalorder %v2036, 1
      %vm2073 = vcmp.eq.s32.totalorder %v2039, 1
      %vm2074 = vcmp.eq.s32.totalorder %v2042, 1
      %v2075 = vsel %vm2043, %v1883, 0.0
      %v2076 = vsel %vm2044, %v1884, 0.0
      %v2077 = vsel %vm2045, %v1885, 0.0
      %v2078 = vsel %vm2046, %v1886, 0.0
      %v2079 = vsel %vm2047, %v1887, 0.0
      %v2080 = vsel %vm2048, %v1888, 0.0
      %v2081 = vsel %vm2049, %v1889, 0.0
      %v2082 = vsel %vm2050, %v1890, 0.0
      %v2083 = vsel %vm2051, %v1891, 0.0
      %v2084 = vsel %vm2052, %v1892, 0.0
      %v2085 = vsel %vm2053, %v1893, 0.0
      %v2086 = vsel %vm2054, %v1894, 0.0
      %v2087 = vsel %vm2055, %v1895, 0.0
      %v2088 = vsel %vm2056, %v1896, 0.0
      %v2089 = vsel %vm2057, %v1897, 0.0
      %v2090 = vsel %vm2058, %v1898, 0.0
      %v2091 = vsel %vm2059, %v1899, 0.0
      %v2092 = vsel %vm2060, %v1900, 0.0
      %v2093 = vsel %vm2061, %v1901, 0.0
      %v2094 = vsel %vm2062, %v1902, 0.0
      %v2095 = vsel %vm2063, %v1903, 0.0
      %v2096 = vsel %vm2064, %v1904, 0.0
      %v2097 = vsel %vm2065, %v1905, 0.0
      %v2098 = vsel %vm2066, %v1906, 0.0
      %v2099 = vsel %vm2067, %v1907, 0.0
      %v2100 = vsel %vm2068, %v1908, 0.0
      %v2101 = vsel %vm2069, %v1909, 0.0
      %v2102 = vsel %vm2070, %v1910, 0.0
      %v2103 = vsel %vm2071, %v1911, 0.0
      %v2104 = vsel %vm2072, %v1912, 0.0
      %v2105 = vsel %vm2073, %v1913, 0.0
      %v2106 = vsel %vm2074, %v1914, 0.0
      %v2107 = vadd.f32 %v1847, %v2075
      %v2108 = vadd.f32 %v1848, %v2076
      %v2109 = vadd.f32 %v1849, %v2077
      %v2110 = vadd.f32 %v1850, %v2078
      %v2111 = vadd.f32 %v1851, %v2079
      %v2112 = vadd.f32 %v1852, %v2080
      %v2113 = vadd.f32 %v1853, %v2081
      %v2114 = vadd.f32 %v1854, %v2082
      %v2115 = vadd.f32 %v1855, %v2083
      %v2116 = vadd.f32 %v1856, %v2084
      %v2117 = vadd.f32 %v1857, %v2085
      %v2118 = vadd.f32 %v1858, %v2086
      %v2119 = vadd.f32 %v1859, %v2087
      %v2120 = vadd.f32 %v1860, %v2088
      %v2121 = vadd.f32 %v1861, %v2089
      %v2122 = vadd.f32 %v1862, %v2090
      %v2123 = vadd.f32 %v1863, %v2091
      %v2124 = vadd.f32 %v1864, %v2092
      %v2125 = vadd.f32 %v1865, %v2093
      %v2126 = vadd.f32 %v1866, %v2094
      %v2127 = vadd.f32 %v1867, %v2095
      %v2128 = vadd.f32 %v1868, %v2096
      %v2129 = vadd.f32 %v1869, %v2097
      %v2130 = vadd.f32 %v1870, %v2098
      %v2131 = vadd.f32 %v1871, %v2099
      %v2132 = vadd.f32 %v1872, %v2100
      %v2133 = vadd.f32 %v1873, %v2101
      %v2134 = vadd.f32 %v1874, %v2102
      %v2135 = vadd.f32 %v1875, %v2103
      %v2136 = vadd.f32 %v1876, %v2104
      %v2137 = vadd.f32 %v1877, %v2105
      %v2138 = vadd.f32 %v1878, %v2106
      %v2139 = vlaneseq
      %v2140 = vshrl.u32 %v2139, 7
      %v2141 = vsub.s32 4, %v2140
      %v2142 = vrot.slane %v894, %v2141
      %v2143 = vmul.f32 %v544, %v2142
      %v2144 = vmul.f32 %v549, %v2142
      %v2145 = vmul.f32 %v554, %v2142
      %v2146 = vmul.f32 %v559, %v2142
      %v2147 = vmul.f32 %v564, %v2142
      %v2148 = vmul.f32 %v569, %v2142
      %v2149 = vmul.f32 %v574, %v2142
      %v2150 = vmul.f32 %v579, %v2142
      %v2151 = vmul.f32 %v584, %v2142
      %v2152 = vmul.f32 %v589, %v2142
      %v2153 = vmul.f32 %v594, %v2142
      %v2154 = vmul.f32 %v599, %v2142
      %v2155 = vmul.f32 %v604, %v2142
      %v2156 = vmul.f32 %v609, %v2142
      %v2157 = vmul.f32 %v614, %v2142
      %v2158 = vmul.f32 %v619, %v2142
      %v2159 = vmul.f32 %v624, %v2142
      %v2160 = vmul.f32 %v629, %v2142
      %v2161 = vmul.f32 %v634, %v2142
      %v2162 = vmul.f32 %v639, %v2142
      %v2163 = vmul.f32 %v644, %v2142
      %v2164 = vmul.f32 %v649, %v2142
      %v2165 = vmul.f32 %v654, %v2142
      %v2166 = vmul.f32 %v659, %v2142
      %v2167 = vmul.f32 %v664, %v2142
      %v2168 = vmul.f32 %v669, %v2142
      %v2169 = vmul.f32 %v674, %v2142
      %v2170 = vmul.f32 %v679, %v2142
      %v2171 = vmul.f32 %v684, %v2142
      %v2172 = vmul.f32 %v689, %v2142
      %v2173 = vmul.f32 %v694, %v2142
      %v2174 = vmul.f32 %v699, %v2142
      %v2175 = vadd.f32 %v2107, %v2143
      %v2176 = vadd.f32 %v2108, %v2144
      %v2177 = vadd.f32 %v2109, %v2145
      %v2178 = vadd.f32 %v2110, %v2146
      %v2179 = vadd.f32 %v2111, %v2147
      %v2180 = vadd.f32 %v2112, %v2148
      %v2181 = vadd.f32 %v2113, %v2149
      %v2182 = vadd.f32 %v2114, %v2150
      %v2183 = vadd.f32 %v2115, %v2151
      %v2184 = vadd.f32 %v2116, %v2152
      %v2185 = vadd.f32 %v2117, %v2153
      %v2186 = vadd.f32 %v2118, %v2154
      %v2187 = vadd.f32 %v2119, %v2155
      %v2188 = vadd.f32 %v2120, %v2156
      %v2189 = vadd.f32 %v2121, %v2157
      %v2190 = vadd.f32 %v2122, %v2158
      %v2191 = vadd.f32 %v2123, %v2159
      %v2192 = vadd.f32 %v2124, %v2160
      %v2193 = vadd.f32 %v2125, %v2161
      %v2194 = vadd.f32 %v2126, %v2162
      %v2195 = vadd.f32 %v2127, %v2163
      %v2196 = vadd.f32 %v2128, %v2164
      %v2197 = vadd.f32 %v2129, %v2165
      %v2198 = vadd.f32 %v2130, %v2166
      %v2199 = vadd.f32 %v2131, %v2167
      %v2200 = vadd.f32 %v2132, %v2168
      %v2201 = vadd.f32 %v2133, %v2169
      %v2202 = vadd.f32 %v2134, %v2170
      %v2203 = vadd.f32 %v2135, %v2171
      %v2204 = vadd.f32 %v2136, %v2172
      %v2205 = vadd.f32 %v2137, %v2173
      %v2206 = vadd.f32 %v2138, %v2174
      %v2207 = vlaneseq
      %v2208 = vshrl.u32 %v2207, 7
      %v2209 = vsub.s32 5, %v2208
      %v2210 = vrot.slane %v894, %v2209
      %v2211 = vmul.f32 %v1585, %v2210
      %v2212 = vmul.f32 %v1584, %v2210
      %v2213 = vmul.f32 %v1583, %v2210
      %v2214 = vmul.f32 %v1582, %v2210
      %v2215 = vmul.f32 %v1581, %v2210
      %v2216 = vmul.f32 %v1580, %v2210
      %v2217 = vmul.f32 %v1579, %v2210
      %v2218 = vmul.f32 %v1578, %v2210
      %v2219 = vmul.f32 %v1577, %v2210
      %v2220 = vmul.f32 %v1576, %v2210
      %v2221 = vmul.f32 %v1575, %v2210
      %v2222 = vmul.f32 %v1574, %v2210
      %v2223 = vmul.f32 %v1573, %v2210
      %v2224 = vmul.f32 %v1572, %v2210
      %v2225 = vmul.f32 %v1571, %v2210
      %v2226 = vmul.f32 %v1570, %v2210
      %v2227 = vmul.f32 %v1569, %v2210
      %v2228 = vmul.f32 %v1568, %v2210
      %v2229 = vmul.f32 %v1567, %v2210
      %v2230 = vmul.f32 %v1566, %v2210
      %v2231 = vmul.f32 %v1565, %v2210
      %v2232 = vmul.f32 %v1564, %v2210
      %v2233 = vmul.f32 %v1563, %v2210
      %v2234 = vmul.f32 %v1562, %v2210
      %v2235 = vmul.f32 %v1561, %v2210
      %v2236 = vmul.f32 %v1560, %v2210
      %v2237 = vmul.f32 %v1559, %v2210
      %v2238 = vmul.f32 %v1558, %v2210
      %v2239 = vmul.f32 %v1557, %v2210
      %v2240 = vmul.f32 %v1556, %v2210
      %v2241 = vmul.f32 %v1555, %v2210
      %v2242 = vmul.f32 %v1586, %v2210
      %v2243 = vsel %vm862, 1, 0
      %v2244 = vsel %vm863, 1, 0
      %v2245 = vsel %vm864, 1, 0
      %v2246 = vsel %vm865, 1, 0
      %v2247 = vsel %vm866, 1, 0
      %v2248 = vsel %vm867, 1, 0
      %v2249 = vsel %vm868, 1, 0
      %v2250 = vsel %vm869, 1, 0
      %v2251 = vsel %vm870, 1, 0
      %v2252 = vsel %vm871, 1, 0
      %v2253 = vsel %vm872, 1, 0
      %v2254 = vsel %vm873, 1, 0
      %v2255 = vsel %vm874, 1, 0
      %v2256 = vsel %vm875, 1, 0
      %v2257 = vsel %vm876, 1, 0
      %v2258 = vsel %vm877, 1, 0
      %v2259 = vsel %vm878, 1, 0
      %v2260 = vsel %vm879, 1, 0
      %v2261 = vsel %vm880, 1, 0
      %v2262 = vsel %vm881, 1, 0
      %v2263 = vsel %vm882, 1, 0
      %v2264 = vsel %vm883, 1, 0
      %v2265 = vsel %vm884, 1, 0
      %v2266 = vsel %vm885, 1, 0
      %v2267 = vsel %vm886, 1, 0
      %v2268 = vsel %vm887, 1, 0
      %v2269 = vsel %vm888, 1, 0
      %v2270 = vsel %vm889, 1, 0
      %v2271 = vsel %vm890, 1, 0
      %v2272 = vsel %vm891, 1, 0
      %v2273 = vsel %vm892, 1, 0
      %v2274 = vsel %vm893, 1, 0
      %2275 = vset.pattern.permute.xlu0 0
      %2276 = vperm.xlu0 %2275, %v2243
      %v2277 = vpop.permute.xlu0 %2276
      %2278 = vset.pattern.permute.xlu0 0
      %2279 = vperm.xlu0 %2278, %v2244
      %v2280 = vpop.permute.xlu0 %2279
      %2281 = vset.pattern.permute.xlu0 0
      %2282 = vperm.xlu0 %2281, %v2245
      %v2283 = vpop.permute.xlu0 %2282
      %2284 = vset.pattern.permute.xlu0 0
      %2285 = vperm.xlu0 %2284, %v2246
      %v2286 = vpop.permute.xlu0 %2285
      %2287 = vset.pattern.permute.xlu0 0
      %2288 = vperm.xlu0 %2287, %v2247
      %v2289 = vpop.permute.xlu0 %2288
      %2290 = vset.pattern.permute.xlu0 0
      %2291 = vperm.xlu0 %2290, %v2248
      %v2292 = vpop.permute.xlu0 %2291
      %2293 = vset.pattern.permute.xlu0 0
      %2294 = vperm.xlu0 %2293, %v2249
      %v2295 = vpop.permute.xlu0 %2294
      %2296 = vset.pattern.permute.xlu0 0
      %2297 = vperm.xlu0 %2296, %v2250
      %v2298 = vpop.permute.xlu0 %2297
      %2299 = vset.pattern.permute.xlu0 0
      %2300 = vperm.xlu0 %2299, %v2251
      %v2301 = vpop.permute.xlu0 %2300
      %2302 = vset.pattern.permute.xlu0 0
      %2303 = vperm.xlu0 %2302, %v2252
      %v2304 = vpop.permute.xlu0 %2303
      %2305 = vset.pattern.permute.xlu0 0
      %2306 = vperm.xlu0 %2305, %v2253
      %v2307 = vpop.permute.xlu0 %2306
      %2308 = vset.pattern.permute.xlu0 0
      %2309 = vperm.xlu0 %2308, %v2254
      %v2310 = vpop.permute.xlu0 %2309
      %2311 = vset.pattern.permute.xlu0 0
      %2312 = vperm.xlu0 %2311, %v2255
      %v2313 = vpop.permute.xlu0 %2312
      %2314 = vset.pattern.permute.xlu0 0
      %2315 = vperm.xlu0 %2314, %v2256
      %v2316 = vpop.permute.xlu0 %2315
      %2317 = vset.pattern.permute.xlu0 0
      %2318 = vperm.xlu0 %2317, %v2257
      %v2319 = vpop.permute.xlu0 %2318
      %2320 = vset.pattern.permute.xlu0 0
      %2321 = vperm.xlu0 %2320, %v2258
      %v2322 = vpop.permute.xlu0 %2321
      %2323 = vset.pattern.permute.xlu0 0
      %2324 = vperm.xlu0 %2323, %v2259
      %v2325 = vpop.permute.xlu0 %2324
      %2326 = vset.pattern.permute.xlu0 0
      %2327 = vperm.xlu0 %2326, %v2260
      %v2328 = vpop.permute.xlu0 %2327
      %2329 = vset.pattern.permute.xlu0 0
      %2330 = vperm.xlu0 %2329, %v2261
      %v2331 = vpop.permute.xlu0 %2330
      %2332 = vset.pattern.permute.xlu0 0
      %2333 = vperm.xlu0 %2332, %v2262
      %v2334 = vpop.permute.xlu0 %2333
      %2335 = vset.pattern.permute.xlu0 0
      %2336 = vperm.xlu0 %2335, %v2263
      %v2337 = vpop.permute.xlu0 %2336
      %2338 = vset.pattern.permute.xlu0 0
      %2339 = vperm.xlu0 %2338, %v2264
      %v2340 = vpop.permute.xlu0 %2339
      %2341 = vset.pattern.permute.xlu0 0
      %2342 = vperm.xlu0 %2341, %v2265
      %v2343 = vpop.permute.xlu0 %2342
      %2344 = vset.pattern.permute.xlu0 0
      %2345 = vperm.xlu0 %2344, %v2266
      %v2346 = vpop.permute.xlu0 %2345
      %2347 = vset.pattern.permute.xlu0 0
      %2348 = vperm.xlu0 %2347, %v2267
      %v2349 = vpop.permute.xlu0 %2348
      %2350 = vset.pattern.permute.xlu0 0
      %2351 = vperm.xlu0 %2350, %v2268
      %v2352 = vpop.permute.xlu0 %2351
      %2353 = vset.pattern.permute.xlu0 0
      %2354 = vperm.xlu0 %2353, %v2269
      %v2355 = vpop.permute.xlu0 %2354
      %2356 = vset.pattern.permute.xlu0 0
      %2357 = vperm.xlu0 %2356, %v2270
      %v2358 = vpop.permute.xlu0 %2357
      %2359 = vset.pattern.permute.xlu0 0
      %2360 = vperm.xlu0 %2359, %v2271
      %v2361 = vpop.permute.xlu0 %2360
      %2362 = vset.pattern.permute.xlu0 0
      %2363 = vperm.xlu0 %2362, %v2272
      %v2364 = vpop.permute.xlu0 %2363
      %2365 = vset.pattern.permute.xlu0 0
      %2366 = vperm.xlu0 %2365, %v2273
      %v2367 = vpop.permute.xlu0 %2366
      %2368 = vset.pattern.permute.xlu0 0
      %2369 = vperm.xlu0 %2368, %v2274
      %v2370 = vpop.permute.xlu0 %2369
      %vm2371 = vcmp.eq.s32.totalorder %v2277, 1
      %vm2372 = vcmp.eq.s32.totalorder %v2280, 1
      %vm2373 = vcmp.eq.s32.totalorder %v2283, 1
      %vm2374 = vcmp.eq.s32.totalorder %v2286, 1
      %vm2375 = vcmp.eq.s32.totalorder %v2289, 1
      %vm2376 = vcmp.eq.s32.totalorder %v2292, 1
      %vm2377 = vcmp.eq.s32.totalorder %v2295, 1
      %vm2378 = vcmp.eq.s32.totalorder %v2298, 1
      %vm2379 = vcmp.eq.s32.totalorder %v2301, 1
      %vm2380 = vcmp.eq.s32.totalorder %v2304, 1
      %vm2381 = vcmp.eq.s32.totalorder %v2307, 1
      %vm2382 = vcmp.eq.s32.totalorder %v2310, 1
      %vm2383 = vcmp.eq.s32.totalorder %v2313, 1
      %vm2384 = vcmp.eq.s32.totalorder %v2316, 1
      %vm2385 = vcmp.eq.s32.totalorder %v2319, 1
      %vm2386 = vcmp.eq.s32.totalorder %v2322, 1
      %vm2387 = vcmp.eq.s32.totalorder %v2325, 1
      %vm2388 = vcmp.eq.s32.totalorder %v2328, 1
      %vm2389 = vcmp.eq.s32.totalorder %v2331, 1
      %vm2390 = vcmp.eq.s32.totalorder %v2334, 1
      %vm2391 = vcmp.eq.s32.totalorder %v2337, 1
      %vm2392 = vcmp.eq.s32.totalorder %v2340, 1
      %vm2393 = vcmp.eq.s32.totalorder %v2343, 1
      %vm2394 = vcmp.eq.s32.totalorder %v2346, 1
      %vm2395 = vcmp.eq.s32.totalorder %v2349, 1
      %vm2396 = vcmp.eq.s32.totalorder %v2352, 1
      %vm2397 = vcmp.eq.s32.totalorder %v2355, 1
      %vm2398 = vcmp.eq.s32.totalorder %v2358, 1
      %vm2399 = vcmp.eq.s32.totalorder %v2361, 1
      %vm2400 = vcmp.eq.s32.totalorder %v2364, 1
      %vm2401 = vcmp.eq.s32.totalorder %v2367, 1
      %vm2402 = vcmp.eq.s32.totalorder %v2370, 1
      %v2403 = vsel %vm2371, %v2211, 0.0
      %v2404 = vsel %vm2372, %v2212, 0.0
      %v2405 = vsel %vm2373, %v2213, 0.0
      %v2406 = vsel %vm2374, %v2214, 0.0
      %v2407 = vsel %vm2375, %v2215, 0.0
      %v2408 = vsel %vm2376, %v2216, 0.0
      %v2409 = vsel %vm2377, %v2217, 0.0
      %v2410 = vsel %vm2378, %v2218, 0.0
      %v2411 = vsel %vm2379, %v2219, 0.0
      %v2412 = vsel %vm2380, %v2220, 0.0
      %v2413 = vsel %vm2381, %v2221, 0.0
      %v2414 = vsel %vm2382, %v2222, 0.0
      %v2415 = vsel %vm2383, %v2223, 0.0
      %v2416 = vsel %vm2384, %v2224, 0.0
      %v2417 = vsel %vm2385, %v2225, 0.0
      %v2418 = vsel %vm2386, %v2226, 0.0
      %v2419 = vsel %vm2387, %v2227, 0.0
      %v2420 = vsel %vm2388, %v2228, 0.0
      %v2421 = vsel %vm2389, %v2229, 0.0
      %v2422 = vsel %vm2390, %v2230, 0.0
      %v2423 = vsel %vm2391, %v2231, 0.0
      %v2424 = vsel %vm2392, %v2232, 0.0
      %v2425 = vsel %vm2393, %v2233, 0.0
      %v2426 = vsel %vm2394, %v2234, 0.0
      %v2427 = vsel %vm2395, %v2235, 0.0
      %v2428 = vsel %vm2396, %v2236, 0.0
      %v2429 = vsel %vm2397, %v2237, 0.0
      %v2430 = vsel %vm2398, %v2238, 0.0
      %v2431 = vsel %vm2399, %v2239, 0.0
      %v2432 = vsel %vm2400, %v2240, 0.0
      %v2433 = vsel %vm2401, %v2241, 0.0
      %v2434 = vsel %vm2402, %v2242, 0.0
      %v2435 = vadd.f32 %v2175, %v2403
      %v2436 = vadd.f32 %v2176, %v2404
      %v2437 = vadd.f32 %v2177, %v2405
      %v2438 = vadd.f32 %v2178, %v2406
      %v2439 = vadd.f32 %v2179, %v2407
      %v2440 = vadd.f32 %v2180, %v2408
      %v2441 = vadd.f32 %v2181, %v2409
      %v2442 = vadd.f32 %v2182, %v2410
      %v2443 = vadd.f32 %v2183, %v2411
      %v2444 = vadd.f32 %v2184, %v2412
      %v2445 = vadd.f32 %v2185, %v2413
      %v2446 = vadd.f32 %v2186, %v2414
      %v2447 = vadd.f32 %v2187, %v2415
      %v2448 = vadd.f32 %v2188, %v2416
      %v2449 = vadd.f32 %v2189, %v2417
      %v2450 = vadd.f32 %v2190, %v2418
      %v2451 = vadd.f32 %v2191, %v2419
      %v2452 = vadd.f32 %v2192, %v2420
      %v2453 = vadd.f32 %v2193, %v2421
      %v2454 = vadd.f32 %v2194, %v2422
      %v2455 = vadd.f32 %v2195, %v2423
      %v2456 = vadd.f32 %v2196, %v2424
      %v2457 = vadd.f32 %v2197, %v2425
      %v2458 = vadd.f32 %v2198, %v2426
      %v2459 = vadd.f32 %v2199, %v2427
      %v2460 = vadd.f32 %v2200, %v2428
      %v2461 = vadd.f32 %v2201, %v2429
      %v2462 = vadd.f32 %v2202, %v2430
      %v2463 = vadd.f32 %v2203, %v2431
      %v2464 = vadd.f32 %v2204, %v2432
      %v2465 = vadd.f32 %v2205, %v2433
      %v2466 = vadd.f32 %v2206, %v2434
      %v2467 = vlaneseq
      %v2468 = vshrl.u32 %v2467, 7
      %v2469 = vsub.s32 6, %v2468
      %v2470 = vrot.slane %v894, %v2469
      %v2471 = vmul.f32 %v967, %v2470
      %v2472 = vmul.f32 %v966, %v2470
      %v2473 = vmul.f32 %v965, %v2470
      %v2474 = vmul.f32 %v964, %v2470
      %v2475 = vmul.f32 %v963, %v2470
      %v2476 = vmul.f32 %v962, %v2470
      %v2477 = vmul.f32 %v961, %v2470
      %v2478 = vmul.f32 %v960, %v2470
      %v2479 = vmul.f32 %v959, %v2470
      %v2480 = vmul.f32 %v958, %v2470
      %v2481 = vmul.f32 %v957, %v2470
      %v2482 = vmul.f32 %v956, %v2470
      %v2483 = vmul.f32 %v955, %v2470
      %v2484 = vmul.f32 %v954, %v2470
      %v2485 = vmul.f32 %v953, %v2470
      %v2486 = vmul.f32 %v952, %v2470
      %v2487 = vmul.f32 %v951, %v2470
      %v2488 = vmul.f32 %v950, %v2470
      %v2489 = vmul.f32 %v949, %v2470
      %v2490 = vmul.f32 %v948, %v2470
      %v2491 = vmul.f32 %v947, %v2470
      %v2492 = vmul.f32 %v946, %v2470
      %v2493 = vmul.f32 %v945, %v2470
      %v2494 = vmul.f32 %v944, %v2470
      %v2495 = vmul.f32 %v943, %v2470
      %v2496 = vmul.f32 %v942, %v2470
      %v2497 = vmul.f32 %v941, %v2470
      %v2498 = vmul.f32 %v940, %v2470
      %v2499 = vmul.f32 %v939, %v2470
      %v2500 = vmul.f32 %v938, %v2470
      %v2501 = vmul.f32 %v969, %v2470
      %v2502 = vmul.f32 %v968, %v2470
      %vm2503 = vmand %vm798, %vm830
      %vm2504 = vmand %vm799, %vm831
      %vm2505 = vmand %vm800, %vm832
      %vm2506 = vmand %vm801, %vm833
      %vm2507 = vmand %vm802, %vm834
      %vm2508 = vmand %vm803, %vm835
      %vm2509 = vmand %vm804, %vm836
      %vm2510 = vmand %vm805, %vm837
      %vm2511 = vmand %vm806, %vm838
      %vm2512 = vmand %vm807, %vm839
      %vm2513 = vmand %vm808, %vm840
      %vm2514 = vmand %vm809, %vm841
      %vm2515 = vmand %vm810, %vm842
      %vm2516 = vmand %vm811, %vm843
      %vm2517 = vmand %vm812, %vm844
      %vm2518 = vmand %vm813, %vm845
      %vm2519 = vmand %vm814, %vm846
      %vm2520 = vmand %vm815, %vm847
      %vm2521 = vmand %vm816, %vm848
      %vm2522 = vmand %vm817, %vm849
      %vm2523 = vmand %vm818, %vm850
      %vm2524 = vmand %vm819, %vm851
      %vm2525 = vmand %vm820, %vm852
      %vm2526 = vmand %vm821, %vm853
      %vm2527 = vmand %vm822, %vm854
      %vm2528 = vmand %vm823, %vm855
      %vm2529 = vmand %vm824, %vm856
      %vm2530 = vmand %vm825, %vm857
      %vm2531 = vmand %vm826, %vm858
      %vm2532 = vmand %vm827, %vm859
      %vm2533 = vmand %vm828, %vm860
      %vm2534 = vmand %vm829, %vm861
      %v2535 = vsel %vm2503, 1, 0
      %v2536 = vsel %vm2504, 1, 0
      %v2537 = vsel %vm2505, 1, 0
      %v2538 = vsel %vm2506, 1, 0
      %v2539 = vsel %vm2507, 1, 0
      %v2540 = vsel %vm2508, 1, 0
      %v2541 = vsel %vm2509, 1, 0
      %v2542 = vsel %vm2510, 1, 0
      %v2543 = vsel %vm2511, 1, 0
      %v2544 = vsel %vm2512, 1, 0
      %v2545 = vsel %vm2513, 1, 0
      %v2546 = vsel %vm2514, 1, 0
      %v2547 = vsel %vm2515, 1, 0
      %v2548 = vsel %vm2516, 1, 0
      %v2549 = vsel %vm2517, 1, 0
      %v2550 = vsel %vm2518, 1, 0
      %v2551 = vsel %vm2519, 1, 0
      %v2552 = vsel %vm2520, 1, 0
      %v2553 = vsel %vm2521, 1, 0
      %v2554 = vsel %vm2522, 1, 0
      %v2555 = vsel %vm2523, 1, 0
      %v2556 = vsel %vm2524, 1, 0
      %v2557 = vsel %vm2525, 1, 0
      %v2558 = vsel %vm2526, 1, 0
      %v2559 = vsel %vm2527, 1, 0
      %v2560 = vsel %vm2528, 1, 0
      %v2561 = vsel %vm2529, 1, 0
      %v2562 = vsel %vm2530, 1, 0
      %v2563 = vsel %vm2531, 1, 0
      %v2564 = vsel %vm2532, 1, 0
      %v2565 = vsel %vm2533, 1, 0
      %v2566 = vsel %vm2534, 1, 0
      %2567 = vset.pattern.permute.xlu0 0
      %2568 = vperm.xlu0 %2567, %v2535
      %v2569 = vpop.permute.xlu0 %2568
      %2570 = vset.pattern.permute.xlu0 0
      %2571 = vperm.xlu0 %2570, %v2536
      %v2572 = vpop.permute.xlu0 %2571
      %2573 = vset.pattern.permute.xlu0 0
      %2574 = vperm.xlu0 %2573, %v2537
      %v2575 = vpop.permute.xlu0 %2574
      %2576 = vset.pattern.permute.xlu0 0
      %2577 = vperm.xlu0 %2576, %v2538
      %v2578 = vpop.permute.xlu0 %2577
      %2579 = vset.pattern.permute.xlu0 0
      %2580 = vperm.xlu0 %2579, %v2539
      %v2581 = vpop.permute.xlu0 %2580
      %2582 = vset.pattern.permute.xlu0 0
      %2583 = vperm.xlu0 %2582, %v2540
      %v2584 = vpop.permute.xlu0 %2583
      %2585 = vset.pattern.permute.xlu0 0
      %2586 = vperm.xlu0 %2585, %v2541
      %v2587 = vpop.permute.xlu0 %2586
      %2588 = vset.pattern.permute.xlu0 0
      %2589 = vperm.xlu0 %2588, %v2542
      %v2590 = vpop.permute.xlu0 %2589
      %2591 = vset.pattern.permute.xlu0 0
      %2592 = vperm.xlu0 %2591, %v2543
      %v2593 = vpop.permute.xlu0 %2592
      %2594 = vset.pattern.permute.xlu0 0
      %2595 = vperm.xlu0 %2594, %v2544
      %v2596 = vpop.permute.xlu0 %2595
      %2597 = vset.pattern.permute.xlu0 0
      %2598 = vperm.xlu0 %2597, %v2545
      %v2599 = vpop.permute.xlu0 %2598
      %2600 = vset.pattern.permute.xlu0 0
      %2601 = vperm.xlu0 %2600, %v2546
      %v2602 = vpop.permute.xlu0 %2601
      %2603 = vset.pattern.permute.xlu0 0
      %2604 = vperm.xlu0 %2603, %v2547
      %v2605 = vpop.permute.xlu0 %2604
      %2606 = vset.pattern.permute.xlu0 0
      %2607 = vperm.xlu0 %2606, %v2548
      %v2608 = vpop.permute.xlu0 %2607
      %2609 = vset.pattern.permute.xlu0 0
      %2610 = vperm.xlu0 %2609, %v2549
      %v2611 = vpop.permute.xlu0 %2610
      %2612 = vset.pattern.permute.xlu0 0
      %2613 = vperm.xlu0 %2612, %v2550
      %v2614 = vpop.permute.xlu0 %2613
      %2615 = vset.pattern.permute.xlu0 0
      %2616 = vperm.xlu0 %2615, %v2551
      %v2617 = vpop.permute.xlu0 %2616
      %2618 = vset.pattern.permute.xlu0 0
      %2619 = vperm.xlu0 %2618, %v2552
      %v2620 = vpop.permute.xlu0 %2619
      %2621 = vset.pattern.permute.xlu0 0
      %2622 = vperm.xlu0 %2621, %v2553
      %v2623 = vpop.permute.xlu0 %2622
      %2624 = vset.pattern.permute.xlu0 0
      %2625 = vperm.xlu0 %2624, %v2554
      %v2626 = vpop.permute.xlu0 %2625
      %2627 = vset.pattern.permute.xlu0 0
      %2628 = vperm.xlu0 %2627, %v2555
      %v2629 = vpop.permute.xlu0 %2628
      %2630 = vset.pattern.permute.xlu0 0
      %2631 = vperm.xlu0 %2630, %v2556
      %v2632 = vpop.permute.xlu0 %2631
      %2633 = vset.pattern.permute.xlu0 0
      %2634 = vperm.xlu0 %2633, %v2557
      %v2635 = vpop.permute.xlu0 %2634
      %2636 = vset.pattern.permute.xlu0 0
      %2637 = vperm.xlu0 %2636, %v2558
      %v2638 = vpop.permute.xlu0 %2637
      %2639 = vset.pattern.permute.xlu0 0
      %2640 = vperm.xlu0 %2639, %v2559
      %v2641 = vpop.permute.xlu0 %2640
      %2642 = vset.pattern.permute.xlu0 0
      %2643 = vperm.xlu0 %2642, %v2560
      %v2644 = vpop.permute.xlu0 %2643
      %2645 = vset.pattern.permute.xlu0 0
      %2646 = vperm.xlu0 %2645, %v2561
      %v2647 = vpop.permute.xlu0 %2646
      %2648 = vset.pattern.permute.xlu0 0
      %2649 = vperm.xlu0 %2648, %v2562
      %v2650 = vpop.permute.xlu0 %2649
      %2651 = vset.pattern.permute.xlu0 0
      %2652 = vperm.xlu0 %2651, %v2563
      %v2653 = vpop.permute.xlu0 %2652
      %2654 = vset.pattern.permute.xlu0 0
      %2655 = vperm.xlu0 %2654, %v2564
      %v2656 = vpop.permute.xlu0 %2655
      %2657 = vset.pattern.permute.xlu0 0
      %2658 = vperm.xlu0 %2657, %v2565
      %v2659 = vpop.permute.xlu0 %2658
      %2660 = vset.pattern.permute.xlu0 0
      %2661 = vperm.xlu0 %2660, %v2566
      %v2662 = vpop.permute.xlu0 %2661
      %vm2663 = vcmp.eq.s32.totalorder %v2569, 1
      %vm2664 = vcmp.eq.s32.totalorder %v2572, 1
      %vm2665 = vcmp.eq.s32.totalorder %v2575, 1
      %vm2666 = vcmp.eq.s32.totalorder %v2578, 1
      %vm2667 = vcmp.eq.s32.totalorder %v2581, 1
      %vm2668 = vcmp.eq.s32.totalorder %v2584, 1
      %vm2669 = vcmp.eq.s32.totalorder %v2587, 1
      %vm2670 = vcmp.eq.s32.totalorder %v2590, 1
      %vm2671 = vcmp.eq.s32.totalorder %v2593, 1
      %vm2672 = vcmp.eq.s32.totalorder %v2596, 1
      %vm2673 = vcmp.eq.s32.totalorder %v2599, 1
      %vm2674 = vcmp.eq.s32.totalorder %v2602, 1
      %vm2675 = vcmp.eq.s32.totalorder %v2605, 1
      %vm2676 = vcmp.eq.s32.totalorder %v2608, 1
      %vm2677 = vcmp.eq.s32.totalorder %v2611, 1
      %vm2678 = vcmp.eq.s32.totalorder %v2614, 1
      %vm2679 = vcmp.eq.s32.totalorder %v2617, 1
      %vm2680 = vcmp.eq.s32.totalorder %v2620, 1
      %vm2681 = vcmp.eq.s32.totalorder %v2623, 1
      %vm2682 = vcmp.eq.s32.totalorder %v2626, 1
      %vm2683 = vcmp.eq.s32.totalorder %v2629, 1
      %vm2684 = vcmp.eq.s32.totalorder %v2632, 1
      %vm2685 = vcmp.eq.s32.totalorder %v2635, 1
      %vm2686 = vcmp.eq.s32.totalorder %v2638, 1
      %vm2687 = vcmp.eq.s32.totalorder %v2641, 1
      %vm2688 = vcmp.eq.s32.totalorder %v2644, 1
      %vm2689 = vcmp.eq.s32.totalorder %v2647, 1
      %vm2690 = vcmp.eq.s32.totalorder %v2650, 1
      %vm2691 = vcmp.eq.s32.totalorder %v2653, 1
      %vm2692 = vcmp.eq.s32.totalorder %v2656, 1
      %vm2693 = vcmp.eq.s32.totalorder %v2659, 1
      %vm2694 = vcmp.eq.s32.totalorder %v2662, 1
      %v2695 = vsel %vm2663, %v2471, 0.0
      %v2696 = vsel %vm2664, %v2472, 0.0
      %v2697 = vsel %vm2665, %v2473, 0.0
      %v2698 = vsel %vm2666, %v2474, 0.0
      %v2699 = vsel %vm2667, %v2475, 0.0
      %v2700 = vsel %vm2668, %v2476, 0.0
      %v2701 = vsel %vm2669, %v2477, 0.0
      %v2702 = vsel %vm2670, %v2478, 0.0
      %v2703 = vsel %vm2671, %v2479, 0.0
      %v2704 = vsel %vm2672, %v2480, 0.0
      %v2705 = vsel %vm2673, %v2481, 0.0
      %v2706 = vsel %vm2674, %v2482, 0.0
      %v2707 = vsel %vm2675, %v2483, 0.0
      %v2708 = vsel %vm2676, %v2484, 0.0
      %v2709 = vsel %vm2677, %v2485, 0.0
      %v2710 = vsel %vm2678, %v2486, 0.0
      %v2711 = vsel %vm2679, %v2487, 0.0
      %v2712 = vsel %vm2680, %v2488, 0.0
      %v2713 = vsel %vm2681, %v2489, 0.0
      %v2714 = vsel %vm2682, %v2490, 0.0
      %v2715 = vsel %vm2683, %v2491, 0.0
      %v2716 = vsel %vm2684, %v2492, 0.0
      %v2717 = vsel %vm2685, %v2493, 0.0
      %v2718 = vsel %vm2686, %v2494, 0.0
      %v2719 = vsel %vm2687, %v2495, 0.0
      %v2720 = vsel %vm2688, %v2496, 0.0
      %v2721 = vsel %vm2689, %v2497, 0.0
      %v2722 = vsel %vm2690, %v2498, 0.0
      %v2723 = vsel %vm2691, %v2499, 0.0
      %v2724 = vsel %vm2692, %v2500, 0.0
      %v2725 = vsel %vm2693, %v2501, 0.0
      %v2726 = vsel %vm2694, %v2502, 0.0
      %v2727 = vadd.f32 %v2435, %v2695
      %v2728 = vadd.f32 %v2436, %v2696
      %v2729 = vadd.f32 %v2437, %v2697
      %v2730 = vadd.f32 %v2438, %v2698
      %v2731 = vadd.f32 %v2439, %v2699
      %v2732 = vadd.f32 %v2440, %v2700
      %v2733 = vadd.f32 %v2441, %v2701
      %v2734 = vadd.f32 %v2442, %v2702
      %v2735 = vadd.f32 %v2443, %v2703
      %v2736 = vadd.f32 %v2444, %v2704
      %v2737 = vadd.f32 %v2445, %v2705
      %v2738 = vadd.f32 %v2446, %v2706
      %v2739 = vadd.f32 %v2447, %v2707
      %v2740 = vadd.f32 %v2448, %v2708
      %v2741 = vadd.f32 %v2449, %v2709
      %v2742 = vadd.f32 %v2450, %v2710
      %v2743 = vadd.f32 %v2451, %v2711
      %v2744 = vadd.f32 %v2452, %v2712
      %v2745 = vadd.f32 %v2453, %v2713
      %v2746 = vadd.f32 %v2454, %v2714
      %v2747 = vadd.f32 %v2455, %v2715
      %v2748 = vadd.f32 %v2456, %v2716
      %v2749 = vadd.f32 %v2457, %v2717
      %v2750 = vadd.f32 %v2458, %v2718
      %v2751 = vadd.f32 %v2459, %v2719
      %v2752 = vadd.f32 %v2460, %v2720
      %v2753 = vadd.f32 %v2461, %v2721
      %v2754 = vadd.f32 %v2462, %v2722
      %v2755 = vadd.f32 %v2463, %v2723
      %v2756 = vadd.f32 %v2464, %v2724
      %v2757 = vadd.f32 %v2465, %v2725
      %v2758 = vadd.f32 %v2466, %v2726
      %v2759 = vlaneseq
      %v2760 = vshrl.u32 %v2759, 7
      %v2761 = vsub.s32 7, %v2760
      %v2762 = vrot.slane %v894, %v2761
      %v2763 = vmul.f32 %v554, %v2762
      %v2764 = vmul.f32 %v559, %v2762
      %v2765 = vmul.f32 %v564, %v2762
      %v2766 = vmul.f32 %v569, %v2762
      %v2767 = vmul.f32 %v574, %v2762
      %v2768 = vmul.f32 %v579, %v2762
      %v2769 = vmul.f32 %v584, %v2762
      %v2770 = vmul.f32 %v589, %v2762
      %v2771 = vmul.f32 %v594, %v2762
      %v2772 = vmul.f32 %v599, %v2762
      %v2773 = vmul.f32 %v604, %v2762
      %v2774 = vmul.f32 %v609, %v2762
      %v2775 = vmul.f32 %v614, %v2762
      %v2776 = vmul.f32 %v619, %v2762
      %v2777 = vmul.f32 %v624, %v2762
      %v2778 = vmul.f32 %v629, %v2762
      %v2779 = vmul.f32 %v634, %v2762
      %v2780 = vmul.f32 %v639, %v2762
      %v2781 = vmul.f32 %v644, %v2762
      %v2782 = vmul.f32 %v649, %v2762
      %v2783 = vmul.f32 %v654, %v2762
      %v2784 = vmul.f32 %v659, %v2762
      %v2785 = vmul.f32 %v664, %v2762
      %v2786 = vmul.f32 %v669, %v2762
      %v2787 = vmul.f32 %v674, %v2762
      %v2788 = vmul.f32 %v679, %v2762
      %v2789 = vmul.f32 %v684, %v2762
      %v2790 = vmul.f32 %v689, %v2762
      %v2791 = vmul.f32 %v694, %v2762
      %v2792 = vmul.f32 %v699, %v2762
      %v2793 = vmul.f32 %v544, %v2762
      %v2794 = vmul.f32 %v549, %v2762
      %v2795 = vsel %vm798, 1, 0
      %v2796 = vsel %vm799, 1, 0
      %v2797 = vsel %vm800, 1, 0
      %v2798 = vsel %vm801, 1, 0
      %v2799 = vsel %vm802, 1, 0
      %v2800 = vsel %vm803, 1, 0
      %v2801 = vsel %vm804, 1, 0
      %v2802 = vsel %vm805, 1, 0
      %v2803 = vsel %vm806, 1, 0
      %v2804 = vsel %vm807, 1, 0
      %v2805 = vsel %vm808, 1, 0
      %v2806 = vsel %vm809, 1, 0
      %v2807 = vsel %vm810, 1, 0
      %v2808 = vsel %vm811, 1, 0
      %v2809 = vsel %vm812, 1, 0
      %v2810 = vsel %vm813, 1, 0
      %v2811 = vsel %vm814, 1, 0
      %v2812 = vsel %vm815, 1, 0
      %v2813 = vsel %vm816, 1, 0
      %v2814 = vsel %vm817, 1, 0
      %v2815 = vsel %vm818, 1, 0
      %v2816 = vsel %vm819, 1, 0
      %v2817 = vsel %vm820, 1, 0
      %v2818 = vsel %vm821, 1, 0
      %v2819 = vsel %vm822, 1, 0
      %v2820 = vsel %vm823, 1, 0
      %v2821 = vsel %vm824, 1, 0
      %v2822 = vsel %vm825, 1, 0
      %v2823 = vsel %vm826, 1, 0
      %v2824 = vsel %vm827, 1, 0
      %v2825 = vsel %vm828, 1, 0
      %v2826 = vsel %vm829, 1, 0
      %2827 = vset.pattern.permute.xlu0 0
      %2828 = vperm.xlu0 %2827, %v2795
      %v2829 = vpop.permute.xlu0 %2828
      %2830 = vset.pattern.permute.xlu0 0
      %2831 = vperm.xlu0 %2830, %v2796
      %v2832 = vpop.permute.xlu0 %2831
      %2833 = vset.pattern.permute.xlu0 0
      %2834 = vperm.xlu0 %2833, %v2797
      %v2835 = vpop.permute.xlu0 %2834
      %2836 = vset.pattern.permute.xlu0 0
      %2837 = vperm.xlu0 %2836, %v2798
      %v2838 = vpop.permute.xlu0 %2837
      %2839 = vset.pattern.permute.xlu0 0
      %2840 = vperm.xlu0 %2839, %v2799
      %v2841 = vpop.permute.xlu0 %2840
      %2842 = vset.pattern.permute.xlu0 0
      %2843 = vperm.xlu0 %2842, %v2800
      %v2844 = vpop.permute.xlu0 %2843
      %2845 = vset.pattern.permute.xlu0 0
      %2846 = vperm.xlu0 %2845, %v2801
      %v2847 = vpop.permute.xlu0 %2846
      %2848 = vset.pattern.permute.xlu0 0
      %2849 = vperm.xlu0 %2848, %v2802
      %v2850 = vpop.permute.xlu0 %2849
      %2851 = vset.pattern.permute.xlu0 0
      %2852 = vperm.xlu0 %2851, %v2803
      %v2853 = vpop.permute.xlu0 %2852
      %2854 = vset.pattern.permute.xlu0 0
      %2855 = vperm.xlu0 %2854, %v2804
      %v2856 = vpop.permute.xlu0 %2855
      %2857 = vset.pattern.permute.xlu0 0
      %2858 = vperm.xlu0 %2857, %v2805
      %v2859 = vpop.permute.xlu0 %2858
      %2860 = vset.pattern.permute.xlu0 0
      %2861 = vperm.xlu0 %2860, %v2806
      %v2862 = vpop.permute.xlu0 %2861
      %2863 = vset.pattern.permute.xlu0 0
      %2864 = vperm.xlu0 %2863, %v2807
      %v2865 = vpop.permute.xlu0 %2864
      %2866 = vset.pattern.permute.xlu0 0
      %2867 = vperm.xlu0 %2866, %v2808
      %v2868 = vpop.permute.xlu0 %2867
      %2869 = vset.pattern.permute.xlu0 0
      %2870 = vperm.xlu0 %2869, %v2809
      %v2871 = vpop.permute.xlu0 %2870
      %2872 = vset.pattern.permute.xlu0 0
      %2873 = vperm.xlu0 %2872, %v2810
      %v2874 = vpop.permute.xlu0 %2873
      %2875 = vset.pattern.permute.xlu0 0
      %2876 = vperm.xlu0 %2875, %v2811
      %v2877 = vpop.permute.xlu0 %2876
      %2878 = vset.pattern.permute.xlu0 0
      %2879 = vperm.xlu0 %2878, %v2812
      %v2880 = vpop.permute.xlu0 %2879
      %2881 = vset.pattern.permute.xlu0 0
      %2882 = vperm.xlu0 %2881, %v2813
      %v2883 = vpop.permute.xlu0 %2882
      %2884 = vset.pattern.permute.xlu0 0
      %2885 = vperm.xlu0 %2884, %v2814
      %v2886 = vpop.permute.xlu0 %2885
      %2887 = vset.pattern.permute.xlu0 0
      %2888 = vperm.xlu0 %2887, %v2815
      %v2889 = vpop.permute.xlu0 %2888
      %2890 = vset.pattern.permute.xlu0 0
      %2891 = vperm.xlu0 %2890, %v2816
      %v2892 = vpop.permute.xlu0 %2891
      %2893 = vset.pattern.permute.xlu0 0
      %2894 = vperm.xlu0 %2893, %v2817
      %v2895 = vpop.permute.xlu0 %2894
      %2896 = vset.pattern.permute.xlu0 0
      %2897 = vperm.xlu0 %2896, %v2818
      %v2898 = vpop.permute.xlu0 %2897
      %2899 = vset.pattern.permute.xlu0 0
      %2900 = vperm.xlu0 %2899, %v2819
      %v2901 = vpop.permute.xlu0 %2900
      %2902 = vset.pattern.permute.xlu0 0
      %2903 = vperm.xlu0 %2902, %v2820
      %v2904 = vpop.permute.xlu0 %2903
      %2905 = vset.pattern.permute.xlu0 0
      %2906 = vperm.xlu0 %2905, %v2821
      %v2907 = vpop.permute.xlu0 %2906
      %2908 = vset.pattern.permute.xlu0 0
      %2909 = vperm.xlu0 %2908, %v2822
      %v2910 = vpop.permute.xlu0 %2909
      %2911 = vset.pattern.permute.xlu0 0
      %2912 = vperm.xlu0 %2911, %v2823
      %v2913 = vpop.permute.xlu0 %2912
      %2914 = vset.pattern.permute.xlu0 0
      %2915 = vperm.xlu0 %2914, %v2824
      %v2916 = vpop.permute.xlu0 %2915
      %2917 = vset.pattern.permute.xlu0 0
      %2918 = vperm.xlu0 %2917, %v2825
      %v2919 = vpop.permute.xlu0 %2918
      %2920 = vset.pattern.permute.xlu0 0
      %2921 = vperm.xlu0 %2920, %v2826
      %v2922 = vpop.permute.xlu0 %2921
      %vm2923 = vcmp.eq.s32.totalorder %v2829, 1
      %vm2924 = vcmp.eq.s32.totalorder %v2832, 1
      %vm2925 = vcmp.eq.s32.totalorder %v2835, 1
      %vm2926 = vcmp.eq.s32.totalorder %v2838, 1
      %vm2927 = vcmp.eq.s32.totalorder %v2841, 1
      %vm2928 = vcmp.eq.s32.totalorder %v2844, 1
      %vm2929 = vcmp.eq.s32.totalorder %v2847, 1
      %vm2930 = vcmp.eq.s32.totalorder %v2850, 1
      %vm2931 = vcmp.eq.s32.totalorder %v2853, 1
      %vm2932 = vcmp.eq.s32.totalorder %v2856, 1
      %vm2933 = vcmp.eq.s32.totalorder %v2859, 1
      %vm2934 = vcmp.eq.s32.totalorder %v2862, 1
      %vm2935 = vcmp.eq.s32.totalorder %v2865, 1
      %vm2936 = vcmp.eq.s32.totalorder %v2868, 1
      %vm2937 = vcmp.eq.s32.totalorder %v2871, 1
      %vm2938 = vcmp.eq.s32.totalorder %v2874, 1
      %vm2939 = vcmp.eq.s32.totalorder %v2877, 1
      %vm2940 = vcmp.eq.s32.totalorder %v2880, 1
      %vm2941 = vcmp.eq.s32.totalorder %v2883, 1
      %vm2942 = vcmp.eq.s32.totalorder %v2886, 1
      %vm2943 = vcmp.eq.s32.totalorder %v2889, 1
      %vm2944 = vcmp.eq.s32.totalorder %v2892, 1
      %vm2945 = vcmp.eq.s32.totalorder %v2895, 1
      %vm2946 = vcmp.eq.s32.totalorder %v2898, 1
      %vm2947 = vcmp.eq.s32.totalorder %v2901, 1
      %vm2948 = vcmp.eq.s32.totalorder %v2904, 1
      %vm2949 = vcmp.eq.s32.totalorder %v2907, 1
      %vm2950 = vcmp.eq.s32.totalorder %v2910, 1
      %vm2951 = vcmp.eq.s32.totalorder %v2913, 1
      %vm2952 = vcmp.eq.s32.totalorder %v2916, 1
      %vm2953 = vcmp.eq.s32.totalorder %v2919, 1
      %vm2954 = vcmp.eq.s32.totalorder %v2922, 1
      %v2955 = vsel %vm2923, %v2763, 0.0
      %v2956 = vsel %vm2924, %v2764, 0.0
      %v2957 = vsel %vm2925, %v2765, 0.0
      %v2958 = vsel %vm2926, %v2766, 0.0
      %v2959 = vsel %vm2927, %v2767, 0.0
      %v2960 = vsel %vm2928, %v2768, 0.0
      %v2961 = vsel %vm2929, %v2769, 0.0
      %v2962 = vsel %vm2930, %v2770, 0.0
      %v2963 = vsel %vm2931, %v2771, 0.0
      %v2964 = vsel %vm2932, %v2772, 0.0
      %v2965 = vsel %vm2933, %v2773, 0.0
      %v2966 = vsel %vm2934, %v2774, 0.0
      %v2967 = vsel %vm2935, %v2775, 0.0
      %v2968 = vsel %vm2936, %v2776, 0.0
      %v2969 = vsel %vm2937, %v2777, 0.0
      %v2970 = vsel %vm2938, %v2778, 0.0
      %v2971 = vsel %vm2939, %v2779, 0.0
      %v2972 = vsel %vm2940, %v2780, 0.0
      %v2973 = vsel %vm2941, %v2781, 0.0
      %v2974 = vsel %vm2942, %v2782, 0.0
      %v2975 = vsel %vm2943, %v2783, 0.0
      %v2976 = vsel %vm2944, %v2784, 0.0
      %v2977 = vsel %vm2945, %v2785, 0.0
      %v2978 = vsel %vm2946, %v2786, 0.0
      %v2979 = vsel %vm2947, %v2787, 0.0
      %v2980 = vsel %vm2948, %v2788, 0.0
      %v2981 = vsel %vm2949, %v2789, 0.0
      %v2982 = vsel %vm2950, %v2790, 0.0
      %v2983 = vsel %vm2951, %v2791, 0.0
      %v2984 = vsel %vm2952, %v2792, 0.0
      %v2985 = vsel %vm2953, %v2793, 0.0
      %v2986 = vsel %vm2954, %v2794, 0.0
      %v2987 = vadd.f32 %v2727, %v2955
      %v2988 = vadd.f32 %v2728, %v2956
      %v2989 = vadd.f32 %v2729, %v2957
      %v2990 = vadd.f32 %v2730, %v2958
      %v2991 = vadd.f32 %v2731, %v2959
      %v2992 = vadd.f32 %v2732, %v2960
      %v2993 = vadd.f32 %v2733, %v2961
      %v2994 = vadd.f32 %v2734, %v2962
      %v2995 = vadd.f32 %v2735, %v2963
      %v2996 = vadd.f32 %v2736, %v2964
      %v2997 = vadd.f32 %v2737, %v2965
      %v2998 = vadd.f32 %v2738, %v2966
      %v2999 = vadd.f32 %v2739, %v2967
      %v3000 = vadd.f32 %v2740, %v2968
      %v3001 = vadd.f32 %v2741, %v2969
      %v3002 = vadd.f32 %v2742, %v2970
      %v3003 = vadd.f32 %v2743, %v2971
      %v3004 = vadd.f32 %v2744, %v2972
      %v3005 = vadd.f32 %v2745, %v2973
      %v3006 = vadd.f32 %v2746, %v2974
      %v3007 = vadd.f32 %v2747, %v2975
      %v3008 = vadd.f32 %v2748, %v2976
      %v3009 = vadd.f32 %v2749, %v2977
      %v3010 = vadd.f32 %v2750, %v2978
      %v3011 = vadd.f32 %v2751, %v2979
      %v3012 = vadd.f32 %v2752, %v2980
      %v3013 = vadd.f32 %v2753, %v2981
      %v3014 = vadd.f32 %v2754, %v2982
      %v3015 = vadd.f32 %v2755, %v2983
      %v3016 = vadd.f32 %v2756, %v2984
      %v3017 = vadd.f32 %v2757, %v2985
      %v3018 = vadd.f32 %v2758, %v2986
      %v3019 = vlaneseq
      %v3020 = vshrl.u32 %v3019, 7
      %v3021 = vsub.s32 0, %v3020
      %v3022 = vrot.slane %v895, %v3021
      %v3023 = vmul.f32 %v1583, %v3022
      %v3024 = vmul.f32 %v1582, %v3022
      %v3025 = vmul.f32 %v1581, %v3022
      %v3026 = vmul.f32 %v1580, %v3022
      %v3027 = vmul.f32 %v1579, %v3022
      %v3028 = vmul.f32 %v1578, %v3022
      %v3029 = vmul.f32 %v1577, %v3022
      %v3030 = vmul.f32 %v1576, %v3022
      %v3031 = vmul.f32 %v1575, %v3022
      %v3032 = vmul.f32 %v1574, %v3022
      %v3033 = vmul.f32 %v1573, %v3022
      %v3034 = vmul.f32 %v1572, %v3022
      %v3035 = vmul.f32 %v1571, %v3022
      %v3036 = vmul.f32 %v1570, %v3022
      %v3037 = vmul.f32 %v1569, %v3022
      %v3038 = vmul.f32 %v1568, %v3022
      %v3039 = vmul.f32 %v1567, %v3022
      %v3040 = vmul.f32 %v1566, %v3022
      %v3041 = vmul.f32 %v1565, %v3022
      %v3042 = vmul.f32 %v1564, %v3022
      %v3043 = vmul.f32 %v1563, %v3022
      %v3044 = vmul.f32 %v1562, %v3022
      %v3045 = vmul.f32 %v1561, %v3022
      %v3046 = vmul.f32 %v1560, %v3022
      %v3047 = vmul.f32 %v1559, %v3022
      %v3048 = vmul.f32 %v1558, %v3022
      %v3049 = vmul.f32 %v1557, %v3022
      %v3050 = vmul.f32 %v1556, %v3022
      %v3051 = vmul.f32 %v1555, %v3022
      %v3052 = vmul.f32 %v1586, %v3022
      %v3053 = vmul.f32 %v1585, %v3022
      %v3054 = vmul.f32 %v1584, %v3022
      %vm3055 = vmand %vm798, %vm862
      %vm3056 = vmand %vm799, %vm863
      %vm3057 = vmand %vm800, %vm864
      %vm3058 = vmand %vm801, %vm865
      %vm3059 = vmand %vm802, %vm866
      %vm3060 = vmand %vm803, %vm867
      %vm3061 = vmand %vm804, %vm868
      %vm3062 = vmand %vm805, %vm869
      %vm3063 = vmand %vm806, %vm870
      %vm3064 = vmand %vm807, %vm871
      %vm3065 = vmand %vm808, %vm872
      %vm3066 = vmand %vm809, %vm873
      %vm3067 = vmand %vm810, %vm874
      %vm3068 = vmand %vm811, %vm875
      %vm3069 = vmand %vm812, %vm876
      %vm3070 = vmand %vm813, %vm877
      %vm3071 = vmand %vm814, %vm878
      %vm3072 = vmand %vm815, %vm879
      %vm3073 = vmand %vm816, %vm880
      %vm3074 = vmand %vm817, %vm881
      %vm3075 = vmand %vm818, %vm882
      %vm3076 = vmand %vm819, %vm883
      %vm3077 = vmand %vm820, %vm884
      %vm3078 = vmand %vm821, %vm885
      %vm3079 = vmand %vm822, %vm886
      %vm3080 = vmand %vm823, %vm887
      %vm3081 = vmand %vm824, %vm888
      %vm3082 = vmand %vm825, %vm889
      %vm3083 = vmand %vm826, %vm890
      %vm3084 = vmand %vm827, %vm891
      %vm3085 = vmand %vm828, %vm892
      %vm3086 = vmand %vm829, %vm893
      %v3087 = vsel %vm3055, 1, 0
      %v3088 = vsel %vm3056, 1, 0
      %v3089 = vsel %vm3057, 1, 0
      %v3090 = vsel %vm3058, 1, 0
      %v3091 = vsel %vm3059, 1, 0
      %v3092 = vsel %vm3060, 1, 0
      %v3093 = vsel %vm3061, 1, 0
      %v3094 = vsel %vm3062, 1, 0
      %v3095 = vsel %vm3063, 1, 0
      %v3096 = vsel %vm3064, 1, 0
      %v3097 = vsel %vm3065, 1, 0
      %v3098 = vsel %vm3066, 1, 0
      %v3099 = vsel %vm3067, 1, 0
      %v3100 = vsel %vm3068, 1, 0
      %v3101 = vsel %vm3069, 1, 0
      %v3102 = vsel %vm3070, 1, 0
      %v3103 = vsel %vm3071, 1, 0
      %v3104 = vsel %vm3072, 1, 0
      %v3105 = vsel %vm3073, 1, 0
      %v3106 = vsel %vm3074, 1, 0
      %v3107 = vsel %vm3075, 1, 0
      %v3108 = vsel %vm3076, 1, 0
      %v3109 = vsel %vm3077, 1, 0
      %v3110 = vsel %vm3078, 1, 0
      %v3111 = vsel %vm3079, 1, 0
      %v3112 = vsel %vm3080, 1, 0
      %v3113 = vsel %vm3081, 1, 0
      %v3114 = vsel %vm3082, 1, 0
      %v3115 = vsel %vm3083, 1, 0
      %v3116 = vsel %vm3084, 1, 0
      %v3117 = vsel %vm3085, 1, 0
      %v3118 = vsel %vm3086, 1, 0
      %3119 = vset.pattern.permute.xlu0 0
      %3120 = vperm.xlu0 %3119, %v3087
      %v3121 = vpop.permute.xlu0 %3120
      %3122 = vset.pattern.permute.xlu0 0
      %3123 = vperm.xlu0 %3122, %v3088
      %v3124 = vpop.permute.xlu0 %3123
      %3125 = vset.pattern.permute.xlu0 0
      %3126 = vperm.xlu0 %3125, %v3089
      %v3127 = vpop.permute.xlu0 %3126
      %3128 = vset.pattern.permute.xlu0 0
      %3129 = vperm.xlu0 %3128, %v3090
      %v3130 = vpop.permute.xlu0 %3129
      %3131 = vset.pattern.permute.xlu0 0
      %3132 = vperm.xlu0 %3131, %v3091
      %v3133 = vpop.permute.xlu0 %3132
      %3134 = vset.pattern.permute.xlu0 0
      %3135 = vperm.xlu0 %3134, %v3092
      %v3136 = vpop.permute.xlu0 %3135
      %3137 = vset.pattern.permute.xlu0 0
      %3138 = vperm.xlu0 %3137, %v3093
      %v3139 = vpop.permute.xlu0 %3138
      %3140 = vset.pattern.permute.xlu0 0
      %3141 = vperm.xlu0 %3140, %v3094
      %v3142 = vpop.permute.xlu0 %3141
      %3143 = vset.pattern.permute.xlu0 0
      %3144 = vperm.xlu0 %3143, %v3095
      %v3145 = vpop.permute.xlu0 %3144
      %3146 = vset.pattern.permute.xlu0 0
      %3147 = vperm.xlu0 %3146, %v3096
      %v3148 = vpop.permute.xlu0 %3147
      %3149 = vset.pattern.permute.xlu0 0
      %3150 = vperm.xlu0 %3149, %v3097
      %v3151 = vpop.permute.xlu0 %3150
      %3152 = vset.pattern.permute.xlu0 0
      %3153 = vperm.xlu0 %3152, %v3098
      %v3154 = vpop.permute.xlu0 %3153
      %3155 = vset.pattern.permute.xlu0 0
      %3156 = vperm.xlu0 %3155, %v3099
      %v3157 = vpop.permute.xlu0 %3156
      %3158 = vset.pattern.permute.xlu0 0
      %3159 = vperm.xlu0 %3158, %v3100
      %v3160 = vpop.permute.xlu0 %3159
      %3161 = vset.pattern.permute.xlu0 0
      %3162 = vperm.xlu0 %3161, %v3101
      %v3163 = vpop.permute.xlu0 %3162
      %3164 = vset.pattern.permute.xlu0 0
      %3165 = vperm.xlu0 %3164, %v3102
      %v3166 = vpop.permute.xlu0 %3165
      %3167 = vset.pattern.permute.xlu0 0
      %3168 = vperm.xlu0 %3167, %v3103
      %v3169 = vpop.permute.xlu0 %3168
      %3170 = vset.pattern.permute.xlu0 0
      %3171 = vperm.xlu0 %3170, %v3104
      %v3172 = vpop.permute.xlu0 %3171
      %3173 = vset.pattern.permute.xlu0 0
      %3174 = vperm.xlu0 %3173, %v3105
      %v3175 = vpop.permute.xlu0 %3174
      %3176 = vset.pattern.permute.xlu0 0
      %3177 = vperm.xlu0 %3176, %v3106
      %v3178 = vpop.permute.xlu0 %3177
      %3179 = vset.pattern.permute.xlu0 0
      %3180 = vperm.xlu0 %3179, %v3107
      %v3181 = vpop.permute.xlu0 %3180
      %3182 = vset.pattern.permute.xlu0 0
      %3183 = vperm.xlu0 %3182, %v3108
      %v3184 = vpop.permute.xlu0 %3183
      %3185 = vset.pattern.permute.xlu0 0
      %3186 = vperm.xlu0 %3185, %v3109
      %v3187 = vpop.permute.xlu0 %3186
      %3188 = vset.pattern.permute.xlu0 0
      %3189 = vperm.xlu0 %3188, %v3110
      %v3190 = vpop.permute.xlu0 %3189
      %3191 = vset.pattern.permute.xlu0 0
      %3192 = vperm.xlu0 %3191, %v3111
      %v3193 = vpop.permute.xlu0 %3192
      %3194 = vset.pattern.permute.xlu0 0
      %3195 = vperm.xlu0 %3194, %v3112
      %v3196 = vpop.permute.xlu0 %3195
      %3197 = vset.pattern.permute.xlu0 0
      %3198 = vperm.xlu0 %3197, %v3113
      %v3199 = vpop.permute.xlu0 %3198
      %3200 = vset.pattern.permute.xlu0 0
      %3201 = vperm.xlu0 %3200, %v3114
      %v3202 = vpop.permute.xlu0 %3201
      %3203 = vset.pattern.permute.xlu0 0
      %3204 = vperm.xlu0 %3203, %v3115
      %v3205 = vpop.permute.xlu0 %3204
      %3206 = vset.pattern.permute.xlu0 0
      %3207 = vperm.xlu0 %3206, %v3116
      %v3208 = vpop.permute.xlu0 %3207
      %3209 = vset.pattern.permute.xlu0 0
      %3210 = vperm.xlu0 %3209, %v3117
      %v3211 = vpop.permute.xlu0 %3210
      %3212 = vset.pattern.permute.xlu0 0
      %3213 = vperm.xlu0 %3212, %v3118
      %v3214 = vpop.permute.xlu0 %3213
      %vm3215 = vcmp.eq.s32.totalorder %v3121, 1
      %vm3216 = vcmp.eq.s32.totalorder %v3124, 1
      %vm3217 = vcmp.eq.s32.totalorder %v3127, 1
      %vm3218 = vcmp.eq.s32.totalorder %v3130, 1
      %vm3219 = vcmp.eq.s32.totalorder %v3133, 1
      %vm3220 = vcmp.eq.s32.totalorder %v3136, 1
      %vm3221 = vcmp.eq.s32.totalorder %v3139, 1
      %vm3222 = vcmp.eq.s32.totalorder %v3142, 1
      %vm3223 = vcmp.eq.s32.totalorder %v3145, 1
      %vm3224 = vcmp.eq.s32.totalorder %v3148, 1
      %vm3225 = vcmp.eq.s32.totalorder %v3151, 1
      %vm3226 = vcmp.eq.s32.totalorder %v3154, 1
      %vm3227 = vcmp.eq.s32.totalorder %v3157, 1
      %vm3228 = vcmp.eq.s32.totalorder %v3160, 1
      %vm3229 = vcmp.eq.s32.totalorder %v3163, 1
      %vm3230 = vcmp.eq.s32.totalorder %v3166, 1
      %vm3231 = vcmp.eq.s32.totalorder %v3169, 1
      %vm3232 = vcmp.eq.s32.totalorder %v3172, 1
      %vm3233 = vcmp.eq.s32.totalorder %v3175, 1
      %vm3234 = vcmp.eq.s32.totalorder %v3178, 1
      %vm3235 = vcmp.eq.s32.totalorder %v3181, 1
      %vm3236 = vcmp.eq.s32.totalorder %v3184, 1
      %vm3237 = vcmp.eq.s32.totalorder %v3187, 1
      %vm3238 = vcmp.eq.s32.totalorder %v3190, 1
      %vm3239 = vcmp.eq.s32.totalorder %v3193, 1
      %vm3240 = vcmp.eq.s32.totalorder %v3196, 1
      %vm3241 = vcmp.eq.s32.totalorder %v3199, 1
      %vm3242 = vcmp.eq.s32.totalorder %v3202, 1
      %vm3243 = vcmp.eq.s32.totalorder %v3205, 1
      %vm3244 = vcmp.eq.s32.totalorder %v3208, 1
      %vm3245 = vcmp.eq.s32.totalorder %v3211, 1
      %vm3246 = vcmp.eq.s32.totalorder %v3214, 1
      %v3247 = vsel %vm3215, %v3023, 0.0
      %v3248 = vsel %vm3216, %v3024, 0.0
      %v3249 = vsel %vm3217, %v3025, 0.0
      %v3250 = vsel %vm3218, %v3026, 0.0
      %v3251 = vsel %vm3219, %v3027, 0.0
      %v3252 = vsel %vm3220, %v3028, 0.0
      %v3253 = vsel %vm3221, %v3029, 0.0
      %v3254 = vsel %vm3222, %v3030, 0.0
      %v3255 = vsel %vm3223, %v3031, 0.0
      %v3256 = vsel %vm3224, %v3032, 0.0
      %v3257 = vsel %vm3225, %v3033, 0.0
      %v3258 = vsel %vm3226, %v3034, 0.0
      %v3259 = vsel %vm3227, %v3035, 0.0
      %v3260 = vsel %vm3228, %v3036, 0.0
      %v3261 = vsel %vm3229, %v3037, 0.0
      %v3262 = vsel %vm3230, %v3038, 0.0
      %v3263 = vsel %vm3231, %v3039, 0.0
      %v3264 = vsel %vm3232, %v3040, 0.0
      %v3265 = vsel %vm3233, %v3041, 0.0
      %v3266 = vsel %vm3234, %v3042, 0.0
      %v3267 = vsel %vm3235, %v3043, 0.0
      %v3268 = vsel %vm3236, %v3044, 0.0
      %v3269 = vsel %vm3237, %v3045, 0.0
      %v3270 = vsel %vm3238, %v3046, 0.0
      %v3271 = vsel %vm3239, %v3047, 0.0
      %v3272 = vsel %vm3240, %v3048, 0.0
      %v3273 = vsel %vm3241, %v3049, 0.0
      %v3274 = vsel %vm3242, %v3050, 0.0
      %v3275 = vsel %vm3243, %v3051, 0.0
      %v3276 = vsel %vm3244, %v3052, 0.0
      %v3277 = vsel %vm3245, %v3053, 0.0
      %v3278 = vsel %vm3246, %v3054, 0.0
      %v3279 = vadd.f32 %v2987, %v3247
      %v3280 = vadd.f32 %v2988, %v3248
      %v3281 = vadd.f32 %v2989, %v3249
      %v3282 = vadd.f32 %v2990, %v3250
      %v3283 = vadd.f32 %v2991, %v3251
      %v3284 = vadd.f32 %v2992, %v3252
      %v3285 = vadd.f32 %v2993, %v3253
      %v3286 = vadd.f32 %v2994, %v3254
      %v3287 = vadd.f32 %v2995, %v3255
      %v3288 = vadd.f32 %v2996, %v3256
      %v3289 = vadd.f32 %v2997, %v3257
      %v3290 = vadd.f32 %v2998, %v3258
      %v3291 = vadd.f32 %v2999, %v3259
      %v3292 = vadd.f32 %v3000, %v3260
      %v3293 = vadd.f32 %v3001, %v3261
      %v3294 = vadd.f32 %v3002, %v3262
      %v3295 = vadd.f32 %v3003, %v3263
      %v3296 = vadd.f32 %v3004, %v3264
      %v3297 = vadd.f32 %v3005, %v3265
      %v3298 = vadd.f32 %v3006, %v3266
      %v3299 = vadd.f32 %v3007, %v3267
      %v3300 = vadd.f32 %v3008, %v3268
      %v3301 = vadd.f32 %v3009, %v3269
      %v3302 = vadd.f32 %v3010, %v3270
      %v3303 = vadd.f32 %v3011, %v3271
      %v3304 = vadd.f32 %v3012, %v3272
      %v3305 = vadd.f32 %v3013, %v3273
      %v3306 = vadd.f32 %v3014, %v3274
      %v3307 = vadd.f32 %v3015, %v3275
      %v3308 = vadd.f32 %v3016, %v3276
      %v3309 = vadd.f32 %v3017, %v3277
      %v3310 = vadd.f32 %v3018, %v3278
      %v3311 = vmax.f32 %v3279, 0.0
      %v3312 = vmax.f32 %v3280, 0.0
      %v3313 = vmax.f32 %v3281, 0.0
      %v3314 = vmax.f32 %v3282, 0.0
      %v3315 = vmax.f32 %v3283, 0.0
      %v3316 = vmax.f32 %v3284, 0.0
      %v3317 = vmax.f32 %v3285, 0.0
      %v3318 = vmax.f32 %v3286, 0.0
      %v3319 = vmax.f32 %v3287, 0.0
      %v3320 = vmax.f32 %v3288, 0.0
      %v3321 = vmax.f32 %v3289, 0.0
      %v3322 = vmax.f32 %v3290, 0.0
      %v3323 = vmax.f32 %v3291, 0.0
      %v3324 = vmax.f32 %v3292, 0.0
      %v3325 = vmax.f32 %v3293, 0.0
      %v3326 = vmax.f32 %v3294, 0.0
      %v3327 = vmax.f32 %v3295, 0.0
      %v3328 = vmax.f32 %v3296, 0.0
      %v3329 = vmax.f32 %v3297, 0.0
      %v3330 = vmax.f32 %v3298, 0.0
      %v3331 = vmax.f32 %v3299, 0.0
      %v3332 = vmax.f32 %v3300, 0.0
      %v3333 = vmax.f32 %v3301, 0.0
      %v3334 = vmax.f32 %v3302, 0.0
      %v3335 = vmax.f32 %v3303, 0.0
      %v3336 = vmax.f32 %v3304, 0.0
      %v3337 = vmax.f32 %v3305, 0.0
      %v3338 = vmax.f32 %v3306, 0.0
      %v3339 = vmax.f32 %v3307, 0.0
      %v3340 = vmax.f32 %v3308, 0.0
      %v3341 = vmax.f32 %v3309, 0.0
      %v3342 = vmax.f32 %v3310, 0.0
      %v3343 = vld [vmem:[%s7] sm:$0xff]
      %v3344 = vld [vmem:[%s7 + $0x8] sm:$0xff]
      %v3345 = vld [vmem:[%s7 + $0x10] sm:$0xff]
      %v3346 = vld [vmem:[%s7 + $0x18] sm:$0xff]
      %v3347 = vld [vmem:[%s7 + $0x20] sm:$0xff]
      %v3348 = vld [vmem:[%s7 + $0x28] sm:$0xff]
      %v3349 = vld [vmem:[%s7 + $0x30] sm:$0xff]
      %v3350 = vld [vmem:[%s7 + $0x38] sm:$0xff]
      %v3351 = vld [vmem:[%s7 + $0x40] sm:$0xff]
      %v3352 = vld [vmem:[%s7 + $0x48] sm:$0xff]
      %v3353 = vld [vmem:[%s7 + $0x50] sm:$0xff]
      %v3354 = vld [vmem:[%s7 + $0x58] sm:$0xff]
      %v3355 = vld [vmem:[%s7 + $0x60] sm:$0xff]
      %v3356 = vld [vmem:[%s7 + $0x68] sm:$0xff]
      %v3357 = vld [vmem:[%s7 + $0x70] sm:$0xff]
      %v3358 = vld [vmem:[%s7 + $0x78] sm:$0xff]
      %v3359 = vld [vmem:[%s8] sm:$0x1]
      %v3361 = vlaneseq
      %v3362 = vshrl.u32 %v3361, 7
      %v3363 = vsub.s32 0, %v3362
      %v3364 = vrot.slane %v3359, %v3363
      %3366 = vmatprep.subr.mxu0 0.0
      %3367 = vmatpush1.msra.mxu0 %v3343
      %3368 = vmatprep.subr.mxu0 0.0
      %3369 = vmatpush1.msra.mxu0 %v3344
      %3370 = vmatprep.subr.mxu0 0.0
      %3371 = vmatpush1.msra.mxu0 %v3345
      %3372 = vmatprep.subr.mxu0 0.0
      %3373 = vmatpush1.msra.mxu0 %v3346
      %3374 = vmatprep.subr.mxu0 0.0
      %3375 = vmatpush1.msra.mxu0 %v3347
      %3376 = vmatprep.subr.mxu0 0.0
      %3377 = vmatpush1.msra.mxu0 %v3348
      %3378 = vmatprep.subr.mxu0 0.0
      %3379 = vmatpush1.msra.mxu0 %v3349
      %3380 = vmatprep.subr.mxu0 0.0
      %3381 = vmatpush1.msra.mxu0 %v3350
      %3382 = vmatprep.subr.mxu0 0.0
      %3383 = vmatpush1.msra.mxu0 %v3351
      %3384 = vmatprep.subr.mxu0 0.0
      %3385 = vmatpush1.msra.mxu0 %v3352
      %3386 = vmatprep.subr.mxu0 0.0
      %3387 = vmatpush1.msra.mxu0 %v3353
      %3388 = vmatprep.subr.mxu0 0.0
      %3389 = vmatpush1.msra.mxu0 %v3354
      %3390 = vmatprep.subr.mxu0 0.0
      %3391 = vmatpush1.msra.mxu0 %v3355
      %3392 = vmatprep.subr.mxu0 0.0
      %3393 = vmatpush1.msra.mxu0 %v3356
      %3394 = vmatprep.subr.mxu0 0.0
      %3395 = vmatpush1.msra.mxu0 %v3357
      %3396 = vmatprep.subr.mxu0 0.0
      %3397 = vmatpush1.msra.mxu0 %v3358
      %3398 = vmatprep.subr.mxu0 0.0
      %3399 = vmatpush1.msra.mxu0 0.0
      %3400 = vmatprep.subr.mxu0 0.0
      %3401 = vmatpush1.msra.mxu0 0.0
      %3402 = vmatprep.subr.mxu0 0.0
      %3403 = vmatpush1.msra.mxu0 0.0
      %3404 = vmatprep.subr.mxu0 0.0
      %3405 = vmatpush1.msra.mxu0 0.0
      %3406 = vmatprep.subr.mxu0 0.0
      %3407 = vmatpush1.msra.mxu0 0.0
      %3408 = vmatprep.subr.mxu0 0.0
      %3409 = vmatpush1.msra.mxu0 0.0
      %3410 = vmatprep.subr.mxu0 0.0
      %3411 = vmatpush1.msra.mxu0 0.0
      %3412 = vmatprep.subr.mxu0 0.0
      %3413 = vmatpush1.msra.mxu0 0.0
      %3414 = vmatprep.subr.mxu0 0.0
      %3415 = vmatpush1.msra.mxu0 0.0
      %3416 = vmatprep.subr.mxu0 0.0
      %3417 = vmatpush1.msra.mxu0 0.0
      %3418 = vmatprep.subr.mxu0 0.0
      %3419 = vmatpush1.msra.mxu0 0.0
      %3420 = vmatprep.subr.mxu0 0.0
      %3421 = vmatpush1.msra.mxu0 0.0
      %3422 = vmatprep.subr.mxu0 0.0
      %3423 = vmatpush1.msra.mxu0 0.0
      %3424 = vmatprep.subr.mxu0 0.0
      %3425 = vmatpush1.msra.mxu0 0.0
      %3426 = vmatprep.subr.mxu0 0.0
      %3427 = vmatpush1.msra.mxu0 0.0
      %3428 = vmatprep.subr.mxu0 0.0
      %3429 = vmatpush1.msra.mxu0 0.0
      %3430 = vmatprep.mubr.f32.mxu0 0.0
      %3431 = vmatmul.mubr.f32.gmra.mrb[0].mxu0 %v3311
      %v3432 = vpop.f32.mrb[0].mxu0
      %v3433 = vadd.f32 %v3364, %v3432
      %v3434 = vpop.f32.mrb[0].mxu0
      %3435 = vmatprep.mubr.f32.mxu0 0.0
      %3436 = vmatmul.mubr.f32.gmra.mrb[0].mxu0 %v3312
      %v3437 = vpop.f32.mrb[0].mxu0
      %v3438 = vadd.f32 %v3364, %v3437
      %v3439 = vpop.f32.mrb[0].mxu0
      %3440 = vmatprep.mubr.f32.mxu0 0.0
      %3441 = vmatmul.mubr.f32.gmra.mrb[0].mxu0 %v3313
      %v3442 = vpop.f32.mrb[0].mxu0
      %v3443 = vadd.f32 %v3364, %v3442
      %v3444 = vpop.f32.mrb[0].mxu0
      %3445 = vmatprep.mubr.f32.mxu0 0.0
      %3446 = vmatmul.mubr.f32.gmra.mrb[0].mxu0 %v3314
      %v3447 = vpop.f32.mrb[0].mxu0
      %v3448 = vadd.f32 %v3364, %v3447
      %v3449 = vpop.f32.mrb[0].mxu0
      %3450 = vmatprep.mubr.f32.mxu0 0.0
      %3451 = vmatmul.mubr.f32.gmra.mrb[0].mxu0 %v3315
      %v3452 = vpop.f32.mrb[0].mxu0
      %v3453 = vadd.f32 %v3364, %v3452
      %v3454 = vpop.f32.mrb[0].mxu0
      %3455 = vmatprep.mubr.f32.mxu0 0.0
      %3456 = vmatmul.mubr.f32.gmra.mrb[0].mxu0 %v3316
      %v3457 = vpop.f32.mrb[0].mxu0
      %v3458 = vadd.f32 %v3364, %v3457
      %v3459 = vpop.f32.mrb[0].mxu0
      %3460 = vmatprep.mubr.f32.mxu0 0.0
      %3461 = vmatmul.mubr.f32.gmra.mrb[0].mxu0 %v3317
      %v3462 = vpop.f32.mrb[0].mxu0
      %v3463 = vadd.f32 %v3364, %v3462
      %v3464 = vpop.f32.mrb[0].mxu0
      %3465 = vmatprep.mubr.f32.mxu0 0.0
      %3466 = vmatmul.mubr.f32.gmra.mrb[0].mxu0 %v3318
      %v3467 = vpop.f32.mrb[0].mxu0
      %v3468 = vadd.f32 %v3364, %v3467
      %v3469 = vpop.f32.mrb[0].mxu0
      %3470 = vmatprep.mubr.f32.mxu0 0.0
      %3471 = vmatmul.mubr.f32.gmra.mrb[0].mxu0 %v3319
      %v3472 = vpop.f32.mrb[0].mxu0
      %v3473 = vadd.f32 %v3364, %v3472
      %v3474 = vpop.f32.mrb[0].mxu0
      %3475 = vmatprep.mubr.f32.mxu0 0.0
      %3476 = vmatmul.mubr.f32.gmra.mrb[0].mxu0 %v3320
      %v3477 = vpop.f32.mrb[0].mxu0
      %v3478 = vadd.f32 %v3364, %v3477
      %v3479 = vpop.f32.mrb[0].mxu0
      %3480 = vmatprep.mubr.f32.mxu0 0.0
      %3481 = vmatmul.mubr.f32.gmra.mrb[0].mxu0 %v3321
      %v3482 = vpop.f32.mrb[0].mxu0
      %v3483 = vadd.f32 %v3364, %v3482
      %v3484 = vpop.f32.mrb[0].mxu0
      %3485 = vmatprep.mubr.f32.mxu0 0.0
      %3486 = vmatmul.mubr.f32.gmra.mrb[0].mxu0 %v3322
      %v3487 = vpop.f32.mrb[0].mxu0
      %v3488 = vadd.f32 %v3364, %v3487
      %v3489 = vpop.f32.mrb[0].mxu0
      %3490 = vmatprep.mubr.f32.mxu0 0.0
      %3491 = vmatmul.mubr.f32.gmra.mrb[0].mxu0 %v3323
      %v3492 = vpop.f32.mrb[0].mxu0
      %v3493 = vadd.f32 %v3364, %v3492
      %v3494 = vpop.f32.mrb[0].mxu0
      %3495 = vmatprep.mubr.f32.mxu0 0.0
      %3496 = vmatmul.mubr.f32.gmra.mrb[0].mxu0 %v3324
      %v3497 = vpop.f32.mrb[0].mxu0
      %v3498 = vadd.f32 %v3364, %v3497
      %v3499 = vpop.f32.mrb[0].mxu0
      %3500 = vmatprep.mubr.f32.mxu0 0.0
      %3501 = vmatmul.mubr.f32.gmra.mrb[0].mxu0 %v3325
      %v3502 = vpop.f32.mrb[0].mxu0
      %v3503 = vadd.f32 %v3364, %v3502
      %v3504 = vpop.f32.mrb[0].mxu0
      %3505 = vmatprep.mubr.f32.mxu0 0.0
      %3506 = vmatmul.mubr.f32.gmra.mrb[0].mxu0 %v3326
      %v3507 = vpop.f32.mrb[0].mxu0
      %v3508 = vadd.f32 %v3364, %v3507
      %v3509 = vpop.f32.mrb[0].mxu0
      %3510 = vmatprep.mubr.f32.mxu0 0.0
      %3511 = vmatmul.mubr.f32.gmra.mrb[0].mxu0 %v3327
      %v3512 = vpop.f32.mrb[0].mxu0
      %v3513 = vadd.f32 %v3364, %v3512
      %v3514 = vpop.f32.mrb[0].mxu0
      %3515 = vmatprep.mubr.f32.mxu0 0.0
      %3516 = vmatmul.mubr.f32.gmra.mrb[0].mxu0 %v3328
      %v3517 = vpop.f32.mrb[0].mxu0
      %v3518 = vadd.f32 %v3364, %v3517
      %v3519 = vpop.f32.mrb[0].mxu0
      %3520 = vmatprep.mubr.f32.mxu0 0.0
      %3521 = vmatmul.mubr.f32.gmra.mrb[0].mxu0 %v3329
      %v3522 = vpop.f32.mrb[0].mxu0
      %v3523 = vadd.f32 %v3364, %v3522
      %v3524 = vpop.f32.mrb[0].mxu0
      %3525 = vmatprep.mubr.f32.mxu0 0.0
      %3526 = vmatmul.mubr.f32.gmra.mrb[0].mxu0 %v3330
      %v3527 = vpop.f32.mrb[0].mxu0
      %v3528 = vadd.f32 %v3364, %v3527
      %v3529 = vpop.f32.mrb[0].mxu0
      %3530 = vmatprep.mubr.f32.mxu0 0.0
      %3531 = vmatmul.mubr.f32.gmra.mrb[0].mxu0 %v3331
      %v3532 = vpop.f32.mrb[0].mxu0
      %v3533 = vadd.f32 %v3364, %v3532
      %v3534 = vpop.f32.mrb[0].mxu0
      %3535 = vmatprep.mubr.f32.mxu0 0.0
      %3536 = vmatmul.mubr.f32.gmra.mrb[0].mxu0 %v3332
      %v3537 = vpop.f32.mrb[0].mxu0
      %v3538 = vadd.f32 %v3364, %v3537
      %v3539 = vpop.f32.mrb[0].mxu0
      %3540 = vmatprep.mubr.f32.mxu0 0.0
      %3541 = vmatmul.mubr.f32.gmra.mrb[0].mxu0 %v3333
      %v3542 = vpop.f32.mrb[0].mxu0
      %v3543 = vadd.f32 %v3364, %v3542
      %v3544 = vpop.f32.mrb[0].mxu0
      %3545 = vmatprep.mubr.f32.mxu0 0.0
      %3546 = vmatmul.mubr.f32.gmra.mrb[0].mxu0 %v3334
      %v3547 = vpop.f32.mrb[0].mxu0
      %v3548 = vadd.f32 %v3364, %v3547
      %v3549 = vpop.f32.mrb[0].mxu0
      %3550 = vmatprep.mubr.f32.mxu0 0.0
      %3551 = vmatmul.mubr.f32.gmra.mrb[0].mxu0 %v3335
      %v3552 = vpop.f32.mrb[0].mxu0
      %v3553 = vadd.f32 %v3364, %v3552
      %v3554 = vpop.f32.mrb[0].mxu0
      %3555 = vmatprep.mubr.f32.mxu0 0.0
      %3556 = vmatmul.mubr.f32.gmra.mrb[0].mxu0 %v3336
      %v3557 = vpop.f32.mrb[0].mxu0
      %v3558 = vadd.f32 %v3364, %v3557
      %v3559 = vpop.f32.mrb[0].mxu0
      %3560 = vmatprep.mubr.f32.mxu0 0.0
      %3561 = vmatmul.mubr.f32.gmra.mrb[0].mxu0 %v3337
      %v3562 = vpop.f32.mrb[0].mxu0
      %v3563 = vadd.f32 %v3364, %v3562
      %v3564 = vpop.f32.mrb[0].mxu0
      %3565 = vmatprep.mubr.f32.mxu0 0.0
      %3566 = vmatmul.mubr.f32.gmra.mrb[0].mxu0 %v3338
      %v3567 = vpop.f32.mrb[0].mxu0
      %v3568 = vadd.f32 %v3364, %v3567
      %v3569 = vpop.f32.mrb[0].mxu0
      %3570 = vmatprep.mubr.f32.mxu0 0.0
      %3571 = vmatmul.mubr.f32.gmra.mrb[0].mxu0 %v3339
      %v3572 = vpop.f32.mrb[0].mxu0
      %v3573 = vadd.f32 %v3364, %v3572
      %v3574 = vpop.f32.mrb[0].mxu0
      %3575 = vmatprep.mubr.f32.mxu0 0.0
      %3576 = vmatmul.mubr.f32.gmra.mrb[0].mxu0 %v3340
      %v3577 = vpop.f32.mrb[0].mxu0
      %v3578 = vadd.f32 %v3364, %v3577
      %v3579 = vpop.f32.mrb[0].mxu0
      %3580 = vmatprep.mubr.f32.mxu0 0.0
      %3581 = vmatmul.mubr.f32.gmra.mrb[0].mxu0 %v3341
      %v3582 = vpop.f32.mrb[0].mxu0
      %v3583 = vadd.f32 %v3364, %v3582
      %v3584 = vpop.f32.mrb[0].mxu0
      %3585 = vmatprep.mubr.f32.mxu0 0.0
      %3586 = vmatmul.mubr.f32.gmra.mrb[0].mxu0 %v3342
      %v3587 = vpop.f32.mrb[0].mxu0
      %v3588 = vadd.f32 %v3364, %v3587
      %v3589 = vpop.f32.mrb[0].mxu0
      %3590 = vdwg.mxu0
      %3591 = vst.msk [vmem:[%s332] sm:$0xff] %vm380, %v3433
      %3592 = vst.msk [vmem:[%s332 + $0x8] sm:$0xff] %vm380, %v3438
      %3593 = vst.msk [vmem:[%s332 + $0x10] sm:$0xff] %vm380, %v3443
      %3594 = vst.msk [vmem:[%s332 + $0x18] sm:$0xff] %vm380, %v3448
      %3595 = vst.msk [vmem:[%s332 + $0x20] sm:$0xff] %vm380, %v3453
      %3596 = vst.msk [vmem:[%s332 + $0x28] sm:$0xff] %vm380, %v3458
      %3597 = vst.msk [vmem:[%s332 + $0x30] sm:$0xff] %vm380, %v3463
      %3598 = vst.msk [vmem:[%s332 + $0x38] sm:$0xff] %vm380, %v3468
      %3599 = vst.msk [vmem:[%s332 + $0x40] sm:$0xff] %vm380, %v3473
      %3600 = vst.msk [vmem:[%s332 + $0x48] sm:$0xff] %vm380, %v3478
      %3601 = vst.msk [vmem:[%s332 + $0x50] sm:$0xff] %vm380, %v3483
      %3602 = vst.msk [vmem:[%s332 + $0x58] sm:$0xff] %vm380, %v3488
      %3603 = vst.msk [vmem:[%s332 + $0x60] sm:$0xff] %vm380, %v3493
      %3604 = vst.msk [vmem:[%s332 + $0x68] sm:$0xff] %vm380, %v3498
      %3605 = vst.msk [vmem:[%s332 + $0x70] sm:$0xff] %vm380, %v3503
      %3606 = vst.msk [vmem:[%s332 + $0x78] sm:$0xff] %vm380, %v3508
      %3607 = vst.msk [vmem:[%s332 + $0x80] sm:$0xff] %vm380, %v3513
      %3608 = vst.msk [vmem:[%s332 + $0x88] sm:$0xff] %vm380, %v3518
      %3609 = vst.msk [vmem:[%s332 + $0x90] sm:$0xff] %vm380, %v3523
      %3610 = vst.msk [vmem:[%s332 + $0x98] sm:$0xff] %vm380, %v3528
      %3611 = vst.msk [vmem:[%s332 + $0xa0] sm:$0xff] %vm380, %v3533
      %3612 = vst.msk [vmem:[%s332 + $0xa8] sm:$0xff] %vm380, %v3538
      %3613 = vst.msk [vmem:[%s332 + $0xb0] sm:$0xff] %vm380, %v3543
      %3614 = vst.msk [vmem:[%s332 + $0xb8] sm:$0xff] %vm380, %v3548
      %3615 = vst.msk [vmem:[%s332 + $0xc0] sm:$0xff] %vm380, %v3553
      %3616 = vst.msk [vmem:[%s332 + $0xc8] sm:$0xff] %vm380, %v3558
      %3617 = vst.msk [vmem:[%s332 + $0xd0] sm:$0xff] %vm380, %v3563
      %3618 = vst.msk [vmem:[%s332 + $0xd8] sm:$0xff] %vm380, %v3568
      %3619 = vst.msk [vmem:[%s332 + $0xe0] sm:$0xff] %vm380, %v3573
      %3620 = vst.msk [vmem:[%s332 + $0xe8] sm:$0xff] %vm380, %v3578
      %3621 = vst.msk [vmem:[%s332 + $0xf0] sm:$0xff] %vm380, %v3583
      %3622 = vst.msk [vmem:[%s332 + $0xf8] sm:$0xff] %vm380, %v3588
      %p3623 = scmp.lt.s32.totalorder %s20, 1
      %s3624 = scalar_select %p3623, %s20, 1
      %s3625 = smul.addr %s3624, 32
      %s3626 = smul.addr %s3625, 8
      %s3627 = scalar_lea.vmem %s9, %s3626
      // Predicated region
      $region57: #{tpu_custom_call.1} parent=55 // pred_check
        %p3628 = pneg %p232
      $region58: #{tpu_custom_call.1} parent=55 // pred_check_branch
        %3630 = sbr.rel (%p3628) target = $region60
      $region59: #{tpu_custom_call.1} parent=55 // pred_region
        _
      $region60: #{tpu_custom_call.1} parent=55 // pred_fallthru
        _
    $region56: #{tpu_custom_call.1} parent=5 // pred_fallthru
      _
    %p3631 = scmp.le.s32.totalorder 2, %s15
    // Predicated region
    $region61: #{tpu_custom_call.1} parent=5 // pred_check
      %p3632 = pneg %p3631
    $region62: #{tpu_custom_call.1} parent=5 // pred_check_branch
      %3634 = sbr.rel (%p3632) target = $region64
    $region63: #{tpu_custom_call.1} parent=5 // pred_region
      %s3635 = ssub.s32 %s15, 2
      // Predicated region
      $region65: #{tpu_custom_call.1} parent=63 // pred_check
        %p3636 = pneg %p238
      $region66: #{tpu_custom_call.1} parent=63 // pred_check_branch
        %3638 = sbr.rel (%p3636) target = $region68
      $region67: #{tpu_custom_call.1} parent=63 // pred_region
        %p3639 = scmp.lt.s32.totalorder %s21, 1
        %s3640 = scalar_select %p3639, %s21, 1
        %s3641 = smul.addr %s3640, 32
        %s3642 = smul.addr %s3641, 8
        %s3643 = scalar_lea.vmem %s9, %s3642
      $region68: #{tpu_custom_call.1} parent=63 // pred_fallthru
        _
    $region64: #{tpu_custom_call.1} parent=5 // pred_fallthru
      _
  $region6: #{tpu_custom_call.1} parent=0 // loop_footer
    %s19 = sadd.s32 1, %s15
  $region7: #{tpu_custom_call.1} parent=0 // loop_footer_branch
    %14 = sbr.rel target = $region3
  $region8: #{tpu_custom_call.1} parent=0 // loop_exit
    _

</llo_original>
